<compile_context>
chip_gen: v5e
topology: v5e:2x2
jax: 0.10.0
libtpu: 0.0.40
codegen_flags: <defaults>
</compile_context>

<pallas_src>
import functools

import jax
import jax.numpy as jnp
from jax.experimental import pallas as pl
from jax.experimental.pallas import tpu as pltpu

# Regularizer(base_add=1, min_val=0.05, max_val=1e9)
REG_BASE_ADD = 1.0
REG_MIN = 0.05
REG_MAX = 1e9


def _round_up(x, m):
    return ((x + m - 1) // m) * m


# ------------------------------ kernel body ------------------------------

def _branch_forward(x, x_r, param_refs, num_layers, compute_dtype, precision):
    """One branch: (x, x_r) -> [Linear+ReLU]*num_layers -> Linear -> clamp.

    param_refs = [w1_e, w1_r, b1, (w_l, b_l) for l in 2..L, w0, b0]
    Weights are stored in `compute_dtype` (MXU operands); biases are f32.
    Bias add / ReLU / clamp are in f32; accumulation is f32.
    """
    # Layer 1: the concat-matmul [x ; x_r] @ W1 split into two MXU dots
    # (no wrapper-side concatenate -> no extra HBM activation pass).
    h = jnp.dot(x.astype(compute_dtype), param_refs[0][...],
                preferred_element_type=jnp.float32, precision=precision)
    h = h + jnp.dot(x_r.astype(compute_dtype), param_refs[1][...],
                    preferred_element_type=jnp.float32, precision=precision)
    h = h + param_refs[2][...].astype(jnp.float32)
    h = jnp.maximum(h, 0.0)

    # Layers 2..num_layers (hidden -> hidden, ReLU).
    idx = 3
    for _ in range(num_layers - 1):
        w = param_refs[idx][...]
        b = param_refs[idx + 1][...].astype(jnp.float32)
        idx += 2
        h = jnp.dot(h.astype(compute_dtype), w,
                    preferred_element_type=jnp.float32, precision=precision) + b
        h = jnp.maximum(h, 0.0)

    # Layer 0 (no ReLU) + projection-regularizer clamp.
    w0 = param_refs[idx][...]
    b0 = param_refs[idx + 1][...].astype(jnp.float32)
    h = jnp.dot(h.astype(compute_dtype), w0,
                preferred_element_type=jnp.float32, precision=precision) + b0
    return jnp.clip(h + REG_BASE_ADD, REG_MIN, REG_MAX)


def _gamma_proj_kernel(num_layers, n_branch_refs, compute_dtype, precision,
                       alpha_ref, alpha_r_ref, beta_ref, beta_r_ref, *rest):
    """Fused alpha/beta branch kernel for one batch tile.

    rest = (*branch_a_params, *branch_b_params, out_a_ref, out_b_ref)
    out_a_ref/out_b_ref: (TB, entity_dim) each (lane-dense for entity_dim >= 128).
    """
    out_a_ref = rest[-2]
    out_b_ref = rest[-1]
    a_params = rest[:n_branch_refs]
    b_params = rest[n_branch_refs:2 * n_branch_refs]

    xa = _branch_forward(alpha_ref[...], alpha_r_ref[...], a_params,
                         num_layers, compute_dtype, precision)
    xb = _branch_forward(beta_ref[...], beta_r_ref[...], b_params,
                         num_layers, compute_dtype, precision)

    # Two direct stores (no in-kernel concatenate, no wrapper slicing afterwards).
    out_a_ref[...] = xa.astype(out_a_ref.dtype)
    out_b_ref[...] = xb.astype(out_b_ref.dtype)


# ------------------------------ wrapper ------------------------------

def gamma_projection(alpha, beta, alpha_r, beta_r, params_a, params_b, num_layers,
                     *, compute_dtype=jnp.bfloat16, out_dtype=jnp.float32,
                     block_b=256, lane_pad=128):
    """Forward pass of GammaProjection.

    alpha, beta:     (B, entity_dim) float32
    alpha_r, beta_r: (B, relation_dim) float32
    params_*:        (weights, biases); weights[i] is (in_i, out_i) (already
                     transposed from torch's (out, in)), biases[i] is (1, out_i).
                     Layer order: layer1, ..., layer{num_layers}, layer0.
    compute_dtype:   dtype fed to the MXU (bf16 recommended on v6e/v7x; pass
                     jnp.float32 for exact PyTorch-f32 semantics).
    out_dtype:       output dtype (f32 default; bf16 halves output HBM writeback
                     if the downstream consumer tolerates it).
    block_b:         max batch-tile rows per grid step (multiple of 8).
    """
    assert num_layers >= 1
    B, E = alpha.shape
    R = alpha_r.shape[1]
    assert beta.shape == (B, E) and beta_r.shape == (B, R)

    ws_a, _ = params_a
    H = int(ws_a[0].shape[1])
    Hp = _round_up(H, lane_pad)

    exact_f32 = jnp.dtype(compute_dtype) == jnp.dtype(jnp.float32)
    precision = jax.lax.Precision.HIGHEST if exact_f32 else jax.lax.Precision.DEFAULT
    # TODO(synk): for compute_dtype=float32 at real GammaE dims on v7x (64 MiB
    # per-TC VMEM) full f32 weight residency may not fit; stream hidden-layer
    # weights (extra grid axis / Buffered HBM spec) instead of keeping them resident.

    def _pad_cols(a, n):
        return a if a.shape[1] == n else jnp.pad(a, ((0, 0), (0, n - a.shape[1])))

    def _pad_rows(a, n):
        return a if a.shape[0] == n else jnp.pad(a, ((0, n - a.shape[0]), (0, 0)))

    def prep(params):
        # Flatten one branch into kernel order [w1_e, w1_r, b1, (w_l, b_l)..., w0, b0],
        # casting weights to compute_dtype and zero-padding the hidden dim to a lane
        # multiple (padded columns stay exactly zero through bias+ReLU).
        # NOTE: in a training/serving loop, hoist this prep out of the step so the
        # cast/pad is done once, not per call.
        ws, bs = params
        w1 = ws[0].astype(compute_dtype)
        flat = [_pad_cols(w1[:E], Hp), _pad_cols(w1[E:], Hp),
                _pad_cols(bs[0].astype(jnp.float32), Hp)]
        for w, b in zip(ws[1:-1], bs[1:-1]):
            flat.append(_pad_cols(_pad_rows(w.astype(compute_dtype), Hp), Hp))
            flat.append(_pad_cols(b.astype(jnp.float32), Hp))
        flat.append(_pad_rows(ws[-1].astype(compute_dtype), Hp))
        flat.append(bs[-1].astype(jnp.float32))
        return flat

    a_flat = prep(params_a)
    b_flat = prep(params_b)
    n_branch_refs = len(a_flat)

    # Batch tile: aim for >=4 grid steps (>=2 per TensorCore on a 2-TC chip) so the
    # DMA<->compute software pipeline and the megacore split both engage; never
    # below 8 rows (sublane) and never above block_b (VMEM). Partial last tiles are
    # fine: rows are independent and OOB writes are dropped.
    tb = min(block_b, max(8, _round_up(pl.cdiv(B, 4), 8)))
    grid = (pl.cdiv(B, tb),)

    # ---- advisory cost estimate for XLA scheduling ----
    def branch_flops(params):
        ws, _ = params
        return sum(2 * B * int(w.shape[0]) * int(w.shape[1]) for w in ws)

    flops = branch_flops(params_a) + branch_flops(params_b)
    weight_bytes = sum(int(p.size) * p.dtype.itemsize for p in a_flat + b_flat)
    bytes_accessed = weight_bytes
    bytes_accessed += sum(int(x.size) * x.dtype.itemsize
                          for x in (alpha, alpha_r, beta, beta_r))
    bytes_accessed += 2 * B * E * jnp.dtype(out_dtype).itemsize
    cost = pl.CostEstimate(flops=flops, transcendentals=0,
                           bytes_accessed=bytes_accessed)

    itemsize_in = alpha.dtype.itemsize
    itemsize_out = jnp.dtype(out_dtype).itemsize

    def vmem_limit(weight_buffers):
        needed = weight_buffers * weight_bytes                 # resident params
        needed += 2 * tb * 2 * (E + R) * itemsize_in           # 4 input tiles, 2x buffered
        needed += 2 * 2 * tb * E * itemsize_out                # 2 output tiles, 2x buffered
        needed += 8 * tb * max(Hp, E) * 4                      # live f32 activations (both branches)
        needed += 4 << 20                                      # misc / internal scratch headroom
        try:
            cap = (int(pltpu.get_tpu_info().vmem_capacity_bytes) * 7) // 8
        except Exception:
            cap = 96 << 20                                     # conservative fallback cap
        return int(min(max(needed, 32 << 20), cap))

    kernel = functools.partial(_gamma_proj_kernel, num_layers, n_branch_refs,
                               compute_dtype, precision)

    def batch_spec(feat):
        return pl.BlockSpec((tb, feat), lambda i: (i, 0))

    def run(single_buffer_weights):
        if single_buffer_weights:
            def resident_spec(shape):
                # Same block every grid step -> fetched once; single buffer is enough.
                return pl.BlockSpec(shape, lambda i: (0,) * len(shape),
                                    pipeline_mode=pl.Buffered(1))
        else:
            def resident_spec(shape):
                return pl.BlockSpec(shape, lambda i: (0,) * len(shape))

        in_specs = [batch_spec(E), batch_spec(R), batch_spec(E), batch_spec(R)]
        in_specs += [resident_spec(p.shape) for p in a_flat]
        in_specs += [resident_spec(p.shape) for p in b_flat]
        out_specs = [batch_spec(E), batch_spec(E)]

        fn = pl.pallas_call(
            kernel,
            out_shape=(jax.ShapeDtypeStruct((B, E), out_dtype),
                       jax.ShapeDtypeStruct((B, E), out_dtype)),
            grid=grid,
            in_specs=in_specs,
            out_specs=out_specs,
            compiler_params=pltpu.CompilerParams(
                dimension_semantics=("parallel",),
                vmem_limit_bytes=vmem_limit(1 if single_buffer_weights else 2)),
            cost_estimate=cost,
        )
        return fn(alpha, alpha_r, beta, beta_r, *a_flat, *b_flat)

    try:
        out_a, out_b = run(True)
    except Exception:
        # Fallback for jax versions where pipeline_mode=pl.Buffered(1) is not
        # accepted on pallas_call operands: default double-buffered weights.
        out_a, out_b = run(False)
    return out_a, out_b


# ------------------------- parameter construction -------------------------

def xavier_uniform(key, fan_in, fan_out):
    limit = jnp.sqrt(6.0 / (fan_in + fan_out))
    # stored as (in, out) for x @ W  (torch stores (out, in))
    return jax.random.uniform(key, (fan_in, fan_out), jnp.float32, -limit, limit)


def linear_bias(key, fan_in, fan_out):
    # PyTorch nn.Linear default bias init: U(-1/sqrt(fan_in), 1/sqrt(fan_in))
    bound = 1.0 / jnp.sqrt(float(fan_in))
    return jax.random.uniform(key, (1, fan_out), jnp.float32, -bound, bound)


def make_branch_params(key, entity_dim, relation_dim, hidden_dim, num_layers):
    """Weights/biases ordered: layer1, ..., layer{num_layers}, layer0."""
    dims = [(entity_dim + relation_dim, hidden_dim)]
    for _ in range(2, num_layers + 1):
        dims.append((hidden_dim, hidden_dim))
    dims.append((hidden_dim, entity_dim))  # layer0
    weights, biases = [], []
    for fi, fo in dims:
        key, kw, kb = jax.random.split(key, 3)
        weights.append(xavier_uniform(kw, fi, fo))
        biases.append(linear_bias(kb, fi, fo))
    return (weights, biases), key


# ------------------------- reference (pure JAX) -------------------------

def ref_branch(x, x_r, params, num_layers, compute_dtype):
    """Pure-JAX reference mirroring the kernel's dtype/precision path exactly."""
    ws, bs = params
    E = x.shape[1]
    exact_f32 = jnp.dtype(compute_dtype) == jnp.dtype(jnp.float32)
    precision = jax.lax.Precision.HIGHEST if exact_f32 else jax.lax.Precision.DEFAULT
    w1 = ws[0].astype(compute_dtype)
    h = (jnp.dot(x.astype(compute_dtype), w1[:E],
                 preferred_element_type=jnp.float32, precision=precision)
         + jnp.dot(x_r.astype(compute_dtype), w1[E:],
                   preferred_element_type=jnp.float32, precision=precision)
         + bs[0])
    h = jnp.maximum(h, 0.0)
    for li in range(1, num_layers):
        w = ws[li].astype(compute_dtype)
        h = jnp.dot(h.astype(compute_dtype), w,
                    preferred_element_type=jnp.float32, precision=precision) + bs[li]
        h = jnp.maximum(h, 0.0)
    w0 = ws[-1].astype(compute_dtype)
    h = jnp.dot(h.astype(compute_dtype), w0,
                preferred_element_type=jnp.float32, precision=precision) + bs[-1]
    return jnp.clip(h + REG_BASE_ADD, REG_MIN, REG_MAX)


if __name__ == "__main__":
    # Small shapes consistent with the module.
    entity_dim = 32
    relation_dim = 32
    hidden_dim = 64
    num_layers = 2

    key = jax.random.PRNGKey(0)
    params_a, key = make_branch_params(key, entity_dim, relation_dim, hidden_dim, num_layers)
    params_b, key = make_branch_params(key, entity_dim, relation_dim, hidden_dim, num_layers)

    def make_inputs(key, batch):
        key, k1, k2, k3, k4 = jax.random.split(key, 5)
        a = jax.random.normal(k1, (batch, entity_dim), jnp.float32)
        b = jax.random.normal(k2, (batch, entity_dim), jnp.float32)
        ar = jax.random.normal(k3, (batch, relation_dim), jnp.float32)
        br = jax.random.normal(k4, (batch, relation_dim), jnp.float32)
        return (a, b, ar, br), key

    # --- case 1: single grid step (batch=8), exact-f32 parity path ---
    (alpha, beta, alpha_r, beta_r), key = make_inputs(key, 8)
    a32, b32 = gamma_projection(alpha, beta, alpha_r, beta_r, params_a, params_b,
                                num_layers, compute_dtype=jnp.float32)
    jax.block_until_ready((a32, b32))
    ref_a32 = ref_branch(alpha, alpha_r, params_a, num_layers, jnp.float32)
    ref_b32 = ref_branch(beta, beta_r, params_b, num_layers, jnp.float32)
    assert a32.shape == (8, entity_dim) and b32.shape == (8, entity_dim)
    assert jnp.allclose(a32, ref_a32, atol=1e-4, rtol=1e-4)
    assert jnp.allclose(b32, ref_b32, atol=1e-4, rtol=1e-4)

    # --- case 2: bf16 MXU fast path (v6e/v7x recommendation), same batch ---
    a16, b16 = gamma_projection(alpha, beta, alpha_r, beta_r, params_a, params_b,
                                num_layers, compute_dtype=jnp.bfloat16)
    jax.block_until_ready((a16, b16))
    ref_a16 = ref_branch(alpha, alpha_r, params_a, num_layers, jnp.bfloat16)
    ref_b16 = ref_branch(beta, beta_r, params_b, num_layers, jnp.bfloat16)
    assert jnp.allclose(a16, ref_a16, atol=2e-2, rtol=2e-2)
    assert jnp.allclose(b16, ref_b16, atol=2e-2, rtol=2e-2)

    # --- case 3: multi-step grid with a partial last tile (batch=40 -> tb=16, 3 steps) ---
    (alpha2, beta2, alpha2_r, beta2_r), key = make_inputs(key, 40)
    a40, b40 = gamma_projection(alpha2, beta2, alpha2_r, beta2_r, params_a, params_b,
                                num_layers, compute_dtype=jnp.bfloat16)
    jax.block_until_ready((a40, b40))
    ref_a40 = ref_branch(alpha2, alpha2_r, params_a, num_layers, jnp.bfloat16)
    ref_b40 = ref_branch(beta2, beta2_r, params_b, num_layers, jnp.bfloat16)
    assert a40.shape == (40, entity_dim) and b40.shape == (40, entity_dim)
    assert jnp.allclose(a40, ref_a40, atol=2e-2, rtol=2e-2)
    assert jnp.allclose(b40, ref_b40, atol=2e-2, rtol=2e-2)

    print("KERNEL_OK")
</pallas_src>

<mosaic_0001>
module attributes {stable_mosaic.version = 11 : i64} {
  func.func @_gamma_proj_kernel(%arg0: i32, %arg1: memref<8x32xf32, #tpu.memory_space<vmem>>, %arg2: memref<8x32xf32, #tpu.memory_space<vmem>>, %arg3: memref<8x32xf32, #tpu.memory_space<vmem>>, %arg4: memref<8x32xf32, #tpu.memory_space<vmem>>, %arg5: memref<32x128xf32, #tpu.memory_space<vmem>>, %arg6: memref<32x128xf32, #tpu.memory_space<vmem>>, %arg7: memref<1x128xf32, #tpu.memory_space<vmem>>, %arg8: memref<128x128xf32, #tpu.memory_space<vmem>>, %arg9: memref<1x128xf32, #tpu.memory_space<vmem>>, %arg10: memref<128x32xf32, #tpu.memory_space<vmem>>, %arg11: memref<1x32xf32, #tpu.memory_space<vmem>>, %arg12: memref<32x128xf32, #tpu.memory_space<vmem>>, %arg13: memref<32x128xf32, #tpu.memory_space<vmem>>, %arg14: memref<1x128xf32, #tpu.memory_space<vmem>>, %arg15: memref<128x128xf32, #tpu.memory_space<vmem>>, %arg16: memref<1x128xf32, #tpu.memory_space<vmem>>, %arg17: memref<128x32xf32, #tpu.memory_space<vmem>>, %arg18: memref<1x32xf32, #tpu.memory_space<vmem>>, %arg19: memref<8x32xf32, #tpu.memory_space<vmem>>, %arg20: memref<8x32xf32, #tpu.memory_space<vmem>>) attributes {dimension_semantics = [#tpu.dimension_semantics<parallel>], iteration_bounds = array<i64: 1>, scalar_prefetch = 0 : i64, scratch_operands = 0 : i64, tpu.core_type = #tpu.core_type<tc>, window_params = [{transform_indices = @transform_0, window_bounds = array<i64: 8, 32>}, {transform_indices = @transform_1, window_bounds = array<i64: 8, 32>}, {transform_indices = @transform_2, window_bounds = array<i64: 8, 32>}, {transform_indices = @transform_3, window_bounds = array<i64: 8, 32>}, {pipeline_mode = #tpu.pipeline_mode<synchronous>, transform_indices = @transform_4, window_bounds = array<i64: 32, 128>}, {pipeline_mode = #tpu.pipeline_mode<synchronous>, transform_indices = @transform_5, window_bounds = array<i64: 32, 128>}, {pipeline_mode = #tpu.pipeline_mode<synchronous>, transform_indices = @transform_6, window_bounds = array<i64: 1, 128>}, {pipeline_mode = #tpu.pipeline_mode<synchronous>, transform_indices = @transform_7, window_bounds = array<i64: 128, 128>}, {pipeline_mode = #tpu.pipeline_mode<synchronous>, transform_indices = @transform_8, window_bounds = array<i64: 1, 128>}, {pipeline_mode = #tpu.pipeline_mode<synchronous>, transform_indices = @transform_9, window_bounds = array<i64: 128, 32>}, {pipeline_mode = #tpu.pipeline_mode<synchronous>, transform_indices = @transform_10, window_bounds = array<i64: 1, 32>}, {pipeline_mode = #tpu.pipeline_mode<synchronous>, transform_indices = @transform_11, window_bounds = array<i64: 32, 128>}, {pipeline_mode = #tpu.pipeline_mode<synchronous>, transform_indices = @transform_12, window_bounds = array<i64: 32, 128>}, {pipeline_mode = #tpu.pipeline_mode<synchronous>, transform_indices = @transform_13, window_bounds = array<i64: 1, 128>}, {pipeline_mode = #tpu.pipeline_mode<synchronous>, transform_indices = @transform_14, window_bounds = array<i64: 128, 128>}, {pipeline_mode = #tpu.pipeline_mode<synchronous>, transform_indices = @transform_15, window_bounds = array<i64: 1, 128>}, {pipeline_mode = #tpu.pipeline_mode<synchronous>, transform_indices = @transform_16, window_bounds = array<i64: 128, 32>}, {pipeline_mode = #tpu.pipeline_mode<synchronous>, transform_indices = @transform_17, window_bounds = array<i64: 1, 32>}, {transform_indices = @transform_18, window_bounds = array<i64: 8, 32>}, {transform_indices = @transform_19, window_bounds = array<i64: 8, 32>}]} {
    %c0 = arith.constant 0 : index
    %c0_0 = arith.constant 0 : index
    %0 = vector.load %arg1[%c0, %c0_0] : memref<8x32xf32, #tpu.memory_space<vmem>>, vector<8x32xf32>
    %c0_1 = arith.constant 0 : index
    %c0_2 = arith.constant 0 : index
    %1 = vector.load %arg2[%c0_1, %c0_2] : memref<8x32xf32, #tpu.memory_space<vmem>>, vector<8x32xf32>
    %c0_3 = arith.constant 0 : index
    %c0_4 = arith.constant 0 : index
    %2 = vector.load %arg5[%c0_3, %c0_4] : memref<32x128xf32, #tpu.memory_space<vmem>>, vector<32x128xf32>
    %cst = arith.constant dense<0.000000e+00> : vector<8x128xf32>
    %3 = tpu.matmul %0, %2, %cst {dimension_numbers = #tpu.dot_dimension_numbers<[1], [0], [0], [1], [0, 0, 1, 1], [], []>, precision = #tpu.contract_precision<fp32>} : vector<8x32xf32>, vector<32x128xf32>, vector<8x128xf32> -> vector<8x128xf32>
    %c0_5 = arith.constant 0 : index
    %c0_6 = arith.constant 0 : index
    %4 = vector.load %arg6[%c0_5, %c0_6] : memref<32x128xf32, #tpu.memory_space<vmem>>, vector<32x128xf32>
    %cst_7 = arith.constant dense<0.000000e+00> : vector<8x128xf32>
    %5 = tpu.matmul %1, %4, %cst_7 {dimension_numbers = #tpu.dot_dimension_numbers<[1], [0], [0], [1], [0, 0, 1, 1], [], []>, precision = #tpu.contract_precision<fp32>} : vector<8x32xf32>, vector<32x128xf32>, vector<8x128xf32> -> vector<8x128xf32>
    %6 = arith.addf %3, %5 : vector<8x128xf32>
    %c0_8 = arith.constant 0 : index
    %c0_9 = arith.constant 0 : index
    %7 = vector.load %arg7[%c0_8, %c0_9] : memref<1x128xf32, #tpu.memory_space<vmem>>, vector<1x128xf32>
    %8 = vector.broadcast %7 : vector<1x128xf32> to vector<8x128xf32>
    %9 = arith.addf %6, %8 : vector<8x128xf32>
    %cst_10 = arith.constant 0.000000e+00 : f32
    %10 = vector.broadcast %cst_10 : f32 to vector<8x128xf32>
    %11 = arith.maximumf %9, %10 : vector<8x128xf32>
    %c0_11 = arith.constant 0 : index
    %c0_12 = arith.constant 0 : index
    %12 = vector.load %arg8[%c0_11, %c0_12] : memref<128x128xf32, #tpu.memory_space<vmem>>, vector<128x128xf32>
    %c0_13 = arith.constant 0 : index
    %c0_14 = arith.constant 0 : index
    %13 = vector.load %arg9[%c0_13, %c0_14] : memref<1x128xf32, #tpu.memory_space<vmem>>, vector<1x128xf32>
    %cst_15 = arith.constant dense<0.000000e+00> : vector<8x128xf32>
    %14 = tpu.matmul %11, %12, %cst_15 {dimension_numbers = #tpu.dot_dimension_numbers<[1], [0], [0], [1], [0, 0, 1, 1], [], []>, precision = #tpu.contract_precision<fp32>} : vector<8x128xf32>, vector<128x128xf32>, vector<8x128xf32> -> vector<8x128xf32>
    %15 = vector.broadcast %13 : vector<1x128xf32> to vector<8x128xf32>
    %16 = arith.addf %14, %15 : vector<8x128xf32>
    %cst_16 = arith.constant 0.000000e+00 : f32
    %17 = vector.broadcast %cst_16 : f32 to vector<8x128xf32>
    %18 = arith.maximumf %16, %17 : vector<8x128xf32>
    %c0_17 = arith.constant 0 : index
    %c0_18 = arith.constant 0 : index
    %19 = vector.load %arg10[%c0_17, %c0_18] : memref<128x32xf32, #tpu.memory_space<vmem>>, vector<128x32xf32>
    %c0_19 = arith.constant 0 : index
    %c0_20 = arith.constant 0 : index
    %20 = vector.load %arg11[%c0_19, %c0_20] : memref<1x32xf32, #tpu.memory_space<vmem>>, vector<1x32xf32>
    %cst_21 = arith.constant dense<0.000000e+00> : vector<8x32xf32>
    %21 = tpu.matmul %18, %19, %cst_21 {dimension_numbers = #tpu.dot_dimension_numbers<[1], [0], [0], [1], [0, 0, 1, 1], [], []>, precision = #tpu.contract_precision<fp32>} : vector<8x128xf32>, vector<128x32xf32>, vector<8x32xf32> -> vector<8x32xf32>
    %22 = vector.broadcast %20 : vector<1x32xf32> to vector<8x32xf32>
    %23 = arith.addf %21, %22 : vector<8x32xf32>
    %cst_22 = arith.constant 1.000000e+00 : f32
    %24 = vector.broadcast %cst_22 : f32 to vector<8x32xf32>
    %25 = arith.addf %23, %24 : vector<8x32xf32>
    %cst_23 = arith.constant 5.000000e-02 : f32
    %cst_24 = arith.constant 1.000000e+09 : f32
    %26 = vector.broadcast %cst_23 : f32 to vector<8x32xf32>
    %27 = arith.maximumf %26, %25 : vector<8x32xf32>
    %28 = vector.broadcast %cst_24 : f32 to vector<8x32xf32>
    %29 = arith.minimumf %28, %27 : vector<8x32xf32>
    %c0_25 = arith.constant 0 : index
    %c0_26 = arith.constant 0 : index
    %30 = vector.load %arg3[%c0_25, %c0_26] : memref<8x32xf32, #tpu.memory_space<vmem>>, vector<8x32xf32>
    %c0_27 = arith.constant 0 : index
    %c0_28 = arith.constant 0 : index
    %31 = vector.load %arg4[%c0_27, %c0_28] : memref<8x32xf32, #tpu.memory_space<vmem>>, vector<8x32xf32>
    %c0_29 = arith.constant 0 : index
    %c0_30 = arith.constant 0 : index
    %32 = vector.load %arg12[%c0_29, %c0_30] : memref<32x128xf32, #tpu.memory_space<vmem>>, vector<32x128xf32>
    %cst_31 = arith.constant dense<0.000000e+00> : vector<8x128xf32>
    %33 = tpu.matmul %30, %32, %cst_31 {dimension_numbers = #tpu.dot_dimension_numbers<[1], [0], [0], [1], [0, 0, 1, 1], [], []>, precision = #tpu.contract_precision<fp32>} : vector<8x32xf32>, vector<32x128xf32>, vector<8x128xf32> -> vector<8x128xf32>
    %c0_32 = arith.constant 0 : index
    %c0_33 = arith.constant 0 : index
    %34 = vector.load %arg13[%c0_32, %c0_33] : memref<32x128xf32, #tpu.memory_space<vmem>>, vector<32x128xf32>
    %cst_34 = arith.constant dense<0.000000e+00> : vector<8x128xf32>
    %35 = tpu.matmul %31, %34, %cst_34 {dimension_numbers = #tpu.dot_dimension_numbers<[1], [0], [0], [1], [0, 0, 1, 1], [], []>, precision = #tpu.contract_precision<fp32>} : vector<8x32xf32>, vector<32x128xf32>, vector<8x128xf32> -> vector<8x128xf32>
    %36 = arith.addf %33, %35 : vector<8x128xf32>
    %c0_35 = arith.constant 0 : index
    %c0_36 = arith.constant 0 : index
    %37 = vector.load %arg14[%c0_35, %c0_36] : memref<1x128xf32, #tpu.memory_space<vmem>>, vector<1x128xf32>
    %38 = vector.broadcast %37 : vector<1x128xf32> to vector<8x128xf32>
    %39 = arith.addf %36, %38 : vector<8x128xf32>
    %cst_37 = arith.constant 0.000000e+00 : f32
    %40 = vector.broadcast %cst_37 : f32 to vector<8x128xf32>
    %41 = arith.maximumf %39, %40 : vector<8x128xf32>
    %c0_38 = arith.constant 0 : index
    %c0_39 = arith.constant 0 : index
    %42 = vector.load %arg15[%c0_38, %c0_39] : memref<128x128xf32, #tpu.memory_space<vmem>>, vector<128x128xf32>
    %c0_40 = arith.constant 0 : index
    %c0_41 = arith.constant 0 : index
    %43 = vector.load %arg16[%c0_40, %c0_41] : memref<1x128xf32, #tpu.memory_space<vmem>>, vector<1x128xf32>
    %cst_42 = arith.constant dense<0.000000e+00> : vector<8x128xf32>
    %44 = tpu.matmul %41, %42, %cst_42 {dimension_numbers = #tpu.dot_dimension_numbers<[1], [0], [0], [1], [0, 0, 1, 1], [], []>, precision = #tpu.contract_precision<fp32>} : vector<8x128xf32>, vector<128x128xf32>, vector<8x128xf32> -> vector<8x128xf32>
    %45 = vector.broadcast %43 : vector<1x128xf32> to vector<8x128xf32>
    %46 = arith.addf %44, %45 : vector<8x128xf32>
    %cst_43 = arith.constant 0.000000e+00 : f32
    %47 = vector.broadcast %cst_43 : f32 to vector<8x128xf32>
    %48 = arith.maximumf %46, %47 : vector<8x128xf32>
    %c0_44 = arith.constant 0 : index
    %c0_45 = arith.constant 0 : index
    %49 = vector.load %arg17[%c0_44, %c0_45] : memref<128x32xf32, #tpu.memory_space<vmem>>, vector<128x32xf32>
    %c0_46 = arith.constant 0 : index
    %c0_47 = arith.constant 0 : index
    %50 = vector.load %arg18[%c0_46, %c0_47] : memref<1x32xf32, #tpu.memory_space<vmem>>, vector<1x32xf32>
    %cst_48 = arith.constant dense<0.000000e+00> : vector<8x32xf32>
    %51 = tpu.matmul %48, %49, %cst_48 {dimension_numbers = #tpu.dot_dimension_numbers<[1], [0], [0], [1], [0, 0, 1, 1], [], []>, precision = #tpu.contract_precision<fp32>} : vector<8x128xf32>, vector<128x32xf32>, vector<8x32xf32> -> vector<8x32xf32>
    %52 = vector.broadcast %50 : vector<1x32xf32> to vector<8x32xf32>
    %53 = arith.addf %51, %52 : vector<8x32xf32>
    %cst_49 = arith.constant 1.000000e+00 : f32
    %54 = vector.broadcast %cst_49 : f32 to vector<8x32xf32>
    %55 = arith.addf %53, %54 : vector<8x32xf32>
    %cst_50 = arith.constant 5.000000e-02 : f32
    %cst_51 = arith.constant 1.000000e+09 : f32
    %56 = vector.broadcast %cst_50 : f32 to vector<8x32xf32>
    %57 = arith.maximumf %56, %55 : vector<8x32xf32>
    %58 = vector.broadcast %cst_51 : f32 to vector<8x32xf32>
    %59 = arith.minimumf %58, %57 : vector<8x32xf32>
    %c0_52 = arith.constant 0 : index
    %c0_53 = arith.constant 0 : index
    %60 = vector.load %arg19[%c0_52, %c0_53] : memref<8x32xf32, #tpu.memory_space<vmem>>, vector<8x32xf32>
    tpu.vector_store %arg19[%c0_52, %c0_53], %29 {strides = array<i32>} : memref<8x32xf32, #tpu.memory_space<vmem>>, vector<8x32xf32>,
    %c0_54 = arith.constant 0 : index
    %c0_55 = arith.constant 0 : index
    %61 = vector.load %arg20[%c0_54, %c0_55] : memref<8x32xf32, #tpu.memory_space<vmem>>, vector<8x32xf32>
    tpu.vector_store %arg20[%c0_54, %c0_55], %59 {strides = array<i32>} : memref<8x32xf32, #tpu.memory_space<vmem>>, vector<8x32xf32>,
    return
  }
  func.func @transform_0(%arg0: i32) -> (i32, i32) {
    %c0_i32 = arith.constant 0 : i32
    %c0_i32_0 = arith.constant 0 : i32
    return %arg0, %c0_i32 : i32, i32
  }
  func.func @transform_1(%arg0: i32) -> (i32, i32) {
    %c0_i32 = arith.constant 0 : i32
    %c0_i32_0 = arith.constant 0 : i32
    return %arg0, %c0_i32 : i32, i32
  }
  func.func @transform_2(%arg0: i32) -> (i32, i32) {
    %c0_i32 = arith.constant 0 : i32
    %c0_i32_0 = arith.constant 0 : i32
    return %arg0, %c0_i32 : i32, i32
  }
  func.func @transform_3(%arg0: i32) -> (i32, i32) {
    %c0_i32 = arith.constant 0 : i32
    %c0_i32_0 = arith.constant 0 : i32
    return %arg0, %c0_i32 : i32, i32
  }
  func.func @transform_4(%arg0: i32) -> (i32, i32) {
    %c0_i32 = arith.constant 0 : i32
    %c0_i32_0 = arith.constant 0 : i32
    %c0_i32_1 = arith.constant 0 : i32
    return %c0_i32, %c0_i32_0 : i32, i32
  }
  func.func @transform_5(%arg0: i32) -> (i32, i32) {
    %c0_i32 = arith.constant 0 : i32
    %c0_i32_0 = arith.constant 0 : i32
    %c0_i32_1 = arith.constant 0 : i32
    return %c0_i32, %c0_i32_0 : i32, i32
  }
  func.func @transform_6(%arg0: i32) -> (i32, i32) {
    %c0_i32 = arith.constant 0 : i32
    %c0_i32_0 = arith.constant 0 : i32
    %c0_i32_1 = arith.constant 0 : i32
    return %c0_i32, %c0_i32_0 : i32, i32
  }
  func.func @transform_7(%arg0: i32) -> (i32, i32) {
    %c0_i32 = arith.constant 0 : i32
    %c0_i32_0 = arith.constant 0 : i32
    %c0_i32_1 = arith.constant 0 : i32
    return %c0_i32, %c0_i32_0 : i32, i32
  }
  func.func @transform_8(%arg0: i32) -> (i32, i32) {
    %c0_i32 = arith.constant 0 : i32
    %c0_i32_0 = arith.constant 0 : i32
    %c0_i32_1 = arith.constant 0 : i32
    return %c0_i32, %c0_i32_0 : i32, i32
  }
  func.func @transform_9(%arg0: i32) -> (i32, i32) {
    %c0_i32 = arith.constant 0 : i32
    %c0_i32_0 = arith.constant 0 : i32
    %c0_i32_1 = arith.constant 0 : i32
    return %c0_i32, %c0_i32_0 : i32, i32
  }
  func.func @transform_10(%arg0: i32) -> (i32, i32) {
    %c0_i32 = arith.constant 0 : i32
    %c0_i32_0 = arith.constant 0 : i32
    %c0_i32_1 = arith.constant 0 : i32
    return %c0_i32, %c0_i32_0 : i32, i32
  }
  func.func @transform_11(%arg0: i32) -> (i32, i32) {
    %c0_i32 = arith.constant 0 : i32
    %c0_i32_0 = arith.constant 0 : i32
    %c0_i32_1 = arith.constant 0 : i32
    return %c0_i32, %c0_i32_0 : i32, i32
  }
  func.func @transform_12(%arg0: i32) -> (i32, i32) {
    %c0_i32 = arith.constant 0 : i32
    %c0_i32_0 = arith.constant 0 : i32
    %c0_i32_1 = arith.constant 0 : i32
    return %c0_i32, %c0_i32_0 : i32, i32
  }
  func.func @transform_13(%arg0: i32) -> (i32, i32) {
    %c0_i32 = arith.constant 0 : i32
    %c0_i32_0 = arith.constant 0 : i32
    %c0_i32_1 = arith.constant 0 : i32
    return %c0_i32, %c0_i32_0 : i32, i32
  }
  func.func @transform_14(%arg0: i32) -> (i32, i32) {
    %c0_i32 = arith.constant 0 : i32
    %c0_i32_0 = arith.constant 0 : i32
    %c0_i32_1 = arith.constant 0 : i32
    return %c0_i32, %c0_i32_0 : i32, i32
  }
  func.func @transform_15(%arg0: i32) -> (i32, i32) {
    %c0_i32 = arith.constant 0 : i32
    %c0_i32_0 = arith.constant 0 : i32
    %c0_i32_1 = arith.constant 0 : i32
    return %c0_i32, %c0_i32_0 : i32, i32
  }
  func.func @transform_16(%arg0: i32) -> (i32, i32) {
    %c0_i32 = arith.constant 0 : i32
    %c0_i32_0 = arith.constant 0 : i32
    %c0_i32_1 = arith.constant 0 : i32
    return %c0_i32, %c0_i32_0 : i32, i32
  }
  func.func @transform_17(%arg0: i32) -> (i32, i32) {
    %c0_i32 = arith.constant 0 : i32
    %c0_i32_0 = arith.constant 0 : i32
    %c0_i32_1 = arith.constant 0 : i32
    return %c0_i32, %c0_i32_0 : i32, i32
  }
  func.func @transform_18(%arg0: i32) -> (i32, i32) {
    %c0_i32 = arith.constant 0 : i32
    %c0_i32_0 = arith.constant 0 : i32
    return %arg0, %c0_i32 : i32, i32
  }
  func.func @transform_19(%arg0: i32) -> (i32, i32) {
    %c0_i32 = arith.constant 0 : i32
    %c0_i32_0 = arith.constant 0 : i32
    return %arg0, %c0_i32 : i32, i32
  }
}

module attributes {stable_mosaic.version = 11 : i64} {
  func.func @_gamma_proj_kernel(%arg0: i32, %arg1: memref<8x32xf32, #tpu.memory_space<vmem>>, %arg2: memref<8x32xf32, #tpu.memory_space<vmem>>, %arg3: memref<8x32xf32, #tpu.memory_space<vmem>>, %arg4: memref<8x32xf32, #tpu.memory_space<vmem>>, %arg5: memref<32x128xf32, #tpu.memory_space<vmem>>, %arg6: memref<32x128xf32, #tpu.memory_space<vmem>>, %arg7: memref<1x128xf32, #tpu.memory_space<vmem>>, %arg8: memref<128x128xf32, #tpu.memory_space<vmem>>, %arg9: memref<1x128xf32, #tpu.memory_space<vmem>>, %arg10: memref<128x32xf32, #tpu.memory_space<vmem>>, %arg11: memref<1x32xf32, #tpu.memory_space<vmem>>, %arg12: memref<32x128xf32, #tpu.memory_space<vmem>>, %arg13: memref<32x128xf32, #tpu.memory_space<vmem>>, %arg14: memref<1x128xf32, #tpu.memory_space<vmem>>, %arg15: memref<128x128xf32, #tpu.memory_space<vmem>>, %arg16: memref<1x128xf32, #tpu.memory_space<vmem>>, %arg17: memref<128x32xf32, #tpu.memory_space<vmem>>, %arg18: memref<1x32xf32, #tpu.memory_space<vmem>>, %arg19: memref<8x32xf32, #tpu.memory_space<vmem>>, %arg20: memref<8x32xf32, #tpu.memory_space<vmem>>) attributes {dimension_semantics = [#tpu.dimension_semantics<parallel>], iteration_bounds = array<i64: 1>, scalar_prefetch = 0 : i64, scratch_operands = 0 : i64, tpu.core_type = #tpu.core_type<tc>, window_params = [{transform_indices = @transform_0, window_bounds = array<i64: 8, 32>}, {transform_indices = @transform_1, window_bounds = array<i64: 8, 32>}, {transform_indices = @transform_2, window_bounds = array<i64: 8, 32>}, {transform_indices = @transform_3, window_bounds = array<i64: 8, 32>}, {pipeline_mode = #tpu.pipeline_mode<synchronous>, transform_indices = @transform_4, window_bounds = array<i64: 32, 128>}, {pipeline_mode = #tpu.pipeline_mode<synchronous>, transform_indices = @transform_5, window_bounds = array<i64: 32, 128>}, {pipeline_mode = #tpu.pipeline_mode<synchronous>, transform_indices = @transform_6, window_bounds = array<i64: 1, 128>}, {pipeline_mode = #tpu.pipeline_mode<synchronous>, transform_indices = @transform_7, window_bounds = array<i64: 128, 128>}, {pipeline_mode = #tpu.pipeline_mode<synchronous>, transform_indices = @transform_8, window_bounds = array<i64: 1, 128>}, {pipeline_mode = #tpu.pipeline_mode<synchronous>, transform_indices = @transform_9, window_bounds = array<i64: 128, 32>}, {pipeline_mode = #tpu.pipeline_mode<synchronous>, transform_indices = @transform_10, window_bounds = array<i64: 1, 32>}, {pipeline_mode = #tpu.pipeline_mode<synchronous>, transform_indices = @transform_11, window_bounds = array<i64: 32, 128>}, {pipeline_mode = #tpu.pipeline_mode<synchronous>, transform_indices = @transform_12, window_bounds = array<i64: 32, 128>}, {pipeline_mode = #tpu.pipeline_mode<synchronous>, transform_indices = @transform_13, window_bounds = array<i64: 1, 128>}, {pipeline_mode = #tpu.pipeline_mode<synchronous>, transform_indices = @transform_14, window_bounds = array<i64: 128, 128>}, {pipeline_mode = #tpu.pipeline_mode<synchronous>, transform_indices = @transform_15, window_bounds = array<i64: 1, 128>}, {pipeline_mode = #tpu.pipeline_mode<synchronous>, transform_indices = @transform_16, window_bounds = array<i64: 128, 32>}, {pipeline_mode = #tpu.pipeline_mode<synchronous>, transform_indices = @transform_17, window_bounds = array<i64: 1, 32>}, {transform_indices = @transform_18, window_bounds = array<i64: 8, 32>}, {transform_indices = @transform_19, window_bounds = array<i64: 8, 32>}]} {
    %c0 = arith.constant 0 : index
    %c0_0 = arith.constant 0 : index
    %0 = vector.load %arg1[%c0, %c0_0] : memref<8x32xf32, #tpu.memory_space<vmem>>, vector<8x32xf32>
    %c0_1 = arith.constant 0 : index
    %c0_2 = arith.constant 0 : index
    %1 = vector.load %arg2[%c0_1, %c0_2] : memref<8x32xf32, #tpu.memory_space<vmem>>, vector<8x32xf32>
    %c0_3 = arith.constant 0 : index
    %c0_4 = arith.constant 0 : index
    %2 = vector.load %arg5[%c0_3, %c0_4] : memref<32x128xf32, #tpu.memory_space<vmem>>, vector<32x128xf32>
    %cst = arith.constant dense<0.000000e+00> : vector<8x128xf32>
    %3 = tpu.matmul %0, %2, %cst {dimension_numbers = #tpu.dot_dimension_numbers<[1], [0], [0], [1], [0, 0, 1, 1], [], []>, precision = #tpu.contract_precision<fp32>} : vector<8x32xf32>, vector<32x128xf32>, vector<8x128xf32> -> vector<8x128xf32>
    %c0_5 = arith.constant 0 : index
    %c0_6 = arith.constant 0 : index
    %4 = vector.load %arg6[%c0_5, %c0_6] : memref<32x128xf32, #tpu.memory_space<vmem>>, vector<32x128xf32>
    %cst_7 = arith.constant dense<0.000000e+00> : vector<8x128xf32>
    %5 = tpu.matmul %1, %4, %cst_7 {dimension_numbers = #tpu.dot_dimension_numbers<[1], [0], [0], [1], [0, 0, 1, 1], [], []>, precision = #tpu.contract_precision<fp32>} : vector<8x32xf32>, vector<32x128xf32>, vector<8x128xf32> -> vector<8x128xf32>
    %6 = arith.addf %3, %5 : vector<8x128xf32>
    %c0_8 = arith.constant 0 : index
    %c0_9 = arith.constant 0 : index
    %7 = vector.load %arg7[%c0_8, %c0_9] : memref<1x128xf32, #tpu.memory_space<vmem>>, vector<1x128xf32>
    %8 = vector.broadcast %7 : vector<1x128xf32> to vector<8x128xf32>
    %9 = arith.addf %6, %8 : vector<8x128xf32>
    %cst_10 = arith.constant 0.000000e+00 : f32
    %10 = vector.broadcast %cst_10 : f32 to vector<8x128xf32>
    %11 = arith.maximumf %9, %10 : vector<8x128xf32>
    %c0_11 = arith.constant 0 : index
    %c0_12 = arith.constant 0 : index
    %12 = vector.load %arg8[%c0_11, %c0_12] : memref<128x128xf32, #tpu.memory_space<vmem>>, vector<128x128xf32>
    %c0_13 = arith.constant 0 : index
    %c0_14 = arith.constant 0 : index
    %13 = vector.load %arg9[%c0_13, %c0_14] : memref<1x128xf32, #tpu.memory_space<vmem>>, vector<1x128xf32>
    %cst_15 = arith.constant dense<0.000000e+00> : vector<8x128xf32>
    %14 = tpu.matmul %11, %12, %cst_15 {dimension_numbers = #tpu.dot_dimension_numbers<[1], [0], [0], [1], [0, 0, 1, 1], [], []>, precision = #tpu.contract_precision<fp32>} : vector<8x128xf32>, vector<128x128xf32>, vector<8x128xf32> -> vector<8x128xf32>
    %15 = vector.broadcast %13 : vector<1x128xf32> to vector<8x128xf32>
    %16 = arith.addf %14, %15 : vector<8x128xf32>
    %cst_16 = arith.constant 0.000000e+00 : f32
    %17 = vector.broadcast %cst_16 : f32 to vector<8x128xf32>
    %18 = arith.maximumf %16, %17 : vector<8x128xf32>
    %c0_17 = arith.constant 0 : index
    %c0_18 = arith.constant 0 : index
    %19 = vector.load %arg10[%c0_17, %c0_18] : memref<128x32xf32, #tpu.memory_space<vmem>>, vector<128x32xf32>
    %c0_19 = arith.constant 0 : index
    %c0_20 = arith.constant 0 : index
    %20 = vector.load %arg11[%c0_19, %c0_20] : memref<1x32xf32, #tpu.memory_space<vmem>>, vector<1x32xf32>
    %cst_21 = arith.constant dense<0.000000e+00> : vector<8x32xf32>
    %21 = tpu.matmul %18, %19, %cst_21 {dimension_numbers = #tpu.dot_dimension_numbers<[1], [0], [0], [1], [0, 0, 1, 1], [], []>, precision = #tpu.contract_precision<fp32>} : vector<8x128xf32>, vector<128x32xf32>, vector<8x32xf32> -> vector<8x32xf32>
    %22 = vector.broadcast %20 : vector<1x32xf32> to vector<8x32xf32>
    %23 = arith.addf %21, %22 : vector<8x32xf32>
    %cst_22 = arith.constant 1.000000e+00 : f32
    %24 = vector.broadcast %cst_22 : f32 to vector<8x32xf32>
    %25 = arith.addf %23, %24 : vector<8x32xf32>
    %cst_23 = arith.constant 5.000000e-02 : f32
    %cst_24 = arith.constant 1.000000e+09 : f32
    %26 = vector.broadcast %cst_23 : f32 to vector<8x32xf32>
    %27 = arith.maximumf %26, %25 : vector<8x32xf32>
    %28 = vector.broadcast %cst_24 : f32 to vector<8x32xf32>
    %29 = arith.minimumf %28, %27 : vector<8x32xf32>
    %c0_25 = arith.constant 0 : index
    %c0_26 = arith.constant 0 : index
    %30 = vector.load %arg3[%c0_25, %c0_26] : memref<8x32xf32, #tpu.memory_space<vmem>>, vector<8x32xf32>
    %c0_27 = arith.constant 0 : index
    %c0_28 = arith.constant 0 : index
    %31 = vector.load %arg4[%c0_27, %c0_28] : memref<8x32xf32, #tpu.memory_space<vmem>>, vector<8x32xf32>
    %c0_29 = arith.constant 0 : index
    %c0_30 = arith.constant 0 : index
    %32 = vector.load %arg12[%c0_29, %c0_30] : memref<32x128xf32, #tpu.memory_space<vmem>>, vector<32x128xf32>
    %cst_31 = arith.constant dense<0.000000e+00> : vector<8x128xf32>
    %33 = tpu.matmul %30, %32, %cst_31 {dimension_numbers = #tpu.dot_dimension_numbers<[1], [0], [0], [1], [0, 0, 1, 1], [], []>, precision = #tpu.contract_precision<fp32>} : vector<8x32xf32>, vector<32x128xf32>, vector<8x128xf32> -> vector<8x128xf32>
    %c0_32 = arith.constant 0 : index
    %c0_33 = arith.constant 0 : index
    %34 = vector.load %arg13[%c0_32, %c0_33] : memref<32x128xf32, #tpu.memory_space<vmem>>, vector<32x128xf32>
    %cst_34 = arith.constant dense<0.000000e+00> : vector<8x128xf32>
    %35 = tpu.matmul %31, %34, %cst_34 {dimension_numbers = #tpu.dot_dimension_numbers<[1], [0], [0], [1], [0, 0, 1, 1], [], []>, precision = #tpu.contract_precision<fp32>} : vector<8x32xf32>, vector<32x128xf32>, vector<8x128xf32> -> vector<8x128xf32>
    %36 = arith.addf %33, %35 : vector<8x128xf32>
    %c0_35 = arith.constant 0 : index
    %c0_36 = arith.constant 0 : index
    %37 = vector.load %arg14[%c0_35, %c0_36] : memref<1x128xf32, #tpu.memory_space<vmem>>, vector<1x128xf32>
    %38 = vector.broadcast %37 : vector<1x128xf32> to vector<8x128xf32>
    %39 = arith.addf %36, %38 : vector<8x128xf32>
    %cst_37 = arith.constant 0.000000e+00 : f32
    %40 = vector.broadcast %cst_37 : f32 to vector<8x128xf32>
    %41 = arith.maximumf %39, %40 : vector<8x128xf32>
    %c0_38 = arith.constant 0 : index
    %c0_39 = arith.constant 0 : index
    %42 = vector.load %arg15[%c0_38, %c0_39] : memref<128x128xf32, #tpu.memory_space<vmem>>, vector<128x128xf32>
    %c0_40 = arith.constant 0 : index
    %c0_41 = arith.constant 0 : index
    %43 = vector.load %arg16[%c0_40, %c0_41] : memref<1x128xf32, #tpu.memory_space<vmem>>, vector<1x128xf32>
    %cst_42 = arith.constant dense<0.000000e+00> : vector<8x128xf32>
    %44 = tpu.matmul %41, %42, %cst_42 {dimension_numbers = #tpu.dot_dimension_numbers<[1], [0], [0], [1], [0, 0, 1, 1], [], []>, precision = #tpu.contract_precision<fp32>} : vector<8x128xf32>, vector<128x128xf32>, vector<8x128xf32> -> vector<8x128xf32>
    %45 = vector.broadcast %43 : vector<1x128xf32> to vector<8x128xf32>
    %46 = arith.addf %44, %45 : vector<8x128xf32>
    %cst_43 = arith.constant 0.000000e+00 : f32
    %47 = vector.broadcast %cst_43 : f32 to vector<8x128xf32>
    %48 = arith.maximumf %46, %47 : vector<8x128xf32>
    %c0_44 = arith.constant 0 : index
    %c0_45 = arith.constant 0 : index
    %49 = vector.load %arg17[%c0_44, %c0_45] : memref<128x32xf32, #tpu.memory_space<vmem>>, vector<128x32xf32>
    %c0_46 = arith.constant 0 : index
    %c0_47 = arith.constant 0 : index
    %50 = vector.load %arg18[%c0_46, %c0_47] : memref<1x32xf32, #tpu.memory_space<vmem>>, vector<1x32xf32>
    %cst_48 = arith.constant dense<0.000000e+00> : vector<8x32xf32>
    %51 = tpu.matmul %48, %49, %cst_48 {dimension_numbers = #tpu.dot_dimension_numbers<[1], [0], [0], [1], [0, 0, 1, 1], [], []>, precision = #tpu.contract_precision<fp32>} : vector<8x128xf32>, vector<128x32xf32>, vector<8x32xf32> -> vector<8x32xf32>
    %52 = vector.broadcast %50 : vector<1x32xf32> to vector<8x32xf32>
    %53 = arith.addf %51, %52 : vector<8x32xf32>
    %cst_49 = arith.constant 1.000000e+00 : f32
    %54 = vector.broadcast %cst_49 : f32 to vector<8x32xf32>
    %55 = arith.addf %53, %54 : vector<8x32xf32>
    %cst_50 = arith.constant 5.000000e-02 : f32
    %cst_51 = arith.constant 1.000000e+09 : f32
    %56 = vector.broadcast %cst_50 : f32 to vector<8x32xf32>
    %57 = arith.maximumf %56, %55 : vector<8x32xf32>
    %58 = vector.broadcast %cst_51 : f32 to vector<8x32xf32>
    %59 = arith.minimumf %58, %57 : vector<8x32xf32>
    %c0_52 = arith.constant 0 : index
    %c0_53 = arith.constant 0 : index
    %60 = vector.load %arg19[%c0_52, %c0_53] : memref<8x32xf32, #tpu.memory_space<vmem>>, vector<8x32xf32>
    tpu.vector_store %arg19[%c0_52, %c0_53], %29 {strides = array<i32>} : memref<8x32xf32, #tpu.memory_space<vmem>>, vector<8x32xf32>,
    %c0_54 = arith.constant 0 : index
    %c0_55 = arith.constant 0 : index
    %61 = vector.load %arg20[%c0_54, %c0_55] : memref<8x32xf32, #tpu.memory_space<vmem>>, vector<8x32xf32>
    tpu.vector_store %arg20[%c0_54, %c0_55], %59 {strides = array<i32>} : memref<8x32xf32, #tpu.memory_space<vmem>>, vector<8x32xf32>,
    return
  }
  func.func @transform_0(%arg0: i32) -> (i32, i32) {
    %c0_i32 = arith.constant 0 : i32
    %c0_i32_0 = arith.constant 0 : i32
    return %arg0, %c0_i32 : i32, i32
  }
  func.func @transform_1(%arg0: i32) -> (i32, i32) {
    %c0_i32 = arith.constant 0 : i32
    %c0_i32_0 = arith.constant 0 : i32
    return %arg0, %c0_i32 : i32, i32
  }
  func.func @transform_2(%arg0: i32) -> (i32, i32) {
    %c0_i32 = arith.constant 0 : i32
    %c0_i32_0 = arith.constant 0 : i32
    return %arg0, %c0_i32 : i32, i32
  }
  func.func @transform_3(%arg0: i32) -> (i32, i32) {
    %c0_i32 = arith.constant 0 : i32
    %c0_i32_0 = arith.constant 0 : i32
    return %arg0, %c0_i32 : i32, i32
  }
  func.func @transform_4(%arg0: i32) -> (i32, i32) {
    %c0_i32 = arith.constant 0 : i32
    %c0_i32_0 = arith.constant 0 : i32
    %c0_i32_1 = arith.constant 0 : i32
    return %c0_i32, %c0_i32_0 : i32, i32
  }
  func.func @transform_5(%arg0: i32) -> (i32, i32) {
    %c0_i32 = arith.constant 0 : i32
    %c0_i32_0 = arith.constant 0 : i32
    %c0_i32_1 = arith.constant 0 : i32
    return %c0_i32, %c0_i32_0 : i32, i32
  }
  func.func @transform_6(%arg0: i32) -> (i32, i32) {
    %c0_i32 = arith.constant 0 : i32
    %c0_i32_0 = arith.constant 0 : i32
    %c0_i32_1 = arith.constant 0 : i32
    return %c0_i32, %c0_i32_0 : i32, i32
  }
  func.func @transform_7(%arg0: i32) -> (i32, i32) {
    %c0_i32 = arith.constant 0 : i32
    %c0_i32_0 = arith.constant 0 : i32
    %c0_i32_1 = arith.constant 0 : i32
    return %c0_i32, %c0_i32_0 : i32, i32
  }
  func.func @transform_8(%arg0: i32) -> (i32, i32) {
    %c0_i32 = arith.constant 0 : i32
    %c0_i32_0 = arith.constant 0 : i32
    %c0_i32_1 = arith.constant 0 : i32
    return %c0_i32, %c0_i32_0 : i32, i32
  }
  func.func @transform_9(%arg0: i32) -> (i32, i32) {
    %c0_i32 = arith.constant 0 : i32
    %c0_i32_0 = arith.constant 0 : i32
    %c0_i32_1 = arith.constant 0 : i32
    return %c0_i32, %c0_i32_0 : i32, i32
  }
  func.func @transform_10(%arg0: i32) -> (i32, i32) {
    %c0_i32 = arith.constant 0 : i32
    %c0_i32_0 = arith.constant 0 : i32
    %c0_i32_1 = arith.constant 0 : i32
    return %c0_i32, %c0_i32_0 : i32, i32
  }
  func.func @transform_11(%arg0: i32) -> (i32, i32) {
    %c0_i32 = arith.constant 0 : i32
    %c0_i32_0 = arith.constant 0 : i32
    %c0_i32_1 = arith.constant 0 : i32
    return %c0_i32, %c0_i32_0 : i32, i32
  }
  func.func @transform_12(%arg0: i32) -> (i32, i32) {
    %c0_i32 = arith.constant 0 : i32
    %c0_i32_0 = arith.constant 0 : i32
    %c0_i32_1 = arith.constant 0 : i32
    return %c0_i32, %c0_i32_0 : i32, i32
  }
  func.func @transform_13(%arg0: i32) -> (i32, i32) {
    %c0_i32 = arith.constant 0 : i32
    %c0_i32_0 = arith.constant 0 : i32
    %c0_i32_1 = arith.constant 0 : i32
    return %c0_i32, %c0_i32_0 : i32, i32
  }
  func.func @transform_14(%arg0: i32) -> (i32, i32) {
    %c0_i32 = arith.constant 0 : i32
    %c0_i32_0 = arith.constant 0 : i32
    %c0_i32_1 = arith.constant 0 : i32
    return %c0_i32, %c0_i32_0 : i32, i32
  }
  func.func @transform_15(%arg0: i32) -> (i32, i32) {
    %c0_i32 = arith.constant 0 : i32
    %c0_i32_0 = arith.constant 0 : i32
    %c0_i32_1 = arith.constant 0 : i32
    return %c0_i32, %c0_i32_0 : i32, i32
  }
  func.func @transform_16(%arg0: i32) -> (i32, i32) {
    %c0_i32 = arith.constant 0 : i32
    %c0_i32_0 = arith.constant 0 : i32
    %c0_i32_1 = arith.constant 0 : i32
    return %c0_i32, %c0_i32_0 : i32, i32
  }
  func.func @transform_17(%arg0: i32) -> (i32, i32) {
    %c0_i32 = arith.constant 0 : i32
    %c0_i32_0 = arith.constant 0 : i32
    %c0_i32_1 = arith.constant 0 : i32
    return %c0_i32, %c0_i32_0 : i32, i32
  }
  func.func @transform_18(%arg0: i32) -> (i32, i32) {
    %c0_i32 = arith.constant 0 : i32
    %c0_i32_0 = arith.constant 0 : i32
    return %arg0, %c0_i32 : i32, i32
  }
  func.func @transform_19(%arg0: i32) -> (i32, i32) {
    %c0_i32 = arith.constant 0 : i32
    %c0_i32_0 = arith.constant 0 : i32
    return %arg0, %c0_i32 : i32, i32
  }
}

</mosaic_0001>

<llo_original>
// kernel: tpu_custom_call.1
$region0: #{tpu_custom_call.1}
  #allocation0 [shape = 'u32[]', space=smem, size = 0x4, offset = 0x4, fixed_abs, tag = 'smem constant byte address 0x4 - core index']
  #allocation1 [shape = 'u32[72,128]{1,0:T(1,128)}', space=vmem, size = 0x9000, scoped, tag = 'internal scratch']
  %s0 = inlined_call_operand.hbm [shape: f32[8,32], index: 0, kind: input, shape index: {}]
  %s1 = inlined_call_operand.hbm [shape: f32[8,32], index: 1, kind: input, shape index: {}]
  %s2 = inlined_call_operand.hbm [shape: f32[8,32], index: 2, kind: input, shape index: {}]
  %s3 = inlined_call_operand.hbm [shape: f32[8,32], index: 3, kind: input, shape index: {}]
  %s4 = inlined_call_operand.vmem [shape: f32[32,128], index: 4, kind: input, shape index: {}]
  %s5 = inlined_call_operand.hbm [shape: f32[32,128], index: 5, kind: input, shape index: {}]
  %s6 = inlined_call_operand.vmem [shape: f32[1,128], index: 6, kind: input, shape index: {}]
  %s7 = inlined_call_operand.vmem [shape: f32[128,128], index: 7, kind: input, shape index: {}]
  %s8 = inlined_call_operand.vmem [shape: f32[1,128], index: 8, kind: input, shape index: {}]
  %s9 = inlined_call_operand.vmem [shape: f32[128,32], index: 9, kind: input, shape index: {}]
  %s10 = inlined_call_operand.vmem [shape: f32[1,32], index: 10, kind: input, shape index: {}]
  %s11 = inlined_call_operand.hbm [shape: f32[32,128], index: 11, kind: input, shape index: {}]
  %s12 = inlined_call_operand.hbm [shape: f32[32,128], index: 12, kind: input, shape index: {}]
  %s13 = inlined_call_operand.vmem [shape: f32[1,128], index: 13, kind: input, shape index: {}]
  %s14 = inlined_call_operand.vmem [shape: f32[128,128], index: 14, kind: input, shape index: {}]
  %s15 = inlined_call_operand.vmem [shape: f32[1,128], index: 15, kind: input, shape index: {}]
  %s16 = inlined_call_operand.vmem [shape: f32[128,32], index: 16, kind: input, shape index: {}]
  %s17 = inlined_call_operand.vmem [shape: f32[1,32], index: 17, kind: input, shape index: {}]
  %s18 = inlined_call_operand.hbm [shape: f32[8,32], index: 18, kind: output, shape index: {0}]
  %s19 = inlined_call_operand.hbm [shape: f32[8,32], index: 19, kind: output, shape index: {1}]
  %20 = xla_tuple %s18, %s19
  %s21 = sld [smem:[#allocation0]]
  $region118: #{tpu_custom_call.1} parent=0
    _
  %s23 = ssub.s32 1, %s21
  %s24 = scalar_select 0, %s23, %s21
  $region1: #{tpu_custom_call.1} parent=0
    #allocation2 [shape = 'u8[4096]{0}', space=vmem, size = 0x1000, scoped, tag = 'input window, operand 0, single buffered']
    #allocation3 [shape = 's32[1]{0}', space=sflag, size = 0x4, scoped, tag = 'scoped memory for tpu_custom_call.1']
    #allocation4 [shape = 's32[1]{0}', space=sflag, size = 0x4, scoped, tag = 'scoped memory for tpu_custom_call.1']
    #allocation5 [shape = 'u8[4096]{0}', space=vmem, size = 0x1000, scoped, tag = 'input window, operand 1, single buffered']
    #allocation6 [shape = 's32[1]{0}', space=sflag, size = 0x4, scoped, tag = 'scoped memory for tpu_custom_call.1']
    #allocation7 [shape = 'u8[4096]{0}', space=vmem, size = 0x1000, scoped, tag = 'input window, operand 2, single buffered']
    #allocation8 [shape = 'u8[4096]{0}', space=vmem, size = 0x1000, scoped, tag = 'input window, operand 3, single buffered']
    #allocation9 [shape = 's32[1]{0}', space=sflag, size = 0x4, scoped, tag = 'scoped memory for tpu_custom_call.1']
    #allocation10 [shape = 'u8[16384]{0}', space=vmem, size = 0x4000, scoped, tag = 'input window, operand 5, single buffered']
    #allocation11 [shape = 'u8[16384]{0}', space=vmem, size = 0x4000, scoped, tag = 'input window, operand 11, single buffered']
    #allocation12 [shape = 's32[1]{0}', space=sflag, size = 0x4, scoped, tag = 'scoped memory for tpu_custom_call.1']
    #allocation13 [shape = 'u8[16384]{0}', space=vmem, size = 0x4000, scoped, tag = 'input window, operand 12, single buffered']
    #allocation14 [shape = 'u8[4096]{0}', space=vmem, size = 0x1000, scoped, tag = 'output window, operand 0, single buffered']
    #allocation15 [shape = 'u8[4096]{0}', space=vmem, size = 0x1000, scoped, tag = 'output window, operand 1, single buffered']
    #allocation16 [shape = 's32[1]{0}', space=sflag, size = 0x4, scoped, tag = 'scoped memory for tpu_custom_call.1']
    %25 = vsyncpa [#allocation3], 0
    %26 = vsyncpa [#allocation6], 0
    %27 = vsyncpa [#allocation9], 0
    %28 = vsyncpa [#allocation12], 0
    %29 = vsyncpa [#allocation4], 0
    %30 = vsyncpa [#allocation16], 0
    // Predicated region
    $region2: #{tpu_custom_call.1} parent=1 // pred_check
      _
    $region3: #{tpu_custom_call.1} parent=1 // pred_check_branch
      %32 = sbr.rel (0) target = $region5
    $region4: #{tpu_custom_call.1} parent=1 // pred_region
      %34 = vsyncadd [#allocation3], 0
      %s36 = sshll.u32 %s0, 4
      %s37 = int_to_ptr.hbm [resolvable:$true] %s36
      %s38 = sshll.u32 [#allocation2], 4
      %s39 = int_to_ptr.vmem [resolvable:$true] %s38
      %41 = dma.hbm_to_vmem [thread:$0]  %s37, 128, %s39, [#allocation3]
    $region5: #{tpu_custom_call.1} parent=1 // pred_fallthru
      _
    // Predicated region
    $region6: #{tpu_custom_call.1} parent=1 // pred_check
      _
    $region7: #{tpu_custom_call.1} parent=1 // pred_check_branch
      %43 = sbr.rel (0) target = $region9
    $region8: #{tpu_custom_call.1} parent=1 // pred_region
      %45 = vsyncadd [#allocation6], 0
      %s47 = sshll.u32 %s1, 4
      %s48 = int_to_ptr.hbm [resolvable:$true] %s47
      %s49 = sshll.u32 [#allocation5], 4
      %s50 = int_to_ptr.vmem [resolvable:$true] %s49
      %52 = dma.hbm_to_vmem [thread:$0]  %s48, 128, %s50, [#allocation6]
    $region9: #{tpu_custom_call.1} parent=1 // pred_fallthru
      _
    // Predicated region
    $region10: #{tpu_custom_call.1} parent=1 // pred_check
      _
    $region11: #{tpu_custom_call.1} parent=1 // pred_check_branch
      %54 = sbr.rel (0) target = $region13
    $region12: #{tpu_custom_call.1} parent=1 // pred_region
      %56 = vsyncadd [#allocation6], 0
      %s58 = sshll.u32 %s2, 4
      %s59 = int_to_ptr.hbm [resolvable:$true] %s58
      %s60 = sshll.u32 [#allocation7], 4
      %s61 = int_to_ptr.vmem [resolvable:$true] %s60
      %63 = dma.hbm_to_vmem [thread:$0]  %s59, 128, %s61, [#allocation6]
    $region13: #{tpu_custom_call.1} parent=1 // pred_fallthru
      _
    // Predicated region
    $region14: #{tpu_custom_call.1} parent=1 // pred_check
      _
    $region15: #{tpu_custom_call.1} parent=1 // pred_check_branch
      %65 = sbr.rel (0) target = $region17
    $region16: #{tpu_custom_call.1} parent=1 // pred_region
      %67 = vsyncadd [#allocation9], 0
      %s69 = sshll.u32 %s3, 4
      %s70 = int_to_ptr.hbm [resolvable:$true] %s69
      %s71 = sshll.u32 [#allocation8], 4
      %s72 = int_to_ptr.vmem [resolvable:$true] %s71
      %74 = dma.hbm_to_vmem [thread:$0]  %s70, 128, %s72, [#allocation9]
    $region17: #{tpu_custom_call.1} parent=1 // pred_fallthru
      _
    // Predicated region
    $region18: #{tpu_custom_call.1} parent=1 // pred_check
      _
    $region19: #{tpu_custom_call.1} parent=1 // pred_check_branch
      %76 = sbr.rel (0) target = $region21
    $region20: #{tpu_custom_call.1} parent=1 // pred_region
      _
    $region21: #{tpu_custom_call.1} parent=1 // pred_fallthru
      _
    // Predicated region
    $region22: #{tpu_custom_call.1} parent=1 // pred_check
      _
    $region23: #{tpu_custom_call.1} parent=1 // pred_check_branch
      %78 = sbr.rel (0) target = $region25
    $region24: #{tpu_custom_call.1} parent=1 // pred_region
      %80 = vsyncadd [#allocation9], 0
      %s81 = sshll.u32 %s5, 4
      %s82 = int_to_ptr.hbm [resolvable:$true] %s81
      %s83 = sshll.u32 [#allocation10], 4
      %s84 = int_to_ptr.vmem [resolvable:$true] %s83
      %89 = dma.hbm_to_vmem [thread:$0]  %s82, 512, %s84, [#allocation9], 128, 128, 8
    $region25: #{tpu_custom_call.1} parent=1 // pred_fallthru
      _
    // Predicated region
    $region26: #{tpu_custom_call.1} parent=1 // pred_check
      _
    $region27: #{tpu_custom_call.1} parent=1 // pred_check_branch
      %91 = sbr.rel (0) target = $region29
    $region28: #{tpu_custom_call.1} parent=1 // pred_region
      _
    $region29: #{tpu_custom_call.1} parent=1 // pred_fallthru
      _
    // Predicated region
    $region30: #{tpu_custom_call.1} parent=1 // pred_check
      _
    $region31: #{tpu_custom_call.1} parent=1 // pred_check_branch
      %93 = sbr.rel (0) target = $region33
    $region32: #{tpu_custom_call.1} parent=1 // pred_region
      _
    $region33: #{tpu_custom_call.1} parent=1 // pred_fallthru
      _
    // Predicated region
    $region34: #{tpu_custom_call.1} parent=1 // pred_check
      _
    $region35: #{tpu_custom_call.1} parent=1 // pred_check_branch
      %95 = sbr.rel (0) target = $region37
    $region36: #{tpu_custom_call.1} parent=1 // pred_region
      _
    $region37: #{tpu_custom_call.1} parent=1 // pred_fallthru
      _
    // Predicated region
    $region38: #{tpu_custom_call.1} parent=1 // pred_check
      _
    $region39: #{tpu_custom_call.1} parent=1 // pred_check_branch
      %97 = sbr.rel (0) target = $region41
    $region40: #{tpu_custom_call.1} parent=1 // pred_region
      _
    $region41: #{tpu_custom_call.1} parent=1 // pred_fallthru
      _
    // Predicated region
    $region42: #{tpu_custom_call.1} parent=1 // pred_check
      _
    $region43: #{tpu_custom_call.1} parent=1 // pred_check_branch
      %99 = sbr.rel (0) target = $region45
    $region44: #{tpu_custom_call.1} parent=1 // pred_region
      _
    $region45: #{tpu_custom_call.1} parent=1 // pred_fallthru
      _
    // Predicated region
    $region46: #{tpu_custom_call.1} parent=1 // pred_check
      _
    $region47: #{tpu_custom_call.1} parent=1 // pred_check_branch
      %101 = sbr.rel (0) target = $region49
    $region48: #{tpu_custom_call.1} parent=1 // pred_region
      %103 = vsyncadd [#allocation12], 0
      %s104 = sshll.u32 %s11, 4
      %s105 = int_to_ptr.hbm [resolvable:$true] %s104
      %s106 = sshll.u32 [#allocation11], 4
      %s107 = int_to_ptr.vmem [resolvable:$true] %s106
      %112 = dma.hbm_to_vmem [thread:$0]  %s105, 512, %s107, [#allocation12], 128, 128, 8
    $region49: #{tpu_custom_call.1} parent=1 // pred_fallthru
      _
    // Predicated region
    $region50: #{tpu_custom_call.1} parent=1 // pred_check
      _
    $region51: #{tpu_custom_call.1} parent=1 // pred_check_branch
      %114 = sbr.rel (0) target = $region53
    $region52: #{tpu_custom_call.1} parent=1 // pred_region
      %116 = vsyncadd [#allocation12], 0
      %s117 = sshll.u32 %s12, 4
      %s118 = int_to_ptr.hbm [resolvable:$true] %s117
      %s119 = sshll.u32 [#allocation13], 4
      %s120 = int_to_ptr.vmem [resolvable:$true] %s119
      %125 = dma.hbm_to_vmem [thread:$0]  %s118, 512, %s120, [#allocation12], 128, 128, 8
    $region53: #{tpu_custom_call.1} parent=1 // pred_fallthru
      _
    // Predicated region
    $region54: #{tpu_custom_call.1} parent=1 // pred_check
      _
    $region55: #{tpu_custom_call.1} parent=1 // pred_check_branch
      %127 = sbr.rel (0) target = $region57
    $region56: #{tpu_custom_call.1} parent=1 // pred_region
      _
    $region57: #{tpu_custom_call.1} parent=1 // pred_fallthru
      _
    // Predicated region
    $region58: #{tpu_custom_call.1} parent=1 // pred_check
      _
    $region59: #{tpu_custom_call.1} parent=1 // pred_check_branch
      %129 = sbr.rel (0) target = $region61
    $region60: #{tpu_custom_call.1} parent=1 // pred_region
      _
    $region61: #{tpu_custom_call.1} parent=1 // pred_fallthru
      _
    // Predicated region
    $region62: #{tpu_custom_call.1} parent=1 // pred_check
      _
    $region63: #{tpu_custom_call.1} parent=1 // pred_check_branch
      %131 = sbr.rel (0) target = $region65
    $region64: #{tpu_custom_call.1} parent=1 // pred_region
      _
    $region65: #{tpu_custom_call.1} parent=1 // pred_fallthru
      _
    // Predicated region
    $region66: #{tpu_custom_call.1} parent=1 // pred_check
      _
    $region67: #{tpu_custom_call.1} parent=1 // pred_check_branch
      %133 = sbr.rel (0) target = $region69
    $region68: #{tpu_custom_call.1} parent=1 // pred_region
      _
    $region69: #{tpu_custom_call.1} parent=1 // pred_fallthru
      _
    // Predicated region
    $region70: #{tpu_custom_call.1} parent=1 // pred_check
      _
    $region71: #{tpu_custom_call.1} parent=1 // pred_check_branch
      %135 = sbr.rel (0) target = $region73
    $region72: #{tpu_custom_call.1} parent=1 // pred_region
      _
    $region73: #{tpu_custom_call.1} parent=1 // pred_fallthru
      _
    // Predicated region
    $region74: #{tpu_custom_call.1} parent=1 // pred_check
      _
    $region75: #{tpu_custom_call.1} parent=1 // pred_check_branch
      %137 = sbr.rel (0) target = $region77
    $region76: #{tpu_custom_call.1} parent=1 // pred_region
      %139 = dma.done [#allocation3], 128
    $region77: #{tpu_custom_call.1} parent=1 // pred_fallthru
      _
    // Predicated region
    $region78: #{tpu_custom_call.1} parent=1 // pred_check
      _
    $region79: #{tpu_custom_call.1} parent=1 // pred_check_branch
      %141 = sbr.rel (0) target = $region81
    $region80: #{tpu_custom_call.1} parent=1 // pred_region
      %143 = dma.done [#allocation6], 128
    $region81: #{tpu_custom_call.1} parent=1 // pred_fallthru
      _
    // Predicated region
    $region82: #{tpu_custom_call.1} parent=1 // pred_check
      _
    $region83: #{tpu_custom_call.1} parent=1 // pred_check_branch
      %145 = sbr.rel (0) target = $region85
    $region84: #{tpu_custom_call.1} parent=1 // pred_region
      %147 = dma.done [#allocation6], 128
    $region85: #{tpu_custom_call.1} parent=1 // pred_fallthru
      _
    // Predicated region
    $region86: #{tpu_custom_call.1} parent=1 // pred_check
      _
    $region87: #{tpu_custom_call.1} parent=1 // pred_check_branch
      %149 = sbr.rel (0) target = $region89
    $region88: #{tpu_custom_call.1} parent=1 // pred_region
      %151 = dma.done [#allocation9], 128
    $region89: #{tpu_custom_call.1} parent=1 // pred_fallthru
      _
    // Predicated region
    $region90: #{tpu_custom_call.1} parent=1 // pred_check
      _
    $region91: #{tpu_custom_call.1} parent=1 // pred_check_branch
      %153 = sbr.rel (0) target = $region93
    $region92: #{tpu_custom_call.1} parent=1 // pred_region
      %155 = dma.done [#allocation9], 512
    $region93: #{tpu_custom_call.1} parent=1 // pred_fallthru
      _
    // Predicated region
    $region94: #{tpu_custom_call.1} parent=1 // pred_check
      _
    $region95: #{tpu_custom_call.1} parent=1 // pred_check_branch
      %157 = sbr.rel (0) target = $region97
    $region96: #{tpu_custom_call.1} parent=1 // pred_region
      %159 = dma.done [#allocation12], 512
    $region97: #{tpu_custom_call.1} parent=1 // pred_fallthru
      _
    // Predicated region
    $region98: #{tpu_custom_call.1} parent=1 // pred_check
      _
    $region99: #{tpu_custom_call.1} parent=1 // pred_check_branch
      %161 = sbr.rel (0) target = $region101
    $region100: #{tpu_custom_call.1} parent=1 // pred_region
      %163 = dma.done [#allocation12], 512
    $region101: #{tpu_custom_call.1} parent=1 // pred_fallthru
      _
    %v164 = vld [vmem:[#allocation2] sm:$0xff]
    %v165 = vld [vmem:[#allocation5] sm:$0xff]
    %v166 = vld [vmem:[%s4] sm:$0xff]
    %v167 = vld [vmem:[%s4 + $0x8] sm:$0xff]
    %v168 = vld [vmem:[%s4 + $0x10] sm:$0xff]
    %v169 = vld [vmem:[%s4 + $0x18] sm:$0xff]
    %v170 = vld [vmem:[#allocation10] sm:$0xff]
    %v171 = vld [vmem:[#allocation10 + $0x8] sm:$0xff]
    %v172 = vld [vmem:[#allocation10 + $0x10] sm:$0xff]
    %v173 = vld [vmem:[#allocation10 + $0x18] sm:$0xff]
    %vm174 = vcmask 261120
    %v176 = vsel %vm174, %v165, 0
    %178 = vmatpush.msra.mxu0 0.0
    %179 = vmatpush.msra.mxu0 0.0
    %180 = vmatpush.msra.mxu0 0.0
    %181 = vmatpush.msra.mxu0 0.0
    %182 = vmatpush.msra.mxu0 0.0
    %183 = vmatpush.msra.mxu0 0.0
    %184 = vmatpush.msra.mxu0 0.0
    %185 = vmatpush.msra.mxu0 0.0
    %186 = vmatpush.msra.mxu0 0.0
    %187 = vmatpush.msra.mxu0 0.0
    %188 = vmatpush.msra.mxu0 0.0
    %189 = vmatpush.msra.mxu0 0.0
    %v190 = vand.u32 %v173, 4294901760
    %191 = vmatpush.msra.mxu0 %v190
    %v192 = vand.u32 %v172, 4294901760
    %193 = vmatpush.msra.mxu0 %v192
    %v194 = vand.u32 %v171, 4294901760
    %195 = vmatpush.msra.mxu0 %v194
    %v196 = vand.u32 %v170, 4294901760
    %197 = vmatpush.msra.mxu0 %v196
    %v198 = vand.u32 %v176, 4294901760
    %v199 = vsub.f32 %v176, %v198
    %v200 = vand.u32 %v199, 4294901760
    %v201 = vsub.f32 %v199, %v200
    %v202 = vand.u32 %v201, 4294901760
    %203 = vmatmul.f32.gmra.mxu0 %v202
    %v204 = vpop.f32.mrf.mxu0
    %v205 = vadd.f32 0.0, %v204
    %206 = vdwg.mxu0
    %207 = vmatpush.msra.mxu0 0.0
    %208 = vmatpush.msra.mxu0 0.0
    %209 = vmatpush.msra.mxu0 0.0
    %210 = vmatpush.msra.mxu0 0.0
    %211 = vmatpush.msra.mxu0 0.0
    %212 = vmatpush.msra.mxu0 0.0
    %213 = vmatpush.msra.mxu0 0.0
    %214 = vmatpush.msra.mxu0 0.0
    %215 = vmatpush.msra.mxu0 0.0
    %216 = vmatpush.msra.mxu0 0.0
    %217 = vmatpush.msra.mxu0 0.0
    %218 = vmatpush.msra.mxu0 0.0
    %v219 = vand.u32 %v173, 4294901760
    %v220 = vsub.f32 %v173, %v219
    %v221 = vand.u32 %v220, 4294901760
    %v222 = vsub.f32 %v220, %v221
    %v223 = vand.u32 %v222, 4294901760
    %224 = vmatpush.msra.mxu0 %v223
    %v225 = vand.u32 %v172, 4294901760
    %v226 = vsub.f32 %v172, %v225
    %v227 = vand.u32 %v226, 4294901760
    %v228 = vsub.f32 %v226, %v227
    %v229 = vand.u32 %v228, 4294901760
    %230 = vmatpush.msra.mxu0 %v229
    %v231 = vand.u32 %v171, 4294901760
    %v232 = vsub.f32 %v171, %v231
    %v233 = vand.u32 %v232, 4294901760
    %v234 = vsub.f32 %v232, %v233
    %v235 = vand.u32 %v234, 4294901760
    %236 = vmatpush.msra.mxu0 %v235
    %v237 = vand.u32 %v170, 4294901760
    %v238 = vsub.f32 %v170, %v237
    %v239 = vand.u32 %v238, 4294901760
    %v240 = vsub.f32 %v238, %v239
    %v241 = vand.u32 %v240, 4294901760
    %242 = vmatpush.msra.mxu0 %v241
    %v243 = vand.u32 %v176, 4294901760
    %244 = vmatmul.f32.gmra.mxu0 %v243
    %v245 = vpop.f32.mrf.mxu0
    %v246 = vadd.f32 %v205, %v245
    %247 = vdwg.mxu0
    %248 = vmatpush.msra.mxu0 0.0
    %249 = vmatpush.msra.mxu0 0.0
    %250 = vmatpush.msra.mxu0 0.0
    %251 = vmatpush.msra.mxu0 0.0
    %252 = vmatpush.msra.mxu0 0.0
    %253 = vmatpush.msra.mxu0 0.0
    %254 = vmatpush.msra.mxu0 0.0
    %255 = vmatpush.msra.mxu0 0.0
    %256 = vmatpush.msra.mxu0 0.0
    %257 = vmatpush.msra.mxu0 0.0
    %258 = vmatpush.msra.mxu0 0.0
    %259 = vmatpush.msra.mxu0 0.0
    %v260 = vand.u32 %v173, 4294901760
    %v261 = vsub.f32 %v173, %v260
    %262 = vmatpush.msra.mxu0 %v261
    %v263 = vand.u32 %v172, 4294901760
    %v264 = vsub.f32 %v172, %v263
    %265 = vmatpush.msra.mxu0 %v264
    %v266 = vand.u32 %v171, 4294901760
    %v267 = vsub.f32 %v171, %v266
    %268 = vmatpush.msra.mxu0 %v267
    %v269 = vand.u32 %v170, 4294901760
    %v270 = vsub.f32 %v170, %v269
    %271 = vmatpush.msra.mxu0 %v270
    %v272 = vand.u32 %v176, 4294901760
    %v273 = vsub.f32 %v176, %v272
    %274 = vmatmul.f32.gmra.mxu0 %v273
    %v275 = vpop.f32.mrf.mxu0
    %v276 = vadd.f32 %v246, %v275
    %277 = vdwg.mxu0
    %278 = vmatpush.msra.mxu0 0.0
    %279 = vmatpush.msra.mxu0 0.0
    %280 = vmatpush.msra.mxu0 0.0
    %281 = vmatpush.msra.mxu0 0.0
    %282 = vmatpush.msra.mxu0 0.0
    %283 = vmatpush.msra.mxu0 0.0
    %284 = vmatpush.msra.mxu0 0.0
    %285 = vmatpush.msra.mxu0 0.0
    %286 = vmatpush.msra.mxu0 0.0
    %287 = vmatpush.msra.mxu0 0.0
    %288 = vmatpush.msra.mxu0 0.0
    %289 = vmatpush.msra.mxu0 0.0
    %v290 = vand.u32 %v173, 4294901760
    %291 = vmatpush.msra.mxu0 %v290
    %v292 = vand.u32 %v172, 4294901760
    %293 = vmatpush.msra.mxu0 %v292
    %v294 = vand.u32 %v171, 4294901760
    %295 = vmatpush.msra.mxu0 %v294
    %v296 = vand.u32 %v170, 4294901760
    %297 = vmatpush.msra.mxu0 %v296
    %v298 = vand.u32 %v176, 4294901760
    %v299 = vsub.f32 %v176, %v298
    %v300 = vand.u32 %v299, 4294901760
    %301 = vmatmul.f32.gmra.mxu0 %v300
    %v302 = vpop.f32.mrf.mxu0
    %v303 = vadd.f32 %v276, %v302
    %304 = vdwg.mxu0
    %305 = vmatpush.msra.mxu0 0.0
    %306 = vmatpush.msra.mxu0 0.0
    %307 = vmatpush.msra.mxu0 0.0
    %308 = vmatpush.msra.mxu0 0.0
    %309 = vmatpush.msra.mxu0 0.0
    %310 = vmatpush.msra.mxu0 0.0
    %311 = vmatpush.msra.mxu0 0.0
    %312 = vmatpush.msra.mxu0 0.0
    %313 = vmatpush.msra.mxu0 0.0
    %314 = vmatpush.msra.mxu0 0.0
    %315 = vmatpush.msra.mxu0 0.0
    %316 = vmatpush.msra.mxu0 0.0
    %v317 = vand.u32 %v173, 4294901760
    %v318 = vsub.f32 %v173, %v317
    %v319 = vand.u32 %v318, 4294901760
    %320 = vmatpush.msra.mxu0 %v319
    %v321 = vand.u32 %v172, 4294901760
    %v322 = vsub.f32 %v172, %v321
    %v323 = vand.u32 %v322, 4294901760
    %324 = vmatpush.msra.mxu0 %v323
    %v325 = vand.u32 %v171, 4294901760
    %v326 = vsub.f32 %v171, %v325
    %v327 = vand.u32 %v326, 4294901760
    %328 = vmatpush.msra.mxu0 %v327
    %v329 = vand.u32 %v170, 4294901760
    %v330 = vsub.f32 %v170, %v329
    %v331 = vand.u32 %v330, 4294901760
    %332 = vmatpush.msra.mxu0 %v331
    %v333 = vand.u32 %v176, 4294901760
    %334 = vmatmul.f32.gmra.mxu0 %v333
    %v335 = vpop.f32.mrf.mxu0
    %v336 = vadd.f32 %v303, %v335
    %337 = vdwg.mxu0
    %338 = vmatpush.msra.mxu0 0.0
    %339 = vmatpush.msra.mxu0 0.0
    %340 = vmatpush.msra.mxu0 0.0
    %341 = vmatpush.msra.mxu0 0.0
    %342 = vmatpush.msra.mxu0 0.0
    %343 = vmatpush.msra.mxu0 0.0
    %344 = vmatpush.msra.mxu0 0.0
    %345 = vmatpush.msra.mxu0 0.0
    %346 = vmatpush.msra.mxu0 0.0
    %347 = vmatpush.msra.mxu0 0.0
    %348 = vmatpush.msra.mxu0 0.0
    %349 = vmatpush.msra.mxu0 0.0
    %v350 = vand.u32 %v173, 4294901760
    %351 = vmatpush.msra.mxu0 %v350
    %v352 = vand.u32 %v172, 4294901760
    %353 = vmatpush.msra.mxu0 %v352
    %v354 = vand.u32 %v171, 4294901760
    %355 = vmatpush.msra.mxu0 %v354
    %v356 = vand.u32 %v170, 4294901760
    %357 = vmatpush.msra.mxu0 %v356
    %v358 = vand.u32 %v176, 4294901760
    %359 = vmatmul.f32.gmra.mxu0 %v358
    %v360 = vpop.f32.mrf.mxu0
    %v361 = vadd.f32 %v336, %v360
    %362 = vdwg.mxu0
    %v364 = vsel %vm174, %v164, 0
    %366 = vmatpush.msra.mxu0 0.0
    %367 = vmatpush.msra.mxu0 0.0
    %368 = vmatpush.msra.mxu0 0.0
    %369 = vmatpush.msra.mxu0 0.0
    %370 = vmatpush.msra.mxu0 0.0
    %371 = vmatpush.msra.mxu0 0.0
    %372 = vmatpush.msra.mxu0 0.0
    %373 = vmatpush.msra.mxu0 0.0
    %374 = vmatpush.msra.mxu0 0.0
    %375 = vmatpush.msra.mxu0 0.0
    %376 = vmatpush.msra.mxu0 0.0
    %377 = vmatpush.msra.mxu0 0.0
    %v378 = vand.u32 %v169, 4294901760
    %379 = vmatpush.msra.mxu0 %v378
    %v380 = vand.u32 %v168, 4294901760
    %381 = vmatpush.msra.mxu0 %v380
    %v382 = vand.u32 %v167, 4294901760
    %383 = vmatpush.msra.mxu0 %v382
    %v384 = vand.u32 %v166, 4294901760
    %385 = vmatpush.msra.mxu0 %v384
    %v386 = vand.u32 %v364, 4294901760
    %v387 = vsub.f32 %v364, %v386
    %v388 = vand.u32 %v387, 4294901760
    %v389 = vsub.f32 %v387, %v388
    %v390 = vand.u32 %v389, 4294901760
    %391 = vmatmul.f32.gmra.mxu0 %v390
    %v392 = vpop.f32.mrf.mxu0
    %v393 = vadd.f32 %v361, %v392
    %394 = vdwg.mxu0
    %395 = vmatpush.msra.mxu0 0.0
    %396 = vmatpush.msra.mxu0 0.0
    %397 = vmatpush.msra.mxu0 0.0
    %398 = vmatpush.msra.mxu0 0.0
    %399 = vmatpush.msra.mxu0 0.0
    %400 = vmatpush.msra.mxu0 0.0
    %401 = vmatpush.msra.mxu0 0.0
    %402 = vmatpush.msra.mxu0 0.0
    %403 = vmatpush.msra.mxu0 0.0
    %404 = vmatpush.msra.mxu0 0.0
    %405 = vmatpush.msra.mxu0 0.0
    %406 = vmatpush.msra.mxu0 0.0
    %v407 = vand.u32 %v169, 4294901760
    %v408 = vsub.f32 %v169, %v407
    %v409 = vand.u32 %v408, 4294901760
    %v410 = vsub.f32 %v408, %v409
    %v411 = vand.u32 %v410, 4294901760
    %412 = vmatpush.msra.mxu0 %v411
    %v413 = vand.u32 %v168, 4294901760
    %v414 = vsub.f32 %v168, %v413
    %v415 = vand.u32 %v414, 4294901760
    %v416 = vsub.f32 %v414, %v415
    %v417 = vand.u32 %v416, 4294901760
    %418 = vmatpush.msra.mxu0 %v417
    %v419 = vand.u32 %v167, 4294901760
    %v420 = vsub.f32 %v167, %v419
    %v421 = vand.u32 %v420, 4294901760
    %v422 = vsub.f32 %v420, %v421
    %v423 = vand.u32 %v422, 4294901760
    %424 = vmatpush.msra.mxu0 %v423
    %v425 = vand.u32 %v166, 4294901760
    %v426 = vsub.f32 %v166, %v425
    %v427 = vand.u32 %v426, 4294901760
    %v428 = vsub.f32 %v426, %v427
    %v429 = vand.u32 %v428, 4294901760
    %430 = vmatpush.msra.mxu0 %v429
    %v431 = vand.u32 %v364, 4294901760
    %432 = vmatmul.f32.gmra.mxu0 %v431
    %v433 = vpop.f32.mrf.mxu0
    %v434 = vadd.f32 %v393, %v433
    %435 = vdwg.mxu0
    %436 = vmatpush.msra.mxu0 0.0
    %437 = vmatpush.msra.mxu0 0.0
    %438 = vmatpush.msra.mxu0 0.0
    %439 = vmatpush.msra.mxu0 0.0
    %440 = vmatpush.msra.mxu0 0.0
    %441 = vmatpush.msra.mxu0 0.0
    %442 = vmatpush.msra.mxu0 0.0
    %443 = vmatpush.msra.mxu0 0.0
    %444 = vmatpush.msra.mxu0 0.0
    %445 = vmatpush.msra.mxu0 0.0
    %446 = vmatpush.msra.mxu0 0.0
    %447 = vmatpush.msra.mxu0 0.0
    %v448 = vand.u32 %v169, 4294901760
    %v449 = vsub.f32 %v169, %v448
    %450 = vmatpush.msra.mxu0 %v449
    %v451 = vand.u32 %v168, 4294901760
    %v452 = vsub.f32 %v168, %v451
    %453 = vmatpush.msra.mxu0 %v452
    %v454 = vand.u32 %v167, 4294901760
    %v455 = vsub.f32 %v167, %v454
    %456 = vmatpush.msra.mxu0 %v455
    %v457 = vand.u32 %v166, 4294901760
    %v458 = vsub.f32 %v166, %v457
    %459 = vmatpush.msra.mxu0 %v458
    %v460 = vand.u32 %v364, 4294901760
    %v461 = vsub.f32 %v364, %v460
    %462 = vmatmul.f32.gmra.mxu0 %v461
    %v463 = vpop.f32.mrf.mxu0
    %v464 = vadd.f32 %v434, %v463
    %465 = vdwg.mxu0
    %466 = vmatpush.msra.mxu0 0.0
    %467 = vmatpush.msra.mxu0 0.0
    %468 = vmatpush.msra.mxu0 0.0
    %469 = vmatpush.msra.mxu0 0.0
    %470 = vmatpush.msra.mxu0 0.0
    %471 = vmatpush.msra.mxu0 0.0
    %472 = vmatpush.msra.mxu0 0.0
    %473 = vmatpush.msra.mxu0 0.0
    %474 = vmatpush.msra.mxu0 0.0
    %475 = vmatpush.msra.mxu0 0.0
    %476 = vmatpush.msra.mxu0 0.0
    %477 = vmatpush.msra.mxu0 0.0
    %v478 = vand.u32 %v169, 4294901760
    %479 = vmatpush.msra.mxu0 %v478
    %v480 = vand.u32 %v168, 4294901760
    %481 = vmatpush.msra.mxu0 %v480
    %v482 = vand.u32 %v167, 4294901760
    %483 = vmatpush.msra.mxu0 %v482
    %v484 = vand.u32 %v166, 4294901760
    %485 = vmatpush.msra.mxu0 %v484
    %v486 = vand.u32 %v364, 4294901760
    %v487 = vsub.f32 %v364, %v486
    %v488 = vand.u32 %v487, 4294901760
    %489 = vmatmul.f32.gmra.mxu0 %v488
    %v490 = vpop.f32.mrf.mxu0
    %v491 = vadd.f32 %v464, %v490
    %492 = vdwg.mxu0
    %493 = vmatpush.msra.mxu0 0.0
    %494 = vmatpush.msra.mxu0 0.0
    %495 = vmatpush.msra.mxu0 0.0
    %496 = vmatpush.msra.mxu0 0.0
    %497 = vmatpush.msra.mxu0 0.0
    %498 = vmatpush.msra.mxu0 0.0
    %499 = vmatpush.msra.mxu0 0.0
    %500 = vmatpush.msra.mxu0 0.0
    %501 = vmatpush.msra.mxu0 0.0
    %502 = vmatpush.msra.mxu0 0.0
    %503 = vmatpush.msra.mxu0 0.0
    %504 = vmatpush.msra.mxu0 0.0
    %v505 = vand.u32 %v169, 4294901760
    %v506 = vsub.f32 %v169, %v505
    %v507 = vand.u32 %v506, 4294901760
    %508 = vmatpush.msra.mxu0 %v507
    %v509 = vand.u32 %v168, 4294901760
    %v510 = vsub.f32 %v168, %v509
    %v511 = vand.u32 %v510, 4294901760
    %512 = vmatpush.msra.mxu0 %v511
    %v513 = vand.u32 %v167, 4294901760
    %v514 = vsub.f32 %v167, %v513
    %v515 = vand.u32 %v514, 4294901760
    %516 = vmatpush.msra.mxu0 %v515
    %v517 = vand.u32 %v166, 4294901760
    %v518 = vsub.f32 %v166, %v517
    %v519 = vand.u32 %v518, 4294901760
    %520 = vmatpush.msra.mxu0 %v519
    %v521 = vand.u32 %v364, 4294901760
    %522 = vmatmul.f32.gmra.mxu0 %v521
    %v523 = vpop.f32.mrf.mxu0
    %v524 = vadd.f32 %v491, %v523
    %525 = vdwg.mxu0
    %526 = vmatpush.msra.mxu0 0.0
    %527 = vmatpush.msra.mxu0 0.0
    %528 = vmatpush.msra.mxu0 0.0
    %529 = vmatpush.msra.mxu0 0.0
    %530 = vmatpush.msra.mxu0 0.0
    %531 = vmatpush.msra.mxu0 0.0
    %532 = vmatpush.msra.mxu0 0.0
    %533 = vmatpush.msra.mxu0 0.0
    %534 = vmatpush.msra.mxu0 0.0
    %535 = vmatpush.msra.mxu0 0.0
    %536 = vmatpush.msra.mxu0 0.0
    %537 = vmatpush.msra.mxu0 0.0
    %v538 = vand.u32 %v169, 4294901760
    %539 = vmatpush.msra.mxu0 %v538
    %v540 = vand.u32 %v168, 4294901760
    %541 = vmatpush.msra.mxu0 %v540
    %v542 = vand.u32 %v167, 4294901760
    %543 = vmatpush.msra.mxu0 %v542
    %v544 = vand.u32 %v166, 4294901760
    %545 = vmatpush.msra.mxu0 %v544
    %v546 = vand.u32 %v364, 4294901760
    %547 = vmatmul.f32.gmra.mxu0 %v546
    %v548 = vpop.f32.mrf.mxu0
    %v549 = vadd.f32 %v524, %v548
    %550 = vdwg.mxu0
    %v551 = vld [vmem:[%s6] sm:$0x1]
    %v553 = vperm.slane %v551, 0
    %v555 = vadd.f32 %v549, %v553
    %v556 = vmax.f32 %v555, 0.0
    %v557 = vld [vmem:[%s7] sm:$0xff]
    %v558 = vld [vmem:[%s7 + $0x8] sm:$0xff]
    %v559 = vld [vmem:[%s7 + $0x10] sm:$0xff]
    %v560 = vld [vmem:[%s7 + $0x18] sm:$0xff]
    %v561 = vld [vmem:[%s7 + $0x20] sm:$0xff]
    %v562 = vld [vmem:[%s7 + $0x28] sm:$0xff]
    %v563 = vld [vmem:[%s7 + $0x30] sm:$0xff]
    %v564 = vld [vmem:[%s7 + $0x38] sm:$0xff]
    %v565 = vld [vmem:[%s7 + $0x40] sm:$0xff]
    %v566 = vld [vmem:[%s7 + $0x48] sm:$0xff]
    %v567 = vld [vmem:[%s7 + $0x50] sm:$0xff]
    %v568 = vld [vmem:[%s7 + $0x58] sm:$0xff]
    %v569 = vld [vmem:[%s7 + $0x60] sm:$0xff]
    %v570 = vld [vmem:[%s7 + $0x68] sm:$0xff]
    %v571 = vld [vmem:[%s7 + $0x70] sm:$0xff]
    %v572 = vld [vmem:[%s7 + $0x78] sm:$0xff]
    %v573 = vld [vmem:[%s8] sm:$0x1]
    %v575 = vperm.slane %v573, 0
    %v577 = vand.u32 %v572, 4294901760
    %578 = vmatpush.msra.mxu0 %v577
    %v579 = vand.u32 %v571, 4294901760
    %580 = vmatpush.msra.mxu0 %v579
    %v581 = vand.u32 %v570, 4294901760
    %582 = vmatpush.msra.mxu0 %v581
    %v583 = vand.u32 %v569, 4294901760
    %584 = vmatpush.msra.mxu0 %v583
    %v585 = vand.u32 %v568, 4294901760
    %586 = vmatpush.msra.mxu0 %v585
    %v587 = vand.u32 %v567, 4294901760
    %588 = vmatpush.msra.mxu0 %v587
    %v589 = vand.u32 %v566, 4294901760
    %590 = vmatpush.msra.mxu0 %v589
    %v591 = vand.u32 %v565, 4294901760
    %592 = vmatpush.msra.mxu0 %v591
    %v593 = vand.u32 %v564, 4294901760
    %594 = vmatpush.msra.mxu0 %v593
    %v595 = vand.u32 %v563, 4294901760
    %596 = vmatpush.msra.mxu0 %v595
    %v597 = vand.u32 %v562, 4294901760
    %598 = vmatpush.msra.mxu0 %v597
    %v599 = vand.u32 %v561, 4294901760
    %600 = vmatpush.msra.mxu0 %v599
    %v601 = vand.u32 %v560, 4294901760
    %602 = vmatpush.msra.mxu0 %v601
    %v603 = vand.u32 %v559, 4294901760
    %604 = vmatpush.msra.mxu0 %v603
    %v605 = vand.u32 %v558, 4294901760
    %606 = vmatpush.msra.mxu0 %v605
    %v607 = vand.u32 %v557, 4294901760
    %608 = vmatpush.msra.mxu0 %v607
    %v609 = vand.u32 %v556, 4294901760
    %v610 = vsub.f32 %v556, %v609
    %v611 = vand.u32 %v610, 4294901760
    %v612 = vsub.f32 %v610, %v611
    %v613 = vand.u32 %v612, 4294901760
    %614 = vmatmul.f32.gmra.mxu0 %v613
    %v615 = vpop.f32.mrf.mxu0
    %v616 = vadd.f32 %v575, %v615
    %617 = vdwg.mxu0
    %v618 = vand.u32 %v572, 4294901760
    %v619 = vsub.f32 %v572, %v618
    %v620 = vand.u32 %v619, 4294901760
    %v621 = vsub.f32 %v619, %v620
    %v622 = vand.u32 %v621, 4294901760
    %623 = vmatpush.msra.mxu0 %v622
    %v624 = vand.u32 %v571, 4294901760
    %v625 = vsub.f32 %v571, %v624
    %v626 = vand.u32 %v625, 4294901760
    %v627 = vsub.f32 %v625, %v626
    %v628 = vand.u32 %v627, 4294901760
    %629 = vmatpush.msra.mxu0 %v628
    %v630 = vand.u32 %v570, 4294901760
    %v631 = vsub.f32 %v570, %v630
    %v632 = vand.u32 %v631, 4294901760
    %v633 = vsub.f32 %v631, %v632
    %v634 = vand.u32 %v633, 4294901760
    %635 = vmatpush.msra.mxu0 %v634
    %v636 = vand.u32 %v569, 4294901760
    %v637 = vsub.f32 %v569, %v636
    %v638 = vand.u32 %v637, 4294901760
    %v639 = vsub.f32 %v637, %v638
    %v640 = vand.u32 %v639, 4294901760
    %641 = vmatpush.msra.mxu0 %v640
    %v642 = vand.u32 %v568, 4294901760
    %v643 = vsub.f32 %v568, %v642
    %v644 = vand.u32 %v643, 4294901760
    %v645 = vsub.f32 %v643, %v644
    %v646 = vand.u32 %v645, 4294901760
    %647 = vmatpush.msra.mxu0 %v646
    %v648 = vand.u32 %v567, 4294901760
    %v649 = vsub.f32 %v567, %v648
    %v650 = vand.u32 %v649, 4294901760
    %v651 = vsub.f32 %v649, %v650
    %v652 = vand.u32 %v651, 4294901760
    %653 = vmatpush.msra.mxu0 %v652
    %v654 = vand.u32 %v566, 4294901760
    %v655 = vsub.f32 %v566, %v654
    %v656 = vand.u32 %v655, 4294901760
    %v657 = vsub.f32 %v655, %v656
    %v658 = vand.u32 %v657, 4294901760
    %659 = vmatpush.msra.mxu0 %v658
    %v660 = vand.u32 %v565, 4294901760
    %v661 = vsub.f32 %v565, %v660
    %v662 = vand.u32 %v661, 4294901760
    %v663 = vsub.f32 %v661, %v662
    %v664 = vand.u32 %v663, 4294901760
    %665 = vmatpush.msra.mxu0 %v664
    %v666 = vand.u32 %v564, 4294901760
    %v667 = vsub.f32 %v564, %v666
    %v668 = vand.u32 %v667, 4294901760
    %v669 = vsub.f32 %v667, %v668
    %v670 = vand.u32 %v669, 4294901760
    %671 = vmatpush.msra.mxu0 %v670
    %v672 = vand.u32 %v563, 4294901760
    %v673 = vsub.f32 %v563, %v672
    %v674 = vand.u32 %v673, 4294901760
    %v675 = vsub.f32 %v673, %v674
    %v676 = vand.u32 %v675, 4294901760
    %677 = vmatpush.msra.mxu0 %v676
    %v678 = vand.u32 %v562, 4294901760
    %v679 = vsub.f32 %v562, %v678
    %v680 = vand.u32 %v679, 4294901760
    %v681 = vsub.f32 %v679, %v680
    %v682 = vand.u32 %v681, 4294901760
    %683 = vmatpush.msra.mxu0 %v682
    %v684 = vand.u32 %v561, 4294901760
    %v685 = vsub.f32 %v561, %v684
    %v686 = vand.u32 %v685, 4294901760
    %v687 = vsub.f32 %v685, %v686
    %v688 = vand.u32 %v687, 4294901760
    %689 = vmatpush.msra.mxu0 %v688
    %v690 = vand.u32 %v560, 4294901760
    %v691 = vsub.f32 %v560, %v690
    %v692 = vand.u32 %v691, 4294901760
    %v693 = vsub.f32 %v691, %v692
    %v694 = vand.u32 %v693, 4294901760
    %695 = vmatpush.msra.mxu0 %v694
    %v696 = vand.u32 %v559, 4294901760
    %v697 = vsub.f32 %v559, %v696
    %v698 = vand.u32 %v697, 4294901760
    %v699 = vsub.f32 %v697, %v698
    %v700 = vand.u32 %v699, 4294901760
    %701 = vmatpush.msra.mxu0 %v700
    %v702 = vand.u32 %v558, 4294901760
    %v703 = vsub.f32 %v558, %v702
    %v704 = vand.u32 %v703, 4294901760
    %v705 = vsub.f32 %v703, %v704
    %v706 = vand.u32 %v705, 4294901760
    %707 = vmatpush.msra.mxu0 %v706
    %v708 = vand.u32 %v557, 4294901760
    %v709 = vsub.f32 %v557, %v708
    %v710 = vand.u32 %v709, 4294901760
    %v711 = vsub.f32 %v709, %v710
    %v712 = vand.u32 %v711, 4294901760
    %713 = vmatpush.msra.mxu0 %v712
    %v714 = vand.u32 %v556, 4294901760
    %715 = vmatmul.f32.gmra.mxu0 %v714
    %v716 = vpop.f32.mrf.mxu0
    %v717 = vadd.f32 %v616, %v716
    %718 = vdwg.mxu0
    %v719 = vand.u32 %v572, 4294901760
    %v720 = vsub.f32 %v572, %v719
    %721 = vmatpush.msra.mxu0 %v720
    %v722 = vand.u32 %v571, 4294901760
    %v723 = vsub.f32 %v571, %v722
    %724 = vmatpush.msra.mxu0 %v723
    %v725 = vand.u32 %v570, 4294901760
    %v726 = vsub.f32 %v570, %v725
    %727 = vmatpush.msra.mxu0 %v726
    %v728 = vand.u32 %v569, 4294901760
    %v729 = vsub.f32 %v569, %v728
    %730 = vmatpush.msra.mxu0 %v729
    %v731 = vand.u32 %v568, 4294901760
    %v732 = vsub.f32 %v568, %v731
    %733 = vmatpush.msra.mxu0 %v732
    %v734 = vand.u32 %v567, 4294901760
    %v735 = vsub.f32 %v567, %v734
    %736 = vmatpush.msra.mxu0 %v735
    %v737 = vand.u32 %v566, 4294901760
    %v738 = vsub.f32 %v566, %v737
    %739 = vmatpush.msra.mxu0 %v738
    %v740 = vand.u32 %v565, 4294901760
    %v741 = vsub.f32 %v565, %v740
    %742 = vmatpush.msra.mxu0 %v741
    %v743 = vand.u32 %v564, 4294901760
    %v744 = vsub.f32 %v564, %v743
    %745 = vmatpush.msra.mxu0 %v744
    %v746 = vand.u32 %v563, 4294901760
    %v747 = vsub.f32 %v563, %v746
    %748 = vmatpush.msra.mxu0 %v747
    %v749 = vand.u32 %v562, 4294901760
    %v750 = vsub.f32 %v562, %v749
    %751 = vmatpush.msra.mxu0 %v750
    %v752 = vand.u32 %v561, 4294901760
    %v753 = vsub.f32 %v561, %v752
    %754 = vmatpush.msra.mxu0 %v753
    %v755 = vand.u32 %v560, 4294901760
    %v756 = vsub.f32 %v560, %v755
    %757 = vmatpush.msra.mxu0 %v756
    %v758 = vand.u32 %v559, 4294901760
    %v759 = vsub.f32 %v559, %v758
    %760 = vmatpush.msra.mxu0 %v759
    %v761 = vand.u32 %v558, 4294901760
    %v762 = vsub.f32 %v558, %v761
    %763 = vmatpush.msra.mxu0 %v762
    %v764 = vand.u32 %v557, 4294901760
    %v765 = vsub.f32 %v557, %v764
    %766 = vmatpush.msra.mxu0 %v765
    %v767 = vand.u32 %v556, 4294901760
    %v768 = vsub.f32 %v556, %v767
    %769 = vmatmul.f32.gmra.mxu0 %v768
    %v770 = vpop.f32.mrf.mxu0
    %v771 = vadd.f32 %v717, %v770
    %772 = vdwg.mxu0
    %v773 = vand.u32 %v572, 4294901760
    %774 = vmatpush.msra.mxu0 %v773
    %v775 = vand.u32 %v571, 4294901760
    %776 = vmatpush.msra.mxu0 %v775
    %v777 = vand.u32 %v570, 4294901760
    %778 = vmatpush.msra.mxu0 %v777
    %v779 = vand.u32 %v569, 4294901760
    %780 = vmatpush.msra.mxu0 %v779
    %v781 = vand.u32 %v568, 4294901760
    %782 = vmatpush.msra.mxu0 %v781
    %v783 = vand.u32 %v567, 4294901760
    %784 = vmatpush.msra.mxu0 %v783
    %v785 = vand.u32 %v566, 4294901760
    %786 = vmatpush.msra.mxu0 %v785
    %v787 = vand.u32 %v565, 4294901760
    %788 = vmatpush.msra.mxu0 %v787
    %v789 = vand.u32 %v564, 4294901760
    %790 = vmatpush.msra.mxu0 %v789
    %v791 = vand.u32 %v563, 4294901760
    %792 = vmatpush.msra.mxu0 %v791
    %v793 = vand.u32 %v562, 4294901760
    %794 = vmatpush.msra.mxu0 %v793
    %v795 = vand.u32 %v561, 4294901760
    %796 = vmatpush.msra.mxu0 %v795
    %v797 = vand.u32 %v560, 4294901760
    %798 = vmatpush.msra.mxu0 %v797
    %v799 = vand.u32 %v559, 4294901760
    %800 = vmatpush.msra.mxu0 %v799
    %v801 = vand.u32 %v558, 4294901760
    %802 = vmatpush.msra.mxu0 %v801
    %v803 = vand.u32 %v557, 4294901760
    %804 = vmatpush.msra.mxu0 %v803
    %v805 = vand.u32 %v556, 4294901760
    %v806 = vsub.f32 %v556, %v805
    %v807 = vand.u32 %v806, 4294901760
    %808 = vmatmul.f32.gmra.mxu0 %v807
    %v809 = vpop.f32.mrf.mxu0
    %v810 = vadd.f32 %v771, %v809
    %811 = vdwg.mxu0
    %v812 = vand.u32 %v572, 4294901760
    %v813 = vsub.f32 %v572, %v812
    %v814 = vand.u32 %v813, 4294901760
    %815 = vmatpush.msra.mxu0 %v814
    %v816 = vand.u32 %v571, 4294901760
    %v817 = vsub.f32 %v571, %v816
    %v818 = vand.u32 %v817, 4294901760
    %819 = vmatpush.msra.mxu0 %v818
    %v820 = vand.u32 %v570, 4294901760
    %v821 = vsub.f32 %v570, %v820
    %v822 = vand.u32 %v821, 4294901760
    %823 = vmatpush.msra.mxu0 %v822
    %v824 = vand.u32 %v569, 4294901760
    %v825 = vsub.f32 %v569, %v824
    %v826 = vand.u32 %v825, 4294901760
    %827 = vmatpush.msra.mxu0 %v826
    %v828 = vand.u32 %v568, 4294901760
    %v829 = vsub.f32 %v568, %v828
    %v830 = vand.u32 %v829, 4294901760
    %831 = vmatpush.msra.mxu0 %v830
    %v832 = vand.u32 %v567, 4294901760
    %v833 = vsub.f32 %v567, %v832
    %v834 = vand.u32 %v833, 4294901760
    %835 = vmatpush.msra.mxu0 %v834
    %v836 = vand.u32 %v566, 4294901760
    %v837 = vsub.f32 %v566, %v836
    %v838 = vand.u32 %v837, 4294901760
    %839 = vmatpush.msra.mxu0 %v838
    %v840 = vand.u32 %v565, 4294901760
    %v841 = vsub.f32 %v565, %v840
    %v842 = vand.u32 %v841, 4294901760
    %843 = vmatpush.msra.mxu0 %v842
    %v844 = vand.u32 %v564, 4294901760
    %v845 = vsub.f32 %v564, %v844
    %v846 = vand.u32 %v845, 4294901760
    %847 = vmatpush.msra.mxu0 %v846
    %v848 = vand.u32 %v563, 4294901760
    %v849 = vsub.f32 %v563, %v848
    %v850 = vand.u32 %v849, 4294901760
    %851 = vmatpush.msra.mxu0 %v850
    %v852 = vand.u32 %v562, 4294901760
    %v853 = vsub.f32 %v562, %v852
    %v854 = vand.u32 %v853, 4294901760
    %855 = vmatpush.msra.mxu0 %v854
    %v856 = vand.u32 %v561, 4294901760
    %v857 = vsub.f32 %v561, %v856
    %v858 = vand.u32 %v857, 4294901760
    %859 = vmatpush.msra.mxu0 %v858
    %v860 = vand.u32 %v560, 4294901760
    %v861 = vsub.f32 %v560, %v860
    %v862 = vand.u32 %v861, 4294901760
    %863 = vmatpush.msra.mxu0 %v862
    %v864 = vand.u32 %v559, 4294901760
    %v865 = vsub.f32 %v559, %v864
    %v866 = vand.u32 %v865, 4294901760
    %867 = vmatpush.msra.mxu0 %v866
    %v868 = vand.u32 %v558, 4294901760
    %v869 = vsub.f32 %v558, %v868
    %v870 = vand.u32 %v869, 4294901760
    %871 = vmatpush.msra.mxu0 %v870
    %v872 = vand.u32 %v557, 4294901760
    %v873 = vsub.f32 %v557, %v872
    %v874 = vand.u32 %v873, 4294901760
    %875 = vmatpush.msra.mxu0 %v874
    %v876 = vand.u32 %v556, 4294901760
    %877 = vmatmul.f32.gmra.mxu0 %v876
    %v878 = vpop.f32.mrf.mxu0
    %v879 = vadd.f32 %v810, %v878
    %880 = vdwg.mxu0
    %v881 = vand.u32 %v572, 4294901760
    %882 = vmatpush.msra.mxu0 %v881
    %v883 = vand.u32 %v571, 4294901760
    %884 = vmatpush.msra.mxu0 %v883
    %v885 = vand.u32 %v570, 4294901760
    %886 = vmatpush.msra.mxu0 %v885
    %v887 = vand.u32 %v569, 4294901760
    %888 = vmatpush.msra.mxu0 %v887
    %v889 = vand.u32 %v568, 4294901760
    %890 = vmatpush.msra.mxu0 %v889
    %v891 = vand.u32 %v567, 4294901760
    %892 = vmatpush.msra.mxu0 %v891
    %v893 = vand.u32 %v566, 4294901760
    %894 = vmatpush.msra.mxu0 %v893
    %v895 = vand.u32 %v565, 4294901760
    %896 = vmatpush.msra.mxu0 %v895
    %v897 = vand.u32 %v564, 4294901760
    %898 = vmatpush.msra.mxu0 %v897
    %v899 = vand.u32 %v563, 4294901760
    %900 = vmatpush.msra.mxu0 %v899
    %v901 = vand.u32 %v562, 4294901760
    %902 = vmatpush.msra.mxu0 %v901
    %v903 = vand.u32 %v561, 4294901760
    %904 = vmatpush.msra.mxu0 %v903
    %v905 = vand.u32 %v560, 4294901760
    %906 = vmatpush.msra.mxu0 %v905
    %v907 = vand.u32 %v559, 4294901760
    %908 = vmatpush.msra.mxu0 %v907
    %v909 = vand.u32 %v558, 4294901760
    %910 = vmatpush.msra.mxu0 %v909
    %v911 = vand.u32 %v557, 4294901760
    %912 = vmatpush.msra.mxu0 %v911
    %v913 = vand.u32 %v556, 4294901760
    %914 = vmatmul.f32.gmra.mxu0 %v913
    %v915 = vpop.f32.mrf.mxu0
    %v916 = vadd.f32 %v879, %v915
    %917 = vdwg.mxu0
    %v918 = vmax.f32 %v916, 0.0
    %v919 = vld [vmem:[%s9] sm:$0xff]
    %v920 = vld [vmem:[%s9 + $0x8] sm:$0xff]
    %v921 = vld [vmem:[%s9 + $0x10] sm:$0xff]
    %v922 = vld [vmem:[%s9 + $0x18] sm:$0xff]
    %v923 = vld [vmem:[%s9 + $0x20] sm:$0xff]
    %v924 = vld [vmem:[%s9 + $0x28] sm:$0xff]
    %v925 = vld [vmem:[%s9 + $0x30] sm:$0xff]
    %v926 = vld [vmem:[%s9 + $0x38] sm:$0xff]
    %v927 = vld [vmem:[%s9 + $0x40] sm:$0xff]
    %v928 = vld [vmem:[%s9 + $0x48] sm:$0xff]
    %v929 = vld [vmem:[%s9 + $0x50] sm:$0xff]
    %v930 = vld [vmem:[%s9 + $0x58] sm:$0xff]
    %v931 = vld [vmem:[%s9 + $0x60] sm:$0xff]
    %v932 = vld [vmem:[%s9 + $0x68] sm:$0xff]
    %v933 = vld [vmem:[%s9 + $0x70] sm:$0xff]
    %v934 = vld [vmem:[%s9 + $0x78] sm:$0xff]
    %v935 = vld [vmem:[%s10] sm:$0x1]
    %v937 = vperm.slane %v935, 0
    %v939 = vand.u32 %v934, 4294901760
    %940 = vmatpush.msra.mxu0 %v939
    %v941 = vand.u32 %v933, 4294901760
    %942 = vmatpush.msra.mxu0 %v941
    %v943 = vand.u32 %v932, 4294901760
    %944 = vmatpush.msra.mxu0 %v943
    %v945 = vand.u32 %v931, 4294901760
    %946 = vmatpush.msra.mxu0 %v945
    %v947 = vand.u32 %v930, 4294901760
    %948 = vmatpush.msra.mxu0 %v947
    %v949 = vand.u32 %v929, 4294901760
    %950 = vmatpush.msra.mxu0 %v949
    %v951 = vand.u32 %v928, 4294901760
    %952 = vmatpush.msra.mxu0 %v951
    %v953 = vand.u32 %v927, 4294901760
    %954 = vmatpush.msra.mxu0 %v953
    %v955 = vand.u32 %v926, 4294901760
    %956 = vmatpush.msra.mxu0 %v955
    %v957 = vand.u32 %v925, 4294901760
    %958 = vmatpush.msra.mxu0 %v957
    %v959 = vand.u32 %v924, 4294901760
    %960 = vmatpush.msra.mxu0 %v959
    %v961 = vand.u32 %v923, 4294901760
    %962 = vmatpush.msra.mxu0 %v961
    %v963 = vand.u32 %v922, 4294901760
    %964 = vmatpush.msra.mxu0 %v963
    %v965 = vand.u32 %v921, 4294901760
    %966 = vmatpush.msra.mxu0 %v965
    %v967 = vand.u32 %v920, 4294901760
    %968 = vmatpush.msra.mxu0 %v967
    %v969 = vand.u32 %v919, 4294901760
    %970 = vmatpush.msra.mxu0 %v969
    %v971 = vand.u32 %v918, 4294901760
    %v972 = vsub.f32 %v918, %v971
    %v973 = vand.u32 %v972, 4294901760
    %v974 = vsub.f32 %v972, %v973
    %v975 = vand.u32 %v974, 4294901760
    %976 = vmatmul.f32.gmra.mxu0 %v975
    %v977 = vpop.f32.mrf.mxu0
    %v978 = vadd.f32 %v937, %v977
    %979 = vdwg.mxu0
    %v980 = vand.u32 %v934, 4294901760
    %v981 = vsub.f32 %v934, %v980
    %v982 = vand.u32 %v981, 4294901760
    %v983 = vsub.f32 %v981, %v982
    %v984 = vand.u32 %v983, 4294901760
    %985 = vmatpush.msra.mxu0 %v984
    %v986 = vand.u32 %v933, 4294901760
    %v987 = vsub.f32 %v933, %v986
    %v988 = vand.u32 %v987, 4294901760
    %v989 = vsub.f32 %v987, %v988
    %v990 = vand.u32 %v989, 4294901760
    %991 = vmatpush.msra.mxu0 %v990
    %v992 = vand.u32 %v932, 4294901760
    %v993 = vsub.f32 %v932, %v992
    %v994 = vand.u32 %v993, 4294901760
    %v995 = vsub.f32 %v993, %v994
    %v996 = vand.u32 %v995, 4294901760
    %997 = vmatpush.msra.mxu0 %v996
    %v998 = vand.u32 %v931, 4294901760
    %v999 = vsub.f32 %v931, %v998
    %v1000 = vand.u32 %v999, 4294901760
    %v1001 = vsub.f32 %v999, %v1000
    %v1002 = vand.u32 %v1001, 4294901760
    %1003 = vmatpush.msra.mxu0 %v1002
    %v1004 = vand.u32 %v930, 4294901760
    %v1005 = vsub.f32 %v930, %v1004
    %v1006 = vand.u32 %v1005, 4294901760
    %v1007 = vsub.f32 %v1005, %v1006
    %v1008 = vand.u32 %v1007, 4294901760
    %1009 = vmatpush.msra.mxu0 %v1008
    %v1010 = vand.u32 %v929, 4294901760
    %v1011 = vsub.f32 %v929, %v1010
    %v1012 = vand.u32 %v1011, 4294901760
    %v1013 = vsub.f32 %v1011, %v1012
    %v1014 = vand.u32 %v1013, 4294901760
    %1015 = vmatpush.msra.mxu0 %v1014
    %v1016 = vand.u32 %v928, 4294901760
    %v1017 = vsub.f32 %v928, %v1016
    %v1018 = vand.u32 %v1017, 4294901760
    %v1019 = vsub.f32 %v1017, %v1018
    %v1020 = vand.u32 %v1019, 4294901760
    %1021 = vmatpush.msra.mxu0 %v1020
    %v1022 = vand.u32 %v927, 4294901760
    %v1023 = vsub.f32 %v927, %v1022
    %v1024 = vand.u32 %v1023, 4294901760
    %v1025 = vsub.f32 %v1023, %v1024
    %v1026 = vand.u32 %v1025, 4294901760
    %1027 = vmatpush.msra.mxu0 %v1026
    %v1028 = vand.u32 %v926, 4294901760
    %v1029 = vsub.f32 %v926, %v1028
    %v1030 = vand.u32 %v1029, 4294901760
    %v1031 = vsub.f32 %v1029, %v1030
    %v1032 = vand.u32 %v1031, 4294901760
    %1033 = vmatpush.msra.mxu0 %v1032
    %v1034 = vand.u32 %v925, 4294901760
    %v1035 = vsub.f32 %v925, %v1034
    %v1036 = vand.u32 %v1035, 4294901760
    %v1037 = vsub.f32 %v1035, %v1036
    %v1038 = vand.u32 %v1037, 4294901760
    %1039 = vmatpush.msra.mxu0 %v1038
    %v1040 = vand.u32 %v924, 4294901760
    %v1041 = vsub.f32 %v924, %v1040
    %v1042 = vand.u32 %v1041, 4294901760
    %v1043 = vsub.f32 %v1041, %v1042
    %v1044 = vand.u32 %v1043, 4294901760
    %1045 = vmatpush.msra.mxu0 %v1044
    %v1046 = vand.u32 %v923, 4294901760
    %v1047 = vsub.f32 %v923, %v1046
    %v1048 = vand.u32 %v1047, 4294901760
    %v1049 = vsub.f32 %v1047, %v1048
    %v1050 = vand.u32 %v1049, 4294901760
    %1051 = vmatpush.msra.mxu0 %v1050
    %v1052 = vand.u32 %v922, 4294901760
    %v1053 = vsub.f32 %v922, %v1052
    %v1054 = vand.u32 %v1053, 4294901760
    %v1055 = vsub.f32 %v1053, %v1054
    %v1056 = vand.u32 %v1055, 4294901760
    %1057 = vmatpush.msra.mxu0 %v1056
    %v1058 = vand.u32 %v921, 4294901760
    %v1059 = vsub.f32 %v921, %v1058
    %v1060 = vand.u32 %v1059, 4294901760
    %v1061 = vsub.f32 %v1059, %v1060
    %v1062 = vand.u32 %v1061, 4294901760
    %1063 = vmatpush.msra.mxu0 %v1062
    %v1064 = vand.u32 %v920, 4294901760
    %v1065 = vsub.f32 %v920, %v1064
    %v1066 = vand.u32 %v1065, 4294901760
    %v1067 = vsub.f32 %v1065, %v1066
    %v1068 = vand.u32 %v1067, 4294901760
    %1069 = vmatpush.msra.mxu0 %v1068
    %v1070 = vand.u32 %v919, 4294901760
    %v1071 = vsub.f32 %v919, %v1070
    %v1072 = vand.u32 %v1071, 4294901760
    %v1073 = vsub.f32 %v1071, %v1072
    %v1074 = vand.u32 %v1073, 4294901760
    %1075 = vmatpush.msra.mxu0 %v1074
    %v1076 = vand.u32 %v918, 4294901760
    %1077 = vmatmul.f32.gmra.mxu0 %v1076
    %v1078 = vpop.f32.mrf.mxu0
    %v1079 = vadd.f32 %v978, %v1078
    %1080 = vdwg.mxu0
    %v1081 = vand.u32 %v934, 4294901760
    %v1082 = vsub.f32 %v934, %v1081
    %1083 = vmatpush.msra.mxu0 %v1082
    %v1084 = vand.u32 %v933, 4294901760
    %v1085 = vsub.f32 %v933, %v1084
    %1086 = vmatpush.msra.mxu0 %v1085
    %v1087 = vand.u32 %v932, 4294901760
    %v1088 = vsub.f32 %v932, %v1087
    %1089 = vmatpush.msra.mxu0 %v1088
    %v1090 = vand.u32 %v931, 4294901760
    %v1091 = vsub.f32 %v931, %v1090
    %1092 = vmatpush.msra.mxu0 %v1091
    %v1093 = vand.u32 %v930, 4294901760
    %v1094 = vsub.f32 %v930, %v1093
    %1095 = vmatpush.msra.mxu0 %v1094
    %v1096 = vand.u32 %v929, 4294901760
    %v1097 = vsub.f32 %v929, %v1096
    %1098 = vmatpush.msra.mxu0 %v1097
    %v1099 = vand.u32 %v928, 4294901760
    %v1100 = vsub.f32 %v928, %v1099
    %1101 = vmatpush.msra.mxu0 %v1100
    %v1102 = vand.u32 %v927, 4294901760
    %v1103 = vsub.f32 %v927, %v1102
    %1104 = vmatpush.msra.mxu0 %v1103
    %v1105 = vand.u32 %v926, 4294901760
    %v1106 = vsub.f32 %v926, %v1105
    %1107 = vmatpush.msra.mxu0 %v1106
    %v1108 = vand.u32 %v925, 4294901760
    %v1109 = vsub.f32 %v925, %v1108
    %1110 = vmatpush.msra.mxu0 %v1109
    %v1111 = vand.u32 %v924, 4294901760
    %v1112 = vsub.f32 %v924, %v1111
    %1113 = vmatpush.msra.mxu0 %v1112
    %v1114 = vand.u32 %v923, 4294901760
    %v1115 = vsub.f32 %v923, %v1114
    %1116 = vmatpush.msra.mxu0 %v1115
    %v1117 = vand.u32 %v922, 4294901760
    %v1118 = vsub.f32 %v922, %v1117
    %1119 = vmatpush.msra.mxu0 %v1118
    %v1120 = vand.u32 %v921, 4294901760
    %v1121 = vsub.f32 %v921, %v1120
    %1122 = vmatpush.msra.mxu0 %v1121
    %v1123 = vand.u32 %v920, 4294901760
    %v1124 = vsub.f32 %v920, %v1123
    %1125 = vmatpush.msra.mxu0 %v1124
    %v1126 = vand.u32 %v919, 4294901760
    %v1127 = vsub.f32 %v919, %v1126
    %1128 = vmatpush.msra.mxu0 %v1127
    %v1129 = vand.u32 %v918, 4294901760
    %v1130 = vsub.f32 %v918, %v1129
    %1131 = vmatmul.f32.gmra.mxu0 %v1130
    %v1132 = vpop.f32.mrf.mxu0
    %v1133 = vadd.f32 %v1079, %v1132
    %1134 = vdwg.mxu0
    %v1135 = vand.u32 %v934, 4294901760
    %1136 = vmatpush.msra.mxu0 %v1135
    %v1137 = vand.u32 %v933, 4294901760
    %1138 = vmatpush.msra.mxu0 %v1137
    %v1139 = vand.u32 %v932, 4294901760
    %1140 = vmatpush.msra.mxu0 %v1139
    %v1141 = vand.u32 %v931, 4294901760
    %1142 = vmatpush.msra.mxu0 %v1141
    %v1143 = vand.u32 %v930, 4294901760
    %1144 = vmatpush.msra.mxu0 %v1143
    %v1145 = vand.u32 %v929, 4294901760
    %1146 = vmatpush.msra.mxu0 %v1145
    %v1147 = vand.u32 %v928, 4294901760
    %1148 = vmatpush.msra.mxu0 %v1147
    %v1149 = vand.u32 %v927, 4294901760
    %1150 = vmatpush.msra.mxu0 %v1149
    %v1151 = vand.u32 %v926, 4294901760
    %1152 = vmatpush.msra.mxu0 %v1151
    %v1153 = vand.u32 %v925, 4294901760
    %1154 = vmatpush.msra.mxu0 %v1153
    %v1155 = vand.u32 %v924, 4294901760
    %1156 = vmatpush.msra.mxu0 %v1155
    %v1157 = vand.u32 %v923, 4294901760
    %1158 = vmatpush.msra.mxu0 %v1157
    %v1159 = vand.u32 %v922, 4294901760
    %1160 = vmatpush.msra.mxu0 %v1159
    %v1161 = vand.u32 %v921, 4294901760
    %1162 = vmatpush.msra.mxu0 %v1161
    %v1163 = vand.u32 %v920, 4294901760
    %1164 = vmatpush.msra.mxu0 %v1163
    %v1165 = vand.u32 %v919, 4294901760
    %1166 = vmatpush.msra.mxu0 %v1165
    %v1167 = vand.u32 %v918, 4294901760
    %v1168 = vsub.f32 %v918, %v1167
    %v1169 = vand.u32 %v1168, 4294901760
    %1170 = vmatmul.f32.gmra.mxu0 %v1169
    %v1171 = vpop.f32.mrf.mxu0
    %v1172 = vadd.f32 %v1133, %v1171
    %1173 = vdwg.mxu0
    %v1174 = vand.u32 %v934, 4294901760
    %v1175 = vsub.f32 %v934, %v1174
    %v1176 = vand.u32 %v1175, 4294901760
    %1177 = vmatpush.msra.mxu0 %v1176
    %v1178 = vand.u32 %v933, 4294901760
    %v1179 = vsub.f32 %v933, %v1178
    %v1180 = vand.u32 %v1179, 4294901760
    %1181 = vmatpush.msra.mxu0 %v1180
    %v1182 = vand.u32 %v932, 4294901760
    %v1183 = vsub.f32 %v932, %v1182
    %v1184 = vand.u32 %v1183, 4294901760
    %1185 = vmatpush.msra.mxu0 %v1184
    %v1186 = vand.u32 %v931, 4294901760
    %v1187 = vsub.f32 %v931, %v1186
    %v1188 = vand.u32 %v1187, 4294901760
    %1189 = vmatpush.msra.mxu0 %v1188
    %v1190 = vand.u32 %v930, 4294901760
    %v1191 = vsub.f32 %v930, %v1190
    %v1192 = vand.u32 %v1191, 4294901760
    %1193 = vmatpush.msra.mxu0 %v1192
    %v1194 = vand.u32 %v929, 4294901760
    %v1195 = vsub.f32 %v929, %v1194
    %v1196 = vand.u32 %v1195, 4294901760
    %1197 = vmatpush.msra.mxu0 %v1196
    %v1198 = vand.u32 %v928, 4294901760
    %v1199 = vsub.f32 %v928, %v1198
    %v1200 = vand.u32 %v1199, 4294901760
    %1201 = vmatpush.msra.mxu0 %v1200
    %v1202 = vand.u32 %v927, 4294901760
    %v1203 = vsub.f32 %v927, %v1202
    %v1204 = vand.u32 %v1203, 4294901760
    %1205 = vmatpush.msra.mxu0 %v1204
    %v1206 = vand.u32 %v926, 4294901760
    %v1207 = vsub.f32 %v926, %v1206
    %v1208 = vand.u32 %v1207, 4294901760
    %1209 = vmatpush.msra.mxu0 %v1208
    %v1210 = vand.u32 %v925, 4294901760
    %v1211 = vsub.f32 %v925, %v1210
    %v1212 = vand.u32 %v1211, 4294901760
    %1213 = vmatpush.msra.mxu0 %v1212
    %v1214 = vand.u32 %v924, 4294901760
    %v1215 = vsub.f32 %v924, %v1214
    %v1216 = vand.u32 %v1215, 4294901760
    %1217 = vmatpush.msra.mxu0 %v1216
    %v1218 = vand.u32 %v923, 4294901760
    %v1219 = vsub.f32 %v923, %v1218
    %v1220 = vand.u32 %v1219, 4294901760
    %1221 = vmatpush.msra.mxu0 %v1220
    %v1222 = vand.u32 %v922, 4294901760
    %v1223 = vsub.f32 %v922, %v1222
    %v1224 = vand.u32 %v1223, 4294901760
    %1225 = vmatpush.msra.mxu0 %v1224
    %v1226 = vand.u32 %v921, 4294901760
    %v1227 = vsub.f32 %v921, %v1226
    %v1228 = vand.u32 %v1227, 4294901760
    %1229 = vmatpush.msra.mxu0 %v1228
    %v1230 = vand.u32 %v920, 4294901760
    %v1231 = vsub.f32 %v920, %v1230
    %v1232 = vand.u32 %v1231, 4294901760
    %1233 = vmatpush.msra.mxu0 %v1232
    %v1234 = vand.u32 %v919, 4294901760
    %v1235 = vsub.f32 %v919, %v1234
    %v1236 = vand.u32 %v1235, 4294901760
    %1237 = vmatpush.msra.mxu0 %v1236
    %v1238 = vand.u32 %v918, 4294901760
    %1239 = vmatmul.f32.gmra.mxu0 %v1238
    %v1240 = vpop.f32.mrf.mxu0
    %v1241 = vadd.f32 %v1172, %v1240
    %1242 = vdwg.mxu0
    %v1243 = vand.u32 %v934, 4294901760
    %1244 = vmatpush.msra.mxu0 %v1243
    %v1245 = vand.u32 %v933, 4294901760
    %1246 = vmatpush.msra.mxu0 %v1245
    %v1247 = vand.u32 %v932, 4294901760
    %1248 = vmatpush.msra.mxu0 %v1247
    %v1249 = vand.u32 %v931, 4294901760
    %1250 = vmatpush.msra.mxu0 %v1249
    %v1251 = vand.u32 %v930, 4294901760
    %1252 = vmatpush.msra.mxu0 %v1251
    %v1253 = vand.u32 %v929, 4294901760
    %1254 = vmatpush.msra.mxu0 %v1253
    %v1255 = vand.u32 %v928, 4294901760
    %1256 = vmatpush.msra.mxu0 %v1255
    %v1257 = vand.u32 %v927, 4294901760
    %1258 = vmatpush.msra.mxu0 %v1257
    %v1259 = vand.u32 %v926, 4294901760
    %1260 = vmatpush.msra.mxu0 %v1259
    %v1261 = vand.u32 %v925, 4294901760
    %1262 = vmatpush.msra.mxu0 %v1261
    %v1263 = vand.u32 %v924, 4294901760
    %1264 = vmatpush.msra.mxu0 %v1263
    %v1265 = vand.u32 %v923, 4294901760
    %1266 = vmatpush.msra.mxu0 %v1265
    %v1267 = vand.u32 %v922, 4294901760
    %1268 = vmatpush.msra.mxu0 %v1267
    %v1269 = vand.u32 %v921, 4294901760
    %1270 = vmatpush.msra.mxu0 %v1269
    %v1271 = vand.u32 %v920, 4294901760
    %1272 = vmatpush.msra.mxu0 %v1271
    %v1273 = vand.u32 %v919, 4294901760
    %1274 = vmatpush.msra.mxu0 %v1273
    %v1275 = vand.u32 %v918, 4294901760
    %1276 = vmatmul.f32.gmra.mxu0 %v1275
    %v1277 = vpop.f32.mrf.mxu0
    %v1278 = vadd.f32 %v1241, %v1277
    %1279 = vdwg.mxu0
    %v1280 = vadd.f32 %v1278, 1.0
    %v1281 = vmax.f32 %v1280, 0.05
    %v1282 = vmin.f32 %v1281, 1e+09
    %v1283 = vld [vmem:[#allocation7] sm:$0xff]
    %v1284 = vld [vmem:[#allocation8] sm:$0xff]
    %v1285 = vld [vmem:[#allocation11] sm:$0xff]
    %v1286 = vld [vmem:[#allocation11 + $0x8] sm:$0xff]
    %v1287 = vld [vmem:[#allocation11 + $0x10] sm:$0xff]
    %v1288 = vld [vmem:[#allocation11 + $0x18] sm:$0xff]
    %v1289 = vld [vmem:[#allocation13] sm:$0xff]
    %v1290 = vld [vmem:[#allocation13 + $0x8] sm:$0xff]
    %v1291 = vld [vmem:[#allocation13 + $0x10] sm:$0xff]
    %v1292 = vld [vmem:[#allocation13 + $0x18] sm:$0xff]
    %v1294 = vsel %vm174, %v1284, 0
    %1296 = vmatpush.msra.mxu0 0.0
    %1297 = vmatpush.msra.mxu0 0.0
    %1298 = vmatpush.msra.mxu0 0.0
    %1299 = vmatpush.msra.mxu0 0.0
    %1300 = vmatpush.msra.mxu0 0.0
    %1301 = vmatpush.msra.mxu0 0.0
    %1302 = vmatpush.msra.mxu0 0.0
    %1303 = vmatpush.msra.mxu0 0.0
    %1304 = vmatpush.msra.mxu0 0.0
    %1305 = vmatpush.msra.mxu0 0.0
    %1306 = vmatpush.msra.mxu0 0.0
    %1307 = vmatpush.msra.mxu0 0.0
    %v1308 = vand.u32 %v1292, 4294901760
    %1309 = vmatpush.msra.mxu0 %v1308
    %v1310 = vand.u32 %v1291, 4294901760
    %1311 = vmatpush.msra.mxu0 %v1310
    %v1312 = vand.u32 %v1290, 4294901760
    %1313 = vmatpush.msra.mxu0 %v1312
    %v1314 = vand.u32 %v1289, 4294901760
    %1315 = vmatpush.msra.mxu0 %v1314
    %v1316 = vand.u32 %v1294, 4294901760
    %v1317 = vsub.f32 %v1294, %v1316
    %v1318 = vand.u32 %v1317, 4294901760
    %v1319 = vsub.f32 %v1317, %v1318
    %v1320 = vand.u32 %v1319, 4294901760
    %1321 = vmatmul.f32.gmra.mxu0 %v1320
    %v1322 = vpop.f32.mrf.mxu0
    %v1323 = vadd.f32 0.0, %v1322
    %1324 = vdwg.mxu0
    %1325 = vmatpush.msra.mxu0 0.0
    %1326 = vmatpush.msra.mxu0 0.0
    %1327 = vmatpush.msra.mxu0 0.0
    %1328 = vmatpush.msra.mxu0 0.0
    %1329 = vmatpush.msra.mxu0 0.0
    %1330 = vmatpush.msra.mxu0 0.0
    %1331 = vmatpush.msra.mxu0 0.0
    %1332 = vmatpush.msra.mxu0 0.0
    %1333 = vmatpush.msra.mxu0 0.0
    %1334 = vmatpush.msra.mxu0 0.0
    %1335 = vmatpush.msra.mxu0 0.0
    %1336 = vmatpush.msra.mxu0 0.0
    %v1337 = vand.u32 %v1292, 4294901760
    %v1338 = vsub.f32 %v1292, %v1337
    %v1339 = vand.u32 %v1338, 4294901760
    %v1340 = vsub.f32 %v1338, %v1339
    %v1341 = vand.u32 %v1340, 4294901760
    %1342 = vmatpush.msra.mxu0 %v1341
    %v1343 = vand.u32 %v1291, 4294901760
    %v1344 = vsub.f32 %v1291, %v1343
    %v1345 = vand.u32 %v1344, 4294901760
    %v1346 = vsub.f32 %v1344, %v1345
    %v1347 = vand.u32 %v1346, 4294901760
    %1348 = vmatpush.msra.mxu0 %v1347
    %v1349 = vand.u32 %v1290, 4294901760
    %v1350 = vsub.f32 %v1290, %v1349
    %v1351 = vand.u32 %v1350, 4294901760
    %v1352 = vsub.f32 %v1350, %v1351
    %v1353 = vand.u32 %v1352, 4294901760
    %1354 = vmatpush.msra.mxu0 %v1353
    %v1355 = vand.u32 %v1289, 4294901760
    %v1356 = vsub.f32 %v1289, %v1355
    %v1357 = vand.u32 %v1356, 4294901760
    %v1358 = vsub.f32 %v1356, %v1357
    %v1359 = vand.u32 %v1358, 4294901760
    %1360 = vmatpush.msra.mxu0 %v1359
    %v1361 = vand.u32 %v1294, 4294901760
    %1362 = vmatmul.f32.gmra.mxu0 %v1361
    %v1363 = vpop.f32.mrf.mxu0
    %v1364 = vadd.f32 %v1323, %v1363
    %1365 = vdwg.mxu0
    %1366 = vmatpush.msra.mxu0 0.0
    %1367 = vmatpush.msra.mxu0 0.0
    %1368 = vmatpush.msra.mxu0 0.0
    %1369 = vmatpush.msra.mxu0 0.0
    %1370 = vmatpush.msra.mxu0 0.0
    %1371 = vmatpush.msra.mxu0 0.0
    %1372 = vmatpush.msra.mxu0 0.0
    %1373 = vmatpush.msra.mxu0 0.0
    %1374 = vmatpush.msra.mxu0 0.0
    %1375 = vmatpush.msra.mxu0 0.0
    %1376 = vmatpush.msra.mxu0 0.0
    %1377 = vmatpush.msra.mxu0 0.0
    %v1378 = vand.u32 %v1292, 4294901760
    %v1379 = vsub.f32 %v1292, %v1378
    %1380 = vmatpush.msra.mxu0 %v1379
    %v1381 = vand.u32 %v1291, 4294901760
    %v1382 = vsub.f32 %v1291, %v1381
    %1383 = vmatpush.msra.mxu0 %v1382
    %v1384 = vand.u32 %v1290, 4294901760
    %v1385 = vsub.f32 %v1290, %v1384
    %1386 = vmatpush.msra.mxu0 %v1385
    %v1387 = vand.u32 %v1289, 4294901760
    %v1388 = vsub.f32 %v1289, %v1387
    %1389 = vmatpush.msra.mxu0 %v1388
    %v1390 = vand.u32 %v1294, 4294901760
    %v1391 = vsub.f32 %v1294, %v1390
    %1392 = vmatmul.f32.gmra.mxu0 %v1391
    %v1393 = vpop.f32.mrf.mxu0
    %v1394 = vadd.f32 %v1364, %v1393
    %1395 = vdwg.mxu0
    %1396 = vmatpush.msra.mxu0 0.0
    %1397 = vmatpush.msra.mxu0 0.0
    %1398 = vmatpush.msra.mxu0 0.0
    %1399 = vmatpush.msra.mxu0 0.0
    %1400 = vmatpush.msra.mxu0 0.0
    %1401 = vmatpush.msra.mxu0 0.0
    %1402 = vmatpush.msra.mxu0 0.0
    %1403 = vmatpush.msra.mxu0 0.0
    %1404 = vmatpush.msra.mxu0 0.0
    %1405 = vmatpush.msra.mxu0 0.0
    %1406 = vmatpush.msra.mxu0 0.0
    %1407 = vmatpush.msra.mxu0 0.0
    %v1408 = vand.u32 %v1292, 4294901760
    %1409 = vmatpush.msra.mxu0 %v1408
    %v1410 = vand.u32 %v1291, 4294901760
    %1411 = vmatpush.msra.mxu0 %v1410
    %v1412 = vand.u32 %v1290, 4294901760
    %1413 = vmatpush.msra.mxu0 %v1412
    %v1414 = vand.u32 %v1289, 4294901760
    %1415 = vmatpush.msra.mxu0 %v1414
    %v1416 = vand.u32 %v1294, 4294901760
    %v1417 = vsub.f32 %v1294, %v1416
    %v1418 = vand.u32 %v1417, 4294901760
    %1419 = vmatmul.f32.gmra.mxu0 %v1418
    %v1420 = vpop.f32.mrf.mxu0
    %v1421 = vadd.f32 %v1394, %v1420
    %1422 = vdwg.mxu0
    %1423 = vmatpush.msra.mxu0 0.0
    %1424 = vmatpush.msra.mxu0 0.0
    %1425 = vmatpush.msra.mxu0 0.0
    %1426 = vmatpush.msra.mxu0 0.0
    %1427 = vmatpush.msra.mxu0 0.0
    %1428 = vmatpush.msra.mxu0 0.0
    %1429 = vmatpush.msra.mxu0 0.0
    %1430 = vmatpush.msra.mxu0 0.0
    %1431 = vmatpush.msra.mxu0 0.0
    %1432 = vmatpush.msra.mxu0 0.0
    %1433 = vmatpush.msra.mxu0 0.0
    %1434 = vmatpush.msra.mxu0 0.0
    %v1435 = vand.u32 %v1292, 4294901760
    %v1436 = vsub.f32 %v1292, %v1435
    %v1437 = vand.u32 %v1436, 4294901760
    %1438 = vmatpush.msra.mxu0 %v1437
    %v1439 = vand.u32 %v1291, 4294901760
    %v1440 = vsub.f32 %v1291, %v1439
    %v1441 = vand.u32 %v1440, 4294901760
    %1442 = vmatpush.msra.mxu0 %v1441
    %v1443 = vand.u32 %v1290, 4294901760
    %v1444 = vsub.f32 %v1290, %v1443
    %v1445 = vand.u32 %v1444, 4294901760
    %1446 = vmatpush.msra.mxu0 %v1445
    %v1447 = vand.u32 %v1289, 4294901760
    %v1448 = vsub.f32 %v1289, %v1447
    %v1449 = vand.u32 %v1448, 4294901760
    %1450 = vmatpush.msra.mxu0 %v1449
    %v1451 = vand.u32 %v1294, 4294901760
    %1452 = vmatmul.f32.gmra.mxu0 %v1451
    %v1453 = vpop.f32.mrf.mxu0
    %v1454 = vadd.f32 %v1421, %v1453
    %1455 = vdwg.mxu0
    %1456 = vmatpush.msra.mxu0 0.0
    %1457 = vmatpush.msra.mxu0 0.0
    %1458 = vmatpush.msra.mxu0 0.0
    %1459 = vmatpush.msra.mxu0 0.0
    %1460 = vmatpush.msra.mxu0 0.0
    %1461 = vmatpush.msra.mxu0 0.0
    %1462 = vmatpush.msra.mxu0 0.0
    %1463 = vmatpush.msra.mxu0 0.0
    %1464 = vmatpush.msra.mxu0 0.0
    %1465 = vmatpush.msra.mxu0 0.0
    %1466 = vmatpush.msra.mxu0 0.0
    %1467 = vmatpush.msra.mxu0 0.0
    %v1468 = vand.u32 %v1292, 4294901760
    %1469 = vmatpush.msra.mxu0 %v1468
    %v1470 = vand.u32 %v1291, 4294901760
    %1471 = vmatpush.msra.mxu0 %v1470
    %v1472 = vand.u32 %v1290, 4294901760
    %1473 = vmatpush.msra.mxu0 %v1472
    %v1474 = vand.u32 %v1289, 4294901760
    %1475 = vmatpush.msra.mxu0 %v1474
    %v1476 = vand.u32 %v1294, 4294901760
    %1477 = vmatmul.f32.gmra.mxu0 %v1476
    %v1478 = vpop.f32.mrf.mxu0
    %v1479 = vadd.f32 %v1454, %v1478
    %1480 = vdwg.mxu0
    %v1482 = vsel %vm174, %v1283, 0
    %1484 = vmatpush.msra.mxu0 0.0
    %1485 = vmatpush.msra.mxu0 0.0
    %1486 = vmatpush.msra.mxu0 0.0
    %1487 = vmatpush.msra.mxu0 0.0
    %1488 = vmatpush.msra.mxu0 0.0
    %1489 = vmatpush.msra.mxu0 0.0
    %1490 = vmatpush.msra.mxu0 0.0
    %1491 = vmatpush.msra.mxu0 0.0
    %1492 = vmatpush.msra.mxu0 0.0
    %1493 = vmatpush.msra.mxu0 0.0
    %1494 = vmatpush.msra.mxu0 0.0
    %1495 = vmatpush.msra.mxu0 0.0
    %v1496 = vand.u32 %v1288, 4294901760
    %1497 = vmatpush.msra.mxu0 %v1496
    %v1498 = vand.u32 %v1287, 4294901760
    %1499 = vmatpush.msra.mxu0 %v1498
    %v1500 = vand.u32 %v1286, 4294901760
    %1501 = vmatpush.msra.mxu0 %v1500
    %v1502 = vand.u32 %v1285, 4294901760
    %1503 = vmatpush.msra.mxu0 %v1502
    %v1504 = vand.u32 %v1482, 4294901760
    %v1505 = vsub.f32 %v1482, %v1504
    %v1506 = vand.u32 %v1505, 4294901760
    %v1507 = vsub.f32 %v1505, %v1506
    %v1508 = vand.u32 %v1507, 4294901760
    %1509 = vmatmul.f32.gmra.mxu0 %v1508
    %v1510 = vpop.f32.mrf.mxu0
    %v1511 = vadd.f32 %v1479, %v1510
    %1512 = vdwg.mxu0
    %1513 = vmatpush.msra.mxu0 0.0
    %1514 = vmatpush.msra.mxu0 0.0
    %1515 = vmatpush.msra.mxu0 0.0
    %1516 = vmatpush.msra.mxu0 0.0
    %1517 = vmatpush.msra.mxu0 0.0
    %1518 = vmatpush.msra.mxu0 0.0
    %1519 = vmatpush.msra.mxu0 0.0
    %1520 = vmatpush.msra.mxu0 0.0
    %1521 = vmatpush.msra.mxu0 0.0
    %1522 = vmatpush.msra.mxu0 0.0
    %1523 = vmatpush.msra.mxu0 0.0
    %1524 = vmatpush.msra.mxu0 0.0
    %v1525 = vand.u32 %v1288, 4294901760
    %v1526 = vsub.f32 %v1288, %v1525
    %v1527 = vand.u32 %v1526, 4294901760
    %v1528 = vsub.f32 %v1526, %v1527
    %v1529 = vand.u32 %v1528, 4294901760
    %1530 = vmatpush.msra.mxu0 %v1529
    %v1531 = vand.u32 %v1287, 4294901760
    %v1532 = vsub.f32 %v1287, %v1531
    %v1533 = vand.u32 %v1532, 4294901760
    %v1534 = vsub.f32 %v1532, %v1533
    %v1535 = vand.u32 %v1534, 4294901760
    %1536 = vmatpush.msra.mxu0 %v1535
    %v1537 = vand.u32 %v1286, 4294901760
    %v1538 = vsub.f32 %v1286, %v1537
    %v1539 = vand.u32 %v1538, 4294901760
    %v1540 = vsub.f32 %v1538, %v1539
    %v1541 = vand.u32 %v1540, 4294901760
    %1542 = vmatpush.msra.mxu0 %v1541
    %v1543 = vand.u32 %v1285, 4294901760
    %v1544 = vsub.f32 %v1285, %v1543
    %v1545 = vand.u32 %v1544, 4294901760
    %v1546 = vsub.f32 %v1544, %v1545
    %v1547 = vand.u32 %v1546, 4294901760
    %1548 = vmatpush.msra.mxu0 %v1547
    %v1549 = vand.u32 %v1482, 4294901760
    %1550 = vmatmul.f32.gmra.mxu0 %v1549
    %v1551 = vpop.f32.mrf.mxu0
    %v1552 = vadd.f32 %v1511, %v1551
    %1553 = vdwg.mxu0
    %1554 = vmatpush.msra.mxu0 0.0
    %1555 = vmatpush.msra.mxu0 0.0
    %1556 = vmatpush.msra.mxu0 0.0
    %1557 = vmatpush.msra.mxu0 0.0
    %1558 = vmatpush.msra.mxu0 0.0
    %1559 = vmatpush.msra.mxu0 0.0
    %1560 = vmatpush.msra.mxu0 0.0
    %1561 = vmatpush.msra.mxu0 0.0
    %1562 = vmatpush.msra.mxu0 0.0
    %1563 = vmatpush.msra.mxu0 0.0
    %1564 = vmatpush.msra.mxu0 0.0
    %1565 = vmatpush.msra.mxu0 0.0
    %v1566 = vand.u32 %v1288, 4294901760
    %v1567 = vsub.f32 %v1288, %v1566
    %1568 = vmatpush.msra.mxu0 %v1567
    %v1569 = vand.u32 %v1287, 4294901760
    %v1570 = vsub.f32 %v1287, %v1569
    %1571 = vmatpush.msra.mxu0 %v1570
    %v1572 = vand.u32 %v1286, 4294901760
    %v1573 = vsub.f32 %v1286, %v1572
    %1574 = vmatpush.msra.mxu0 %v1573
    %v1575 = vand.u32 %v1285, 4294901760
    %v1576 = vsub.f32 %v1285, %v1575
    %1577 = vmatpush.msra.mxu0 %v1576
    %v1578 = vand.u32 %v1482, 4294901760
    %v1579 = vsub.f32 %v1482, %v1578
    %1580 = vmatmul.f32.gmra.mxu0 %v1579
    %v1581 = vpop.f32.mrf.mxu0
    %v1582 = vadd.f32 %v1552, %v1581
    %1583 = vdwg.mxu0
    %1584 = vmatpush.msra.mxu0 0.0
    %1585 = vmatpush.msra.mxu0 0.0
    %1586 = vmatpush.msra.mxu0 0.0
    %1587 = vmatpush.msra.mxu0 0.0
    %1588 = vmatpush.msra.mxu0 0.0
    %1589 = vmatpush.msra.mxu0 0.0
    %1590 = vmatpush.msra.mxu0 0.0
    %1591 = vmatpush.msra.mxu0 0.0
    %1592 = vmatpush.msra.mxu0 0.0
    %1593 = vmatpush.msra.mxu0 0.0
    %1594 = vmatpush.msra.mxu0 0.0
    %1595 = vmatpush.msra.mxu0 0.0
    %v1596 = vand.u32 %v1288, 4294901760
    %1597 = vmatpush.msra.mxu0 %v1596
    %v1598 = vand.u32 %v1287, 4294901760
    %1599 = vmatpush.msra.mxu0 %v1598
    %v1600 = vand.u32 %v1286, 4294901760
    %1601 = vmatpush.msra.mxu0 %v1600
    %v1602 = vand.u32 %v1285, 4294901760
    %1603 = vmatpush.msra.mxu0 %v1602
    %v1604 = vand.u32 %v1482, 4294901760
    %v1605 = vsub.f32 %v1482, %v1604
    %v1606 = vand.u32 %v1605, 4294901760
    %1607 = vmatmul.f32.gmra.mxu0 %v1606
    %v1608 = vpop.f32.mrf.mxu0
    %v1609 = vadd.f32 %v1582, %v1608
    %1610 = vdwg.mxu0
    %1611 = vmatpush.msra.mxu0 0.0
    %1612 = vmatpush.msra.mxu0 0.0
    %1613 = vmatpush.msra.mxu0 0.0
    %1614 = vmatpush.msra.mxu0 0.0
    %1615 = vmatpush.msra.mxu0 0.0
    %1616 = vmatpush.msra.mxu0 0.0
    %1617 = vmatpush.msra.mxu0 0.0
    %1618 = vmatpush.msra.mxu0 0.0
    %1619 = vmatpush.msra.mxu0 0.0
    %1620 = vmatpush.msra.mxu0 0.0
    %1621 = vmatpush.msra.mxu0 0.0
    %1622 = vmatpush.msra.mxu0 0.0
    %v1623 = vand.u32 %v1288, 4294901760
    %v1624 = vsub.f32 %v1288, %v1623
    %v1625 = vand.u32 %v1624, 4294901760
    %1626 = vmatpush.msra.mxu0 %v1625
    %v1627 = vand.u32 %v1287, 4294901760
    %v1628 = vsub.f32 %v1287, %v1627
    %v1629 = vand.u32 %v1628, 4294901760
    %1630 = vmatpush.msra.mxu0 %v1629
    %v1631 = vand.u32 %v1286, 4294901760
    %v1632 = vsub.f32 %v1286, %v1631
    %v1633 = vand.u32 %v1632, 4294901760
    %1634 = vmatpush.msra.mxu0 %v1633
    %v1635 = vand.u32 %v1285, 4294901760
    %v1636 = vsub.f32 %v1285, %v1635
    %v1637 = vand.u32 %v1636, 4294901760
    %1638 = vmatpush.msra.mxu0 %v1637
    %v1639 = vand.u32 %v1482, 4294901760
    %1640 = vmatmul.f32.gmra.mxu0 %v1639
    %v1641 = vpop.f32.mrf.mxu0
    %v1642 = vadd.f32 %v1609, %v1641
    %1643 = vdwg.mxu0
    %1644 = vmatpush.msra.mxu0 0.0
    %1645 = vmatpush.msra.mxu0 0.0
    %1646 = vmatpush.msra.mxu0 0.0
    %1647 = vmatpush.msra.mxu0 0.0
    %1648 = vmatpush.msra.mxu0 0.0
    %1649 = vmatpush.msra.mxu0 0.0
    %1650 = vmatpush.msra.mxu0 0.0
    %1651 = vmatpush.msra.mxu0 0.0
    %1652 = vmatpush.msra.mxu0 0.0
    %1653 = vmatpush.msra.mxu0 0.0
    %1654 = vmatpush.msra.mxu0 0.0
    %1655 = vmatpush.msra.mxu0 0.0
    %v1656 = vand.u32 %v1288, 4294901760
    %1657 = vmatpush.msra.mxu0 %v1656
    %v1658 = vand.u32 %v1287, 4294901760
    %1659 = vmatpush.msra.mxu0 %v1658
    %v1660 = vand.u32 %v1286, 4294901760
    %1661 = vmatpush.msra.mxu0 %v1660
    %v1662 = vand.u32 %v1285, 4294901760
    %1663 = vmatpush.msra.mxu0 %v1662
    %v1664 = vand.u32 %v1482, 4294901760
    %1665 = vmatmul.f32.gmra.mxu0 %v1664
    %v1666 = vpop.f32.mrf.mxu0
    %v1667 = vadd.f32 %v1642, %v1666
    %1668 = vdwg.mxu0
    %v1669 = vld [vmem:[%s13] sm:$0x1]
    %v1671 = vperm.slane %v1669, 0
    %v1673 = vadd.f32 %v1667, %v1671
    %v1674 = vmax.f32 %v1673, 0.0
    %v1675 = vld [vmem:[%s14] sm:$0xff]
    %v1676 = vld [vmem:[%s14 + $0x8] sm:$0xff]
    %v1677 = vld [vmem:[%s14 + $0x10] sm:$0xff]
    %v1678 = vld [vmem:[%s14 + $0x18] sm:$0xff]
    %v1679 = vld [vmem:[%s14 + $0x20] sm:$0xff]
    %v1680 = vld [vmem:[%s14 + $0x28] sm:$0xff]
    %v1681 = vld [vmem:[%s14 + $0x30] sm:$0xff]
    %v1682 = vld [vmem:[%s14 + $0x38] sm:$0xff]
    %v1683 = vld [vmem:[%s14 + $0x40] sm:$0xff]
    %v1684 = vld [vmem:[%s14 + $0x48] sm:$0xff]
    %v1685 = vld [vmem:[%s14 + $0x50] sm:$0xff]
    %v1686 = vld [vmem:[%s14 + $0x58] sm:$0xff]
    %v1687 = vld [vmem:[%s14 + $0x60] sm:$0xff]
    %v1688 = vld [vmem:[%s14 + $0x68] sm:$0xff]
    %v1689 = vld [vmem:[%s14 + $0x70] sm:$0xff]
    %v1690 = vld [vmem:[%s14 + $0x78] sm:$0xff]
    %v1691 = vld [vmem:[%s15] sm:$0x1]
    %v1693 = vperm.slane %v1691, 0
    %v1695 = vand.u32 %v1690, 4294901760
    %1696 = vmatpush.msra.mxu0 %v1695
    %v1697 = vand.u32 %v1689, 4294901760
    %1698 = vmatpush.msra.mxu0 %v1697
    %v1699 = vand.u32 %v1688, 4294901760
    %1700 = vmatpush.msra.mxu0 %v1699
    %v1701 = vand.u32 %v1687, 4294901760
    %1702 = vmatpush.msra.mxu0 %v1701
    %v1703 = vand.u32 %v1686, 4294901760
    %1704 = vmatpush.msra.mxu0 %v1703
    %v1705 = vand.u32 %v1685, 4294901760
    %1706 = vmatpush.msra.mxu0 %v1705
    %v1707 = vand.u32 %v1684, 4294901760
    %1708 = vmatpush.msra.mxu0 %v1707
    %v1709 = vand.u32 %v1683, 4294901760
    %1710 = vmatpush.msra.mxu0 %v1709
    %v1711 = vand.u32 %v1682, 4294901760
    %1712 = vmatpush.msra.mxu0 %v1711
    %v1713 = vand.u32 %v1681, 4294901760
    %1714 = vmatpush.msra.mxu0 %v1713
    %v1715 = vand.u32 %v1680, 4294901760
    %1716 = vmatpush.msra.mxu0 %v1715
    %v1717 = vand.u32 %v1679, 4294901760
    %1718 = vmatpush.msra.mxu0 %v1717
    %v1719 = vand.u32 %v1678, 4294901760
    %1720 = vmatpush.msra.mxu0 %v1719
    %v1721 = vand.u32 %v1677, 4294901760
    %1722 = vmatpush.msra.mxu0 %v1721
    %v1723 = vand.u32 %v1676, 4294901760
    %1724 = vmatpush.msra.mxu0 %v1723
    %v1725 = vand.u32 %v1675, 4294901760
    %1726 = vmatpush.msra.mxu0 %v1725
    %v1727 = vand.u32 %v1674, 4294901760
    %v1728 = vsub.f32 %v1674, %v1727
    %v1729 = vand.u32 %v1728, 4294901760
    %v1730 = vsub.f32 %v1728, %v1729
    %v1731 = vand.u32 %v1730, 4294901760
    %1732 = vmatmul.f32.gmra.mxu0 %v1731
    %v1733 = vpop.f32.mrf.mxu0
    %v1734 = vadd.f32 %v1693, %v1733
    %1735 = vdwg.mxu0
    %v1736 = vand.u32 %v1690, 4294901760
    %v1737 = vsub.f32 %v1690, %v1736
    %v1738 = vand.u32 %v1737, 4294901760
    %v1739 = vsub.f32 %v1737, %v1738
    %v1740 = vand.u32 %v1739, 4294901760
    %1741 = vmatpush.msra.mxu0 %v1740
    %v1742 = vand.u32 %v1689, 4294901760
    %v1743 = vsub.f32 %v1689, %v1742
    %v1744 = vand.u32 %v1743, 4294901760
    %v1745 = vsub.f32 %v1743, %v1744
    %v1746 = vand.u32 %v1745, 4294901760
    %1747 = vmatpush.msra.mxu0 %v1746
    %v1748 = vand.u32 %v1688, 4294901760
    %v1749 = vsub.f32 %v1688, %v1748
    %v1750 = vand.u32 %v1749, 4294901760
    %v1751 = vsub.f32 %v1749, %v1750
    %v1752 = vand.u32 %v1751, 4294901760
    %1753 = vmatpush.msra.mxu0 %v1752
    %v1754 = vand.u32 %v1687, 4294901760
    %v1755 = vsub.f32 %v1687, %v1754
    %v1756 = vand.u32 %v1755, 4294901760
    %v1757 = vsub.f32 %v1755, %v1756
    %v1758 = vand.u32 %v1757, 4294901760
    %1759 = vmatpush.msra.mxu0 %v1758
    %v1760 = vand.u32 %v1686, 4294901760
    %v1761 = vsub.f32 %v1686, %v1760
    %v1762 = vand.u32 %v1761, 4294901760
    %v1763 = vsub.f32 %v1761, %v1762
    %v1764 = vand.u32 %v1763, 4294901760
    %1765 = vmatpush.msra.mxu0 %v1764
    %v1766 = vand.u32 %v1685, 4294901760
    %v1767 = vsub.f32 %v1685, %v1766
    %v1768 = vand.u32 %v1767, 4294901760
    %v1769 = vsub.f32 %v1767, %v1768
    %v1770 = vand.u32 %v1769, 4294901760
    %1771 = vmatpush.msra.mxu0 %v1770
    %v1772 = vand.u32 %v1684, 4294901760
    %v1773 = vsub.f32 %v1684, %v1772
    %v1774 = vand.u32 %v1773, 4294901760
    %v1775 = vsub.f32 %v1773, %v1774
    %v1776 = vand.u32 %v1775, 4294901760
    %1777 = vmatpush.msra.mxu0 %v1776
    %v1778 = vand.u32 %v1683, 4294901760
    %v1779 = vsub.f32 %v1683, %v1778
    %v1780 = vand.u32 %v1779, 4294901760
    %v1781 = vsub.f32 %v1779, %v1780
    %v1782 = vand.u32 %v1781, 4294901760
    %1783 = vmatpush.msra.mxu0 %v1782
    %v1784 = vand.u32 %v1682, 4294901760
    %v1785 = vsub.f32 %v1682, %v1784
    %v1786 = vand.u32 %v1785, 4294901760
    %v1787 = vsub.f32 %v1785, %v1786
    %v1788 = vand.u32 %v1787, 4294901760
    %1789 = vmatpush.msra.mxu0 %v1788
    %v1790 = vand.u32 %v1681, 4294901760
    %v1791 = vsub.f32 %v1681, %v1790
    %v1792 = vand.u32 %v1791, 4294901760
    %v1793 = vsub.f32 %v1791, %v1792
    %v1794 = vand.u32 %v1793, 4294901760
    %1795 = vmatpush.msra.mxu0 %v1794
    %v1796 = vand.u32 %v1680, 4294901760
    %v1797 = vsub.f32 %v1680, %v1796
    %v1798 = vand.u32 %v1797, 4294901760
    %v1799 = vsub.f32 %v1797, %v1798
    %v1800 = vand.u32 %v1799, 4294901760
    %1801 = vmatpush.msra.mxu0 %v1800
    %v1802 = vand.u32 %v1679, 4294901760
    %v1803 = vsub.f32 %v1679, %v1802
    %v1804 = vand.u32 %v1803, 4294901760
    %v1805 = vsub.f32 %v1803, %v1804
    %v1806 = vand.u32 %v1805, 4294901760
    %1807 = vmatpush.msra.mxu0 %v1806
    %v1808 = vand.u32 %v1678, 4294901760
    %v1809 = vsub.f32 %v1678, %v1808
    %v1810 = vand.u32 %v1809, 4294901760
    %v1811 = vsub.f32 %v1809, %v1810
    %v1812 = vand.u32 %v1811, 4294901760
    %1813 = vmatpush.msra.mxu0 %v1812
    %v1814 = vand.u32 %v1677, 4294901760
    %v1815 = vsub.f32 %v1677, %v1814
    %v1816 = vand.u32 %v1815, 4294901760
    %v1817 = vsub.f32 %v1815, %v1816
    %v1818 = vand.u32 %v1817, 4294901760
    %1819 = vmatpush.msra.mxu0 %v1818
    %v1820 = vand.u32 %v1676, 4294901760
    %v1821 = vsub.f32 %v1676, %v1820
    %v1822 = vand.u32 %v1821, 4294901760
    %v1823 = vsub.f32 %v1821, %v1822
    %v1824 = vand.u32 %v1823, 4294901760
    %1825 = vmatpush.msra.mxu0 %v1824
    %v1826 = vand.u32 %v1675, 4294901760
    %v1827 = vsub.f32 %v1675, %v1826
    %v1828 = vand.u32 %v1827, 4294901760
    %v1829 = vsub.f32 %v1827, %v1828
    %v1830 = vand.u32 %v1829, 4294901760
    %1831 = vmatpush.msra.mxu0 %v1830
    %v1832 = vand.u32 %v1674, 4294901760
    %1833 = vmatmul.f32.gmra.mxu0 %v1832
    %v1834 = vpop.f32.mrf.mxu0
    %v1835 = vadd.f32 %v1734, %v1834
    %1836 = vdwg.mxu0
    %v1837 = vand.u32 %v1690, 4294901760
    %v1838 = vsub.f32 %v1690, %v1837
    %1839 = vmatpush.msra.mxu0 %v1838
    %v1840 = vand.u32 %v1689, 4294901760
    %v1841 = vsub.f32 %v1689, %v1840
    %1842 = vmatpush.msra.mxu0 %v1841
    %v1843 = vand.u32 %v1688, 4294901760
    %v1844 = vsub.f32 %v1688, %v1843
    %1845 = vmatpush.msra.mxu0 %v1844
    %v1846 = vand.u32 %v1687, 4294901760
    %v1847 = vsub.f32 %v1687, %v1846
    %1848 = vmatpush.msra.mxu0 %v1847
    %v1849 = vand.u32 %v1686, 4294901760
    %v1850 = vsub.f32 %v1686, %v1849
    %1851 = vmatpush.msra.mxu0 %v1850
    %v1852 = vand.u32 %v1685, 4294901760
    %v1853 = vsub.f32 %v1685, %v1852
    %1854 = vmatpush.msra.mxu0 %v1853
    %v1855 = vand.u32 %v1684, 4294901760
    %v1856 = vsub.f32 %v1684, %v1855
    %1857 = vmatpush.msra.mxu0 %v1856
    %v1858 = vand.u32 %v1683, 4294901760
    %v1859 = vsub.f32 %v1683, %v1858
    %1860 = vmatpush.msra.mxu0 %v1859
    %v1861 = vand.u32 %v1682, 4294901760
    %v1862 = vsub.f32 %v1682, %v1861
    %1863 = vmatpush.msra.mxu0 %v1862
    %v1864 = vand.u32 %v1681, 4294901760
    %v1865 = vsub.f32 %v1681, %v1864
    %1866 = vmatpush.msra.mxu0 %v1865
    %v1867 = vand.u32 %v1680, 4294901760
    %v1868 = vsub.f32 %v1680, %v1867
    %1869 = vmatpush.msra.mxu0 %v1868
    %v1870 = vand.u32 %v1679, 4294901760
    %v1871 = vsub.f32 %v1679, %v1870
    %1872 = vmatpush.msra.mxu0 %v1871
    %v1873 = vand.u32 %v1678, 4294901760
    %v1874 = vsub.f32 %v1678, %v1873
    %1875 = vmatpush.msra.mxu0 %v1874
    %v1876 = vand.u32 %v1677, 4294901760
    %v1877 = vsub.f32 %v1677, %v1876
    %1878 = vmatpush.msra.mxu0 %v1877
    %v1879 = vand.u32 %v1676, 4294901760
    %v1880 = vsub.f32 %v1676, %v1879
    %1881 = vmatpush.msra.mxu0 %v1880
    %v1882 = vand.u32 %v1675, 4294901760
    %v1883 = vsub.f32 %v1675, %v1882
    %1884 = vmatpush.msra.mxu0 %v1883
    %v1885 = vand.u32 %v1674, 4294901760
    %v1886 = vsub.f32 %v1674, %v1885
    %1887 = vmatmul.f32.gmra.mxu0 %v1886
    %v1888 = vpop.f32.mrf.mxu0
    %v1889 = vadd.f32 %v1835, %v1888
    %1890 = vdwg.mxu0
    %v1891 = vand.u32 %v1690, 4294901760
    %1892 = vmatpush.msra.mxu0 %v1891
    %v1893 = vand.u32 %v1689, 4294901760
    %1894 = vmatpush.msra.mxu0 %v1893
    %v1895 = vand.u32 %v1688, 4294901760
    %1896 = vmatpush.msra.mxu0 %v1895
    %v1897 = vand.u32 %v1687, 4294901760
    %1898 = vmatpush.msra.mxu0 %v1897
    %v1899 = vand.u32 %v1686, 4294901760
    %1900 = vmatpush.msra.mxu0 %v1899
    %v1901 = vand.u32 %v1685, 4294901760
    %1902 = vmatpush.msra.mxu0 %v1901
    %v1903 = vand.u32 %v1684, 4294901760
    %1904 = vmatpush.msra.mxu0 %v1903
    %v1905 = vand.u32 %v1683, 4294901760
    %1906 = vmatpush.msra.mxu0 %v1905
    %v1907 = vand.u32 %v1682, 4294901760
    %1908 = vmatpush.msra.mxu0 %v1907
    %v1909 = vand.u32 %v1681, 4294901760
    %1910 = vmatpush.msra.mxu0 %v1909
    %v1911 = vand.u32 %v1680, 4294901760
    %1912 = vmatpush.msra.mxu0 %v1911
    %v1913 = vand.u32 %v1679, 4294901760
    %1914 = vmatpush.msra.mxu0 %v1913
    %v1915 = vand.u32 %v1678, 4294901760
    %1916 = vmatpush.msra.mxu0 %v1915
    %v1917 = vand.u32 %v1677, 4294901760
    %1918 = vmatpush.msra.mxu0 %v1917
    %v1919 = vand.u32 %v1676, 4294901760
    %1920 = vmatpush.msra.mxu0 %v1919
    %v1921 = vand.u32 %v1675, 4294901760
    %1922 = vmatpush.msra.mxu0 %v1921
    %v1923 = vand.u32 %v1674, 4294901760
    %v1924 = vsub.f32 %v1674, %v1923
    %v1925 = vand.u32 %v1924, 4294901760
    %1926 = vmatmul.f32.gmra.mxu0 %v1925
    %v1927 = vpop.f32.mrf.mxu0
    %v1928 = vadd.f32 %v1889, %v1927
    %1929 = vdwg.mxu0
    %v1930 = vand.u32 %v1690, 4294901760
    %v1931 = vsub.f32 %v1690, %v1930
    %v1932 = vand.u32 %v1931, 4294901760
    %1933 = vmatpush.msra.mxu0 %v1932
    %v1934 = vand.u32 %v1689, 4294901760
    %v1935 = vsub.f32 %v1689, %v1934
    %v1936 = vand.u32 %v1935, 4294901760
    %1937 = vmatpush.msra.mxu0 %v1936
    %v1938 = vand.u32 %v1688, 4294901760
    %v1939 = vsub.f32 %v1688, %v1938
    %v1940 = vand.u32 %v1939, 4294901760
    %1941 = vmatpush.msra.mxu0 %v1940
    %v1942 = vand.u32 %v1687, 4294901760
    %v1943 = vsub.f32 %v1687, %v1942
    %v1944 = vand.u32 %v1943, 4294901760
    %1945 = vmatpush.msra.mxu0 %v1944
    %v1946 = vand.u32 %v1686, 4294901760
    %v1947 = vsub.f32 %v1686, %v1946
    %v1948 = vand.u32 %v1947, 4294901760
    %1949 = vmatpush.msra.mxu0 %v1948
    %v1950 = vand.u32 %v1685, 4294901760
    %v1951 = vsub.f32 %v1685, %v1950
    %v1952 = vand.u32 %v1951, 4294901760
    %1953 = vmatpush.msra.mxu0 %v1952
    %v1954 = vand.u32 %v1684, 4294901760
    %v1955 = vsub.f32 %v1684, %v1954
    %v1956 = vand.u32 %v1955, 4294901760
    %1957 = vmatpush.msra.mxu0 %v1956
    %v1958 = vand.u32 %v1683, 4294901760
    %v1959 = vsub.f32 %v1683, %v1958
    %v1960 = vand.u32 %v1959, 4294901760
    %1961 = vmatpush.msra.mxu0 %v1960
    %v1962 = vand.u32 %v1682, 4294901760
    %v1963 = vsub.f32 %v1682, %v1962
    %v1964 = vand.u32 %v1963, 4294901760
    %1965 = vmatpush.msra.mxu0 %v1964
    %v1966 = vand.u32 %v1681, 4294901760
    %v1967 = vsub.f32 %v1681, %v1966
    %v1968 = vand.u32 %v1967, 4294901760
    %1969 = vmatpush.msra.mxu0 %v1968
    %v1970 = vand.u32 %v1680, 4294901760
    %v1971 = vsub.f32 %v1680, %v1970
    %v1972 = vand.u32 %v1971, 4294901760
    %1973 = vmatpush.msra.mxu0 %v1972
    %v1974 = vand.u32 %v1679, 4294901760
    %v1975 = vsub.f32 %v1679, %v1974
    %v1976 = vand.u32 %v1975, 4294901760
    %1977 = vmatpush.msra.mxu0 %v1976
    %v1978 = vand.u32 %v1678, 4294901760
    %v1979 = vsub.f32 %v1678, %v1978
    %v1980 = vand.u32 %v1979, 4294901760
    %1981 = vmatpush.msra.mxu0 %v1980
    %v1982 = vand.u32 %v1677, 4294901760
    %v1983 = vsub.f32 %v1677, %v1982
    %v1984 = vand.u32 %v1983, 4294901760
    %1985 = vmatpush.msra.mxu0 %v1984
    %v1986 = vand.u32 %v1676, 4294901760
    %v1987 = vsub.f32 %v1676, %v1986
    %v1988 = vand.u32 %v1987, 4294901760
    %1989 = vmatpush.msra.mxu0 %v1988
    %v1990 = vand.u32 %v1675, 4294901760
    %v1991 = vsub.f32 %v1675, %v1990
    %v1992 = vand.u32 %v1991, 4294901760
    %1993 = vmatpush.msra.mxu0 %v1992
    %v1994 = vand.u32 %v1674, 4294901760
    %1995 = vmatmul.f32.gmra.mxu0 %v1994
    %v1996 = vpop.f32.mrf.mxu0
    %v1997 = vadd.f32 %v1928, %v1996
    %1998 = vdwg.mxu0
    %v1999 = vand.u32 %v1690, 4294901760
    %2000 = vmatpush.msra.mxu0 %v1999
    %v2001 = vand.u32 %v1689, 4294901760
    %2002 = vmatpush.msra.mxu0 %v2001
    %v2003 = vand.u32 %v1688, 4294901760
    %2004 = vmatpush.msra.mxu0 %v2003
    %v2005 = vand.u32 %v1687, 4294901760
    %2006 = vmatpush.msra.mxu0 %v2005
    %v2007 = vand.u32 %v1686, 4294901760
    %2008 = vmatpush.msra.mxu0 %v2007
    %v2009 = vand.u32 %v1685, 4294901760
    %2010 = vmatpush.msra.mxu0 %v2009
    %v2011 = vand.u32 %v1684, 4294901760
    %2012 = vmatpush.msra.mxu0 %v2011
    %v2013 = vand.u32 %v1683, 4294901760
    %2014 = vmatpush.msra.mxu0 %v2013
    %v2015 = vand.u32 %v1682, 4294901760
    %2016 = vmatpush.msra.mxu0 %v2015
    %v2017 = vand.u32 %v1681, 4294901760
    %2018 = vmatpush.msra.mxu0 %v2017
    %v2019 = vand.u32 %v1680, 4294901760
    %2020 = vmatpush.msra.mxu0 %v2019
    %v2021 = vand.u32 %v1679, 4294901760
    %2022 = vmatpush.msra.mxu0 %v2021
    %v2023 = vand.u32 %v1678, 4294901760
    %2024 = vmatpush.msra.mxu0 %v2023
    %v2025 = vand.u32 %v1677, 4294901760
    %2026 = vmatpush.msra.mxu0 %v2025
    %v2027 = vand.u32 %v1676, 4294901760
    %2028 = vmatpush.msra.mxu0 %v2027
    %v2029 = vand.u32 %v1675, 4294901760
    %2030 = vmatpush.msra.mxu0 %v2029
    %v2031 = vand.u32 %v1674, 4294901760
    %2032 = vmatmul.f32.gmra.mxu0 %v2031
    %v2033 = vpop.f32.mrf.mxu0
    %v2034 = vadd.f32 %v1997, %v2033
    %2035 = vdwg.mxu0
    %v2036 = vmax.f32 %v2034, 0.0
    %v2037 = vld [vmem:[%s16] sm:$0xff]
    %v2038 = vld [vmem:[%s16 + $0x8] sm:$0xff]
    %v2039 = vld [vmem:[%s16 + $0x10] sm:$0xff]
    %v2040 = vld [vmem:[%s16 + $0x18] sm:$0xff]
    %v2041 = vld [vmem:[%s16 + $0x20] sm:$0xff]
    %v2042 = vld [vmem:[%s16 + $0x28] sm:$0xff]
    %v2043 = vld [vmem:[%s16 + $0x30] sm:$0xff]
    %v2044 = vld [vmem:[%s16 + $0x38] sm:$0xff]
    %v2045 = vld [vmem:[%s16 + $0x40] sm:$0xff]
    %v2046 = vld [vmem:[%s16 + $0x48] sm:$0xff]
    %v2047 = vld [vmem:[%s16 + $0x50] sm:$0xff]
    %v2048 = vld [vmem:[%s16 + $0x58] sm:$0xff]
    %v2049 = vld [vmem:[%s16 + $0x60] sm:$0xff]
    %v2050 = vld [vmem:[%s16 + $0x68] sm:$0xff]
    %v2051 = vld [vmem:[%s16 + $0x70] sm:$0xff]
    %v2052 = vld [vmem:[%s16 + $0x78] sm:$0xff]
    %v2053 = vld [vmem:[%s17] sm:$0x1]
    %v2055 = vperm.slane %v2053, 0
    %v2057 = vand.u32 %v2052, 4294901760
    %2058 = vmatpush.msra.mxu0 %v2057
    %v2059 = vand.u32 %v2051, 4294901760
    %2060 = vmatpush.msra.mxu0 %v2059
    %v2061 = vand.u32 %v2050, 4294901760
    %2062 = vmatpush.msra.mxu0 %v2061
    %v2063 = vand.u32 %v2049, 4294901760
    %2064 = vmatpush.msra.mxu0 %v2063
    %v2065 = vand.u32 %v2048, 4294901760
    %2066 = vmatpush.msra.mxu0 %v2065
    %v2067 = vand.u32 %v2047, 4294901760
    %2068 = vmatpush.msra.mxu0 %v2067
    %v2069 = vand.u32 %v2046, 4294901760
    %2070 = vmatpush.msra.mxu0 %v2069
    %v2071 = vand.u32 %v2045, 4294901760
    %2072 = vmatpush.msra.mxu0 %v2071
    %v2073 = vand.u32 %v2044, 4294901760
    %2074 = vmatpush.msra.mxu0 %v2073
    %v2075 = vand.u32 %v2043, 4294901760
    %2076 = vmatpush.msra.mxu0 %v2075
    %v2077 = vand.u32 %v2042, 4294901760
    %2078 = vmatpush.msra.mxu0 %v2077
    %v2079 = vand.u32 %v2041, 4294901760
    %2080 = vmatpush.msra.mxu0 %v2079
    %v2081 = vand.u32 %v2040, 4294901760
    %2082 = vmatpush.msra.mxu0 %v2081
    %v2083 = vand.u32 %v2039, 4294901760
    %2084 = vmatpush.msra.mxu0 %v2083
    %v2085 = vand.u32 %v2038, 4294901760
    %2086 = vmatpush.msra.mxu0 %v2085
    %v2087 = vand.u32 %v2037, 4294901760
    %2088 = vmatpush.msra.mxu0 %v2087
    %v2089 = vand.u32 %v2036, 4294901760
    %v2090 = vsub.f32 %v2036, %v2089
    %v2091 = vand.u32 %v2090, 4294901760
    %v2092 = vsub.f32 %v2090, %v2091
    %v2093 = vand.u32 %v2092, 4294901760
    %2094 = vmatmul.f32.gmra.mxu0 %v2093
    %v2095 = vpop.f32.mrf.mxu0
    %v2096 = vadd.f32 %v2055, %v2095
    %2097 = vdwg.mxu0
    %v2098 = vand.u32 %v2052, 4294901760
    %v2099 = vsub.f32 %v2052, %v2098
    %v2100 = vand.u32 %v2099, 4294901760
    %v2101 = vsub.f32 %v2099, %v2100
    %v2102 = vand.u32 %v2101, 4294901760
    %2103 = vmatpush.msra.mxu0 %v2102
    %v2104 = vand.u32 %v2051, 4294901760
    %v2105 = vsub.f32 %v2051, %v2104
    %v2106 = vand.u32 %v2105, 4294901760
    %v2107 = vsub.f32 %v2105, %v2106
    %v2108 = vand.u32 %v2107, 4294901760
    %2109 = vmatpush.msra.mxu0 %v2108
    %v2110 = vand.u32 %v2050, 4294901760
    %v2111 = vsub.f32 %v2050, %v2110
    %v2112 = vand.u32 %v2111, 4294901760
    %v2113 = vsub.f32 %v2111, %v2112
    %v2114 = vand.u32 %v2113, 4294901760
    %2115 = vmatpush.msra.mxu0 %v2114
    %v2116 = vand.u32 %v2049, 4294901760
    %v2117 = vsub.f32 %v2049, %v2116
    %v2118 = vand.u32 %v2117, 4294901760
    %v2119 = vsub.f32 %v2117, %v2118
    %v2120 = vand.u32 %v2119, 4294901760
    %2121 = vmatpush.msra.mxu0 %v2120
    %v2122 = vand.u32 %v2048, 4294901760
    %v2123 = vsub.f32 %v2048, %v2122
    %v2124 = vand.u32 %v2123, 4294901760
    %v2125 = vsub.f32 %v2123, %v2124
    %v2126 = vand.u32 %v2125, 4294901760
    %2127 = vmatpush.msra.mxu0 %v2126
    %v2128 = vand.u32 %v2047, 4294901760
    %v2129 = vsub.f32 %v2047, %v2128
    %v2130 = vand.u32 %v2129, 4294901760
    %v2131 = vsub.f32 %v2129, %v2130
    %v2132 = vand.u32 %v2131, 4294901760
    %2133 = vmatpush.msra.mxu0 %v2132
    %v2134 = vand.u32 %v2046, 4294901760
    %v2135 = vsub.f32 %v2046, %v2134
    %v2136 = vand.u32 %v2135, 4294901760
    %v2137 = vsub.f32 %v2135, %v2136
    %v2138 = vand.u32 %v2137, 4294901760
    %2139 = vmatpush.msra.mxu0 %v2138
    %v2140 = vand.u32 %v2045, 4294901760
    %v2141 = vsub.f32 %v2045, %v2140
    %v2142 = vand.u32 %v2141, 4294901760
    %v2143 = vsub.f32 %v2141, %v2142
    %v2144 = vand.u32 %v2143, 4294901760
    %2145 = vmatpush.msra.mxu0 %v2144
    %v2146 = vand.u32 %v2044, 4294901760
    %v2147 = vsub.f32 %v2044, %v2146
    %v2148 = vand.u32 %v2147, 4294901760
    %v2149 = vsub.f32 %v2147, %v2148
    %v2150 = vand.u32 %v2149, 4294901760
    %2151 = vmatpush.msra.mxu0 %v2150
    %v2152 = vand.u32 %v2043, 4294901760
    %v2153 = vsub.f32 %v2043, %v2152
    %v2154 = vand.u32 %v2153, 4294901760
    %v2155 = vsub.f32 %v2153, %v2154
    %v2156 = vand.u32 %v2155, 4294901760
    %2157 = vmatpush.msra.mxu0 %v2156
    %v2158 = vand.u32 %v2042, 4294901760
    %v2159 = vsub.f32 %v2042, %v2158
    %v2160 = vand.u32 %v2159, 4294901760
    %v2161 = vsub.f32 %v2159, %v2160
    %v2162 = vand.u32 %v2161, 4294901760
    %2163 = vmatpush.msra.mxu0 %v2162
    %v2164 = vand.u32 %v2041, 4294901760
    %v2165 = vsub.f32 %v2041, %v2164
    %v2166 = vand.u32 %v2165, 4294901760
    %v2167 = vsub.f32 %v2165, %v2166
    %v2168 = vand.u32 %v2167, 4294901760
    %2169 = vmatpush.msra.mxu0 %v2168
    %v2170 = vand.u32 %v2040, 4294901760
    %v2171 = vsub.f32 %v2040, %v2170
    %v2172 = vand.u32 %v2171, 4294901760
    %v2173 = vsub.f32 %v2171, %v2172
    %v2174 = vand.u32 %v2173, 4294901760
    %2175 = vmatpush.msra.mxu0 %v2174
    %v2176 = vand.u32 %v2039, 4294901760
    %v2177 = vsub.f32 %v2039, %v2176
    %v2178 = vand.u32 %v2177, 4294901760
    %v2179 = vsub.f32 %v2177, %v2178
    %v2180 = vand.u32 %v2179, 4294901760
    %2181 = vmatpush.msra.mxu0 %v2180
    %v2182 = vand.u32 %v2038, 4294901760
    %v2183 = vsub.f32 %v2038, %v2182
    %v2184 = vand.u32 %v2183, 4294901760
    %v2185 = vsub.f32 %v2183, %v2184
    %v2186 = vand.u32 %v2185, 4294901760
    %2187 = vmatpush.msra.mxu0 %v2186
    %v2188 = vand.u32 %v2037, 4294901760
    %v2189 = vsub.f32 %v2037, %v2188
    %v2190 = vand.u32 %v2189, 4294901760
    %v2191 = vsub.f32 %v2189, %v2190
    %v2192 = vand.u32 %v2191, 4294901760
    %2193 = vmatpush.msra.mxu0 %v2192
    %v2194 = vand.u32 %v2036, 4294901760
    %2195 = vmatmul.f32.gmra.mxu0 %v2194
    %v2196 = vpop.f32.mrf.mxu0
    %v2197 = vadd.f32 %v2096, %v2196
    %2198 = vdwg.mxu0
    %v2199 = vand.u32 %v2052, 4294901760
    %v2200 = vsub.f32 %v2052, %v2199
    %2201 = vmatpush.msra.mxu0 %v2200
    %v2202 = vand.u32 %v2051, 4294901760
    %v2203 = vsub.f32 %v2051, %v2202
    %2204 = vmatpush.msra.mxu0 %v2203
    %v2205 = vand.u32 %v2050, 4294901760
    %v2206 = vsub.f32 %v2050, %v2205
    %2207 = vmatpush.msra.mxu0 %v2206
    %v2208 = vand.u32 %v2049, 4294901760
    %v2209 = vsub.f32 %v2049, %v2208
    %2210 = vmatpush.msra.mxu0 %v2209
    %v2211 = vand.u32 %v2048, 4294901760
    %v2212 = vsub.f32 %v2048, %v2211
    %2213 = vmatpush.msra.mxu0 %v2212
    %v2214 = vand.u32 %v2047, 4294901760
    %v2215 = vsub.f32 %v2047, %v2214
    %2216 = vmatpush.msra.mxu0 %v2215
    %v2217 = vand.u32 %v2046, 4294901760
    %v2218 = vsub.f32 %v2046, %v2217
    %2219 = vmatpush.msra.mxu0 %v2218
    %v2220 = vand.u32 %v2045, 4294901760
    %v2221 = vsub.f32 %v2045, %v2220
    %2222 = vmatpush.msra.mxu0 %v2221
    %v2223 = vand.u32 %v2044, 4294901760
    %v2224 = vsub.f32 %v2044, %v2223
    %2225 = vmatpush.msra.mxu0 %v2224
    %v2226 = vand.u32 %v2043, 4294901760
    %v2227 = vsub.f32 %v2043, %v2226
    %2228 = vmatpush.msra.mxu0 %v2227
    %v2229 = vand.u32 %v2042, 4294901760
    %v2230 = vsub.f32 %v2042, %v2229
    %2231 = vmatpush.msra.mxu0 %v2230
    %v2232 = vand.u32 %v2041, 4294901760
    %v2233 = vsub.f32 %v2041, %v2232
    %2234 = vmatpush.msra.mxu0 %v2233
    %v2235 = vand.u32 %v2040, 4294901760
    %v2236 = vsub.f32 %v2040, %v2235
    %2237 = vmatpush.msra.mxu0 %v2236
    %v2238 = vand.u32 %v2039, 4294901760
    %v2239 = vsub.f32 %v2039, %v2238
    %2240 = vmatpush.msra.mxu0 %v2239
    %v2241 = vand.u32 %v2038, 4294901760
    %v2242 = vsub.f32 %v2038, %v2241
    %2243 = vmatpush.msra.mxu0 %v2242
    %v2244 = vand.u32 %v2037, 4294901760
    %v2245 = vsub.f32 %v2037, %v2244
    %2246 = vmatpush.msra.mxu0 %v2245
    %v2247 = vand.u32 %v2036, 4294901760
    %v2248 = vsub.f32 %v2036, %v2247
    %2249 = vmatmul.f32.gmra.mxu0 %v2248
    %v2250 = vpop.f32.mrf.mxu0
    %v2251 = vadd.f32 %v2197, %v2250
    %2252 = vdwg.mxu0
    %v2253 = vand.u32 %v2052, 4294901760
    %2254 = vmatpush.msra.mxu0 %v2253
    %v2255 = vand.u32 %v2051, 4294901760
    %2256 = vmatpush.msra.mxu0 %v2255
    %v2257 = vand.u32 %v2050, 4294901760
    %2258 = vmatpush.msra.mxu0 %v2257
    %v2259 = vand.u32 %v2049, 4294901760
    %2260 = vmatpush.msra.mxu0 %v2259
    %v2261 = vand.u32 %v2048, 4294901760
    %2262 = vmatpush.msra.mxu0 %v2261
    %v2263 = vand.u32 %v2047, 4294901760
    %2264 = vmatpush.msra.mxu0 %v2263
    %v2265 = vand.u32 %v2046, 4294901760
    %2266 = vmatpush.msra.mxu0 %v2265
    %v2267 = vand.u32 %v2045, 4294901760
    %2268 = vmatpush.msra.mxu0 %v2267
    %v2269 = vand.u32 %v2044, 4294901760
    %2270 = vmatpush.msra.mxu0 %v2269
    %v2271 = vand.u32 %v2043, 4294901760
    %2272 = vmatpush.msra.mxu0 %v2271
    %v2273 = vand.u32 %v2042, 4294901760
    %2274 = vmatpush.msra.mxu0 %v2273
    %v2275 = vand.u32 %v2041, 4294901760
    %2276 = vmatpush.msra.mxu0 %v2275
    %v2277 = vand.u32 %v2040, 4294901760
    %2278 = vmatpush.msra.mxu0 %v2277
    %v2279 = vand.u32 %v2039, 4294901760
    %2280 = vmatpush.msra.mxu0 %v2279
    %v2281 = vand.u32 %v2038, 4294901760
    %2282 = vmatpush.msra.mxu0 %v2281
    %v2283 = vand.u32 %v2037, 4294901760
    %2284 = vmatpush.msra.mxu0 %v2283
    %v2285 = vand.u32 %v2036, 4294901760
    %v2286 = vsub.f32 %v2036, %v2285
    %v2287 = vand.u32 %v2286, 4294901760
    %2288 = vmatmul.f32.gmra.mxu0 %v2287
    %v2289 = vpop.f32.mrf.mxu0
    %v2290 = vadd.f32 %v2251, %v2289
    %2291 = vdwg.mxu0
    %v2292 = vand.u32 %v2052, 4294901760
    %v2293 = vsub.f32 %v2052, %v2292
    %v2294 = vand.u32 %v2293, 4294901760
    %2295 = vmatpush.msra.mxu0 %v2294
    %v2296 = vand.u32 %v2051, 4294901760
    %v2297 = vsub.f32 %v2051, %v2296
    %v2298 = vand.u32 %v2297, 4294901760
    %2299 = vmatpush.msra.mxu0 %v2298
    %v2300 = vand.u32 %v2050, 4294901760
    %v2301 = vsub.f32 %v2050, %v2300
    %v2302 = vand.u32 %v2301, 4294901760
    %2303 = vmatpush.msra.mxu0 %v2302
    %v2304 = vand.u32 %v2049, 4294901760
    %v2305 = vsub.f32 %v2049, %v2304
    %v2306 = vand.u32 %v2305, 4294901760
    %2307 = vmatpush.msra.mxu0 %v2306
    %v2308 = vand.u32 %v2048, 4294901760
    %v2309 = vsub.f32 %v2048, %v2308
    %v2310 = vand.u32 %v2309, 4294901760
    %2311 = vmatpush.msra.mxu0 %v2310
    %v2312 = vand.u32 %v2047, 4294901760
    %v2313 = vsub.f32 %v2047, %v2312
    %v2314 = vand.u32 %v2313, 4294901760
    %2315 = vmatpush.msra.mxu0 %v2314
    %v2316 = vand.u32 %v2046, 4294901760
    %v2317 = vsub.f32 %v2046, %v2316
    %v2318 = vand.u32 %v2317, 4294901760
    %2319 = vmatpush.msra.mxu0 %v2318
    %v2320 = vand.u32 %v2045, 4294901760
    %v2321 = vsub.f32 %v2045, %v2320
    %v2322 = vand.u32 %v2321, 4294901760
    %2323 = vmatpush.msra.mxu0 %v2322
    %v2324 = vand.u32 %v2044, 4294901760
    %v2325 = vsub.f32 %v2044, %v2324
    %v2326 = vand.u32 %v2325, 4294901760
    %2327 = vmatpush.msra.mxu0 %v2326
    %v2328 = vand.u32 %v2043, 4294901760
    %v2329 = vsub.f32 %v2043, %v2328
    %v2330 = vand.u32 %v2329, 4294901760
    %2331 = vmatpush.msra.mxu0 %v2330
    %v2332 = vand.u32 %v2042, 4294901760
    %v2333 = vsub.f32 %v2042, %v2332
    %v2334 = vand.u32 %v2333, 4294901760
    %2335 = vmatpush.msra.mxu0 %v2334
    %v2336 = vand.u32 %v2041, 4294901760
    %v2337 = vsub.f32 %v2041, %v2336
    %v2338 = vand.u32 %v2337, 4294901760
    %2339 = vmatpush.msra.mxu0 %v2338
    %v2340 = vand.u32 %v2040, 4294901760
    %v2341 = vsub.f32 %v2040, %v2340
    %v2342 = vand.u32 %v2341, 4294901760
    %2343 = vmatpush.msra.mxu0 %v2342
    %v2344 = vand.u32 %v2039, 4294901760
    %v2345 = vsub.f32 %v2039, %v2344
    %v2346 = vand.u32 %v2345, 4294901760
    %2347 = vmatpush.msra.mxu0 %v2346
    %v2348 = vand.u32 %v2038, 4294901760
    %v2349 = vsub.f32 %v2038, %v2348
    %v2350 = vand.u32 %v2349, 4294901760
    %2351 = vmatpush.msra.mxu0 %v2350
    %v2352 = vand.u32 %v2037, 4294901760
    %v2353 = vsub.f32 %v2037, %v2352
    %v2354 = vand.u32 %v2353, 4294901760
    %2355 = vmatpush.msra.mxu0 %v2354
    %v2356 = vand.u32 %v2036, 4294901760
    %2357 = vmatmul.f32.gmra.mxu0 %v2356
    %v2358 = vpop.f32.mrf.mxu0
    %v2359 = vadd.f32 %v2290, %v2358
    %2360 = vdwg.mxu0
    %v2361 = vand.u32 %v2052, 4294901760
    %2362 = vmatpush.msra.mxu0 %v2361
    %v2363 = vand.u32 %v2051, 4294901760
    %2364 = vmatpush.msra.mxu0 %v2363
    %v2365 = vand.u32 %v2050, 4294901760
    %2366 = vmatpush.msra.mxu0 %v2365
    %v2367 = vand.u32 %v2049, 4294901760
    %2368 = vmatpush.msra.mxu0 %v2367
    %v2369 = vand.u32 %v2048, 4294901760
    %2370 = vmatpush.msra.mxu0 %v2369
    %v2371 = vand.u32 %v2047, 4294901760
    %2372 = vmatpush.msra.mxu0 %v2371
    %v2373 = vand.u32 %v2046, 4294901760
    %2374 = vmatpush.msra.mxu0 %v2373
    %v2375 = vand.u32 %v2045, 4294901760
    %2376 = vmatpush.msra.mxu0 %v2375
    %v2377 = vand.u32 %v2044, 4294901760
    %2378 = vmatpush.msra.mxu0 %v2377
    %v2379 = vand.u32 %v2043, 4294901760
    %2380 = vmatpush.msra.mxu0 %v2379
    %v2381 = vand.u32 %v2042, 4294901760
    %2382 = vmatpush.msra.mxu0 %v2381
    %v2383 = vand.u32 %v2041, 4294901760
    %2384 = vmatpush.msra.mxu0 %v2383
    %v2385 = vand.u32 %v2040, 4294901760
    %2386 = vmatpush.msra.mxu0 %v2385
    %v2387 = vand.u32 %v2039, 4294901760
    %2388 = vmatpush.msra.mxu0 %v2387
    %v2389 = vand.u32 %v2038, 4294901760
    %2390 = vmatpush.msra.mxu0 %v2389
    %v2391 = vand.u32 %v2037, 4294901760
    %2392 = vmatpush.msra.mxu0 %v2391
    %v2393 = vand.u32 %v2036, 4294901760
    %2394 = vmatmul.f32.gmra.mxu0 %v2393
    %v2395 = vpop.f32.mrf.mxu0
    %v2396 = vadd.f32 %v2359, %v2395
    %2397 = vdwg.mxu0
    %v2398 = vadd.f32 %v2396, 1.0
    %v2399 = vmax.f32 %v2398, 0.05
    %v2400 = vmin.f32 %v2399, 1e+09
    %2401 = vst.msk [vmem:[#allocation14] sm:$0xff] %vm174, %v1282
    %2402 = vst.msk [vmem:[#allocation15] sm:$0xff] %vm174, %v2400
    // Predicated region
    $region102: #{tpu_custom_call.1} parent=1 // pred_check
      _
    $region103: #{tpu_custom_call.1} parent=1 // pred_check_branch
      %2404 = sbr.rel (0) target = $region105
    $region104: #{tpu_custom_call.1} parent=1 // pred_region
      %2406 = vsyncadd [#allocation4], 0
      %s2408 = sshll.u32 [#allocation14], 4
      %s2409 = int_to_ptr.vmem [resolvable:$true] %s2408
      %s2410 = sshll.u32 %s18, 4
      %s2411 = int_to_ptr.hbm [resolvable:$true] %s2410
      %2413 = dma.vmem_to_hbm [thread:$0]  %s2409, 128, %s2411, [#allocation4]
    $region105: #{tpu_custom_call.1} parent=1 // pred_fallthru
      _
    // Predicated region
    $region106: #{tpu_custom_call.1} parent=1 // pred_check
      _
    $region107: #{tpu_custom_call.1} parent=1 // pred_check_branch
      %2415 = sbr.rel (0) target = $region109
    $region108: #{tpu_custom_call.1} parent=1 // pred_region
      %2417 = vsyncadd [#allocation16], 0
      %s2419 = sshll.u32 [#allocation15], 4
      %s2420 = int_to_ptr.vmem [resolvable:$true] %s2419
      %s2421 = sshll.u32 %s19, 4
      %s2422 = int_to_ptr.hbm [resolvable:$true] %s2421
      %2424 = dma.vmem_to_hbm [thread:$0]  %s2420, 128, %s2422, [#allocation16]
    $region109: #{tpu_custom_call.1} parent=1 // pred_fallthru
      _
    // Predicated region
    $region110: #{tpu_custom_call.1} parent=1 // pred_check
      _
    $region111: #{tpu_custom_call.1} parent=1 // pred_check_branch
      %2426 = sbr.rel (0) target = $region113
    $region112: #{tpu_custom_call.1} parent=1 // pred_region
      %2428 = dma.done [#allocation4], 128
    $region113: #{tpu_custom_call.1} parent=1 // pred_fallthru
      _
    // Predicated region
    $region114: #{tpu_custom_call.1} parent=1 // pred_check
      _
    $region115: #{tpu_custom_call.1} parent=1 // pred_check_branch
      %2430 = sbr.rel (0) target = $region117
    $region116: #{tpu_custom_call.1} parent=1 // pred_region
      %2432 = dma.done [#allocation16], 128
    $region117: #{tpu_custom_call.1} parent=1 // pred_fallthru
      _
    %2433 = vsyncpa [#allocation3], 1
    %2434 = vsyncpa [#allocation6], 1
    %2435 = vsyncpa [#allocation9], 1
    %2436 = vsyncpa [#allocation12], 1
    %2437 = vsyncpa [#allocation4], 1
    %2438 = vsyncpa [#allocation16], 1

// kernel: tpu_custom_call.1
$region0: #{tpu_custom_call.1}
  #allocation0 [shape = 'u32[]', space=smem, size = 0x4, offset = 0x4, fixed_abs, tag = 'smem constant byte address 0x4 - core index']
  #allocation1 [shape = 'u32[72,128]{1,0:T(1,128)}', space=vmem, size = 0x9000, scoped, tag = 'internal scratch']
  %s0 = inlined_call_operand.hbm [shape: f32[8,32], index: 0, kind: input, shape index: {}]
  %s1 = inlined_call_operand.hbm [shape: f32[8,32], index: 1, kind: input, shape index: {}]
  %s2 = inlined_call_operand.hbm [shape: f32[8,32], index: 2, kind: input, shape index: {}]
  %s3 = inlined_call_operand.hbm [shape: f32[8,32], index: 3, kind: input, shape index: {}]
  %s4 = inlined_call_operand.vmem [shape: f32[32,128], index: 4, kind: input, shape index: {}]
  %s5 = inlined_call_operand.hbm [shape: f32[32,128], index: 5, kind: input, shape index: {}]
  %s6 = inlined_call_operand.vmem [shape: f32[1,128], index: 6, kind: input, shape index: {}]
  %s7 = inlined_call_operand.vmem [shape: f32[128,128], index: 7, kind: input, shape index: {}]
  %s8 = inlined_call_operand.vmem [shape: f32[1,128], index: 8, kind: input, shape index: {}]
  %s9 = inlined_call_operand.vmem [shape: f32[128,32], index: 9, kind: input, shape index: {}]
  %s10 = inlined_call_operand.vmem [shape: f32[1,32], index: 10, kind: input, shape index: {}]
  %s11 = inlined_call_operand.hbm [shape: f32[32,128], index: 11, kind: input, shape index: {}]
  %s12 = inlined_call_operand.hbm [shape: f32[32,128], index: 12, kind: input, shape index: {}]
  %s13 = inlined_call_operand.vmem [shape: f32[1,128], index: 13, kind: input, shape index: {}]
  %s14 = inlined_call_operand.vmem [shape: f32[128,128], index: 14, kind: input, shape index: {}]
  %s15 = inlined_call_operand.vmem [shape: f32[1,128], index: 15, kind: input, shape index: {}]
  %s16 = inlined_call_operand.vmem [shape: f32[128,32], index: 16, kind: input, shape index: {}]
  %s17 = inlined_call_operand.vmem [shape: f32[1,32], index: 17, kind: input, shape index: {}]
  %s18 = inlined_call_operand.hbm [shape: f32[8,32], index: 18, kind: output, shape index: {0}]
  %s19 = inlined_call_operand.hbm [shape: f32[8,32], index: 19, kind: output, shape index: {1}]
  %20 = xla_tuple %s18, %s19
  %s21 = sld [smem:[#allocation0]]
  $region118: #{tpu_custom_call.1} parent=0
    _
  %s23 = ssub.s32 1, %s21
  %s24 = scalar_select 0, %s23, %s21
  $region1: #{tpu_custom_call.1} parent=0
    #allocation2 [shape = 'u8[4096]{0}', space=vmem, size = 0x1000, scoped, tag = 'input window, operand 0, single buffered']
    #allocation3 [shape = 's32[1]{0}', space=sflag, size = 0x4, scoped, tag = 'scoped memory for tpu_custom_call.1']
    #allocation4 [shape = 's32[1]{0}', space=sflag, size = 0x4, scoped, tag = 'scoped memory for tpu_custom_call.1']
    #allocation5 [shape = 'u8[4096]{0}', space=vmem, size = 0x1000, scoped, tag = 'input window, operand 1, single buffered']
    #allocation6 [shape = 's32[1]{0}', space=sflag, size = 0x4, scoped, tag = 'scoped memory for tpu_custom_call.1']
    #allocation7 [shape = 'u8[4096]{0}', space=vmem, size = 0x1000, scoped, tag = 'input window, operand 2, single buffered']
    #allocation8 [shape = 'u8[4096]{0}', space=vmem, size = 0x1000, scoped, tag = 'input window, operand 3, single buffered']
    #allocation9 [shape = 's32[1]{0}', space=sflag, size = 0x4, scoped, tag = 'scoped memory for tpu_custom_call.1']
    #allocation10 [shape = 'u8[16384]{0}', space=vmem, size = 0x4000, scoped, tag = 'input window, operand 5, single buffered']
    #allocation11 [shape = 'u8[16384]{0}', space=vmem, size = 0x4000, scoped, tag = 'input window, operand 11, single buffered']
    #allocation12 [shape = 's32[1]{0}', space=sflag, size = 0x4, scoped, tag = 'scoped memory for tpu_custom_call.1']
    #allocation13 [shape = 'u8[16384]{0}', space=vmem, size = 0x4000, scoped, tag = 'input window, operand 12, single buffered']
    #allocation14 [shape = 'u8[4096]{0}', space=vmem, size = 0x1000, scoped, tag = 'output window, operand 0, single buffered']
    #allocation15 [shape = 'u8[4096]{0}', space=vmem, size = 0x1000, scoped, tag = 'output window, operand 1, single buffered']
    #allocation16 [shape = 's32[1]{0}', space=sflag, size = 0x4, scoped, tag = 'scoped memory for tpu_custom_call.1']
    %25 = vsyncpa [#allocation3], 0
    %26 = vsyncpa [#allocation6], 0
    %27 = vsyncpa [#allocation9], 0
    %28 = vsyncpa [#allocation12], 0
    %29 = vsyncpa [#allocation4], 0
    %30 = vsyncpa [#allocation16], 0
    // Predicated region
    $region2: #{tpu_custom_call.1} parent=1 // pred_check
      _
    $region3: #{tpu_custom_call.1} parent=1 // pred_check_branch
      %32 = sbr.rel (0) target = $region5
    $region4: #{tpu_custom_call.1} parent=1 // pred_region
      %34 = vsyncadd [#allocation3], 0
      %s36 = sshll.u32 %s0, 4
      %s37 = int_to_ptr.hbm [resolvable:$true] %s36
      %s38 = sshll.u32 [#allocation2], 4
      %s39 = int_to_ptr.vmem [resolvable:$true] %s38
      %41 = dma.hbm_to_vmem [thread:$0]  %s37, 128, %s39, [#allocation3]
    $region5: #{tpu_custom_call.1} parent=1 // pred_fallthru
      _
    // Predicated region
    $region6: #{tpu_custom_call.1} parent=1 // pred_check
      _
    $region7: #{tpu_custom_call.1} parent=1 // pred_check_branch
      %43 = sbr.rel (0) target = $region9
    $region8: #{tpu_custom_call.1} parent=1 // pred_region
      %45 = vsyncadd [#allocation6], 0
      %s47 = sshll.u32 %s1, 4
      %s48 = int_to_ptr.hbm [resolvable:$true] %s47
      %s49 = sshll.u32 [#allocation5], 4
      %s50 = int_to_ptr.vmem [resolvable:$true] %s49
      %52 = dma.hbm_to_vmem [thread:$0]  %s48, 128, %s50, [#allocation6]
    $region9: #{tpu_custom_call.1} parent=1 // pred_fallthru
      _
    // Predicated region
    $region10: #{tpu_custom_call.1} parent=1 // pred_check
      _
    $region11: #{tpu_custom_call.1} parent=1 // pred_check_branch
      %54 = sbr.rel (0) target = $region13
    $region12: #{tpu_custom_call.1} parent=1 // pred_region
      %56 = vsyncadd [#allocation6], 0
      %s58 = sshll.u32 %s2, 4
      %s59 = int_to_ptr.hbm [resolvable:$true] %s58
      %s60 = sshll.u32 [#allocation7], 4
      %s61 = int_to_ptr.vmem [resolvable:$true] %s60
      %63 = dma.hbm_to_vmem [thread:$0]  %s59, 128, %s61, [#allocation6]
    $region13: #{tpu_custom_call.1} parent=1 // pred_fallthru
      _
    // Predicated region
    $region14: #{tpu_custom_call.1} parent=1 // pred_check
      _
    $region15: #{tpu_custom_call.1} parent=1 // pred_check_branch
      %65 = sbr.rel (0) target = $region17
    $region16: #{tpu_custom_call.1} parent=1 // pred_region
      %67 = vsyncadd [#allocation9], 0
      %s69 = sshll.u32 %s3, 4
      %s70 = int_to_ptr.hbm [resolvable:$true] %s69
      %s71 = sshll.u32 [#allocation8], 4
      %s72 = int_to_ptr.vmem [resolvable:$true] %s71
      %74 = dma.hbm_to_vmem [thread:$0]  %s70, 128, %s72, [#allocation9]
    $region17: #{tpu_custom_call.1} parent=1 // pred_fallthru
      _
    // Predicated region
    $region18: #{tpu_custom_call.1} parent=1 // pred_check
      _
    $region19: #{tpu_custom_call.1} parent=1 // pred_check_branch
      %76 = sbr.rel (0) target = $region21
    $region20: #{tpu_custom_call.1} parent=1 // pred_region
      _
    $region21: #{tpu_custom_call.1} parent=1 // pred_fallthru
      _
    // Predicated region
    $region22: #{tpu_custom_call.1} parent=1 // pred_check
      _
    $region23: #{tpu_custom_call.1} parent=1 // pred_check_branch
      %78 = sbr.rel (0) target = $region25
    $region24: #{tpu_custom_call.1} parent=1 // pred_region
      %80 = vsyncadd [#allocation9], 0
      %s81 = sshll.u32 %s5, 4
      %s82 = int_to_ptr.hbm [resolvable:$true] %s81
      %s83 = sshll.u32 [#allocation10], 4
      %s84 = int_to_ptr.vmem [resolvable:$true] %s83
      %89 = dma.hbm_to_vmem [thread:$0]  %s82, 512, %s84, [#allocation9], 128, 128, 8
    $region25: #{tpu_custom_call.1} parent=1 // pred_fallthru
      _
    // Predicated region
    $region26: #{tpu_custom_call.1} parent=1 // pred_check
      _
    $region27: #{tpu_custom_call.1} parent=1 // pred_check_branch
      %91 = sbr.rel (0) target = $region29
    $region28: #{tpu_custom_call.1} parent=1 // pred_region
      _
    $region29: #{tpu_custom_call.1} parent=1 // pred_fallthru
      _
    // Predicated region
    $region30: #{tpu_custom_call.1} parent=1 // pred_check
      _
    $region31: #{tpu_custom_call.1} parent=1 // pred_check_branch
      %93 = sbr.rel (0) target = $region33
    $region32: #{tpu_custom_call.1} parent=1 // pred_region
      _
    $region33: #{tpu_custom_call.1} parent=1 // pred_fallthru
      _
    // Predicated region
    $region34: #{tpu_custom_call.1} parent=1 // pred_check
      _
    $region35: #{tpu_custom_call.1} parent=1 // pred_check_branch
      %95 = sbr.rel (0) target = $region37
    $region36: #{tpu_custom_call.1} parent=1 // pred_region
      _
    $region37: #{tpu_custom_call.1} parent=1 // pred_fallthru
      _
    // Predicated region
    $region38: #{tpu_custom_call.1} parent=1 // pred_check
      _
    $region39: #{tpu_custom_call.1} parent=1 // pred_check_branch
      %97 = sbr.rel (0) target = $region41
    $region40: #{tpu_custom_call.1} parent=1 // pred_region
      _
    $region41: #{tpu_custom_call.1} parent=1 // pred_fallthru
      _
    // Predicated region
    $region42: #{tpu_custom_call.1} parent=1 // pred_check
      _
    $region43: #{tpu_custom_call.1} parent=1 // pred_check_branch
      %99 = sbr.rel (0) target = $region45
    $region44: #{tpu_custom_call.1} parent=1 // pred_region
      _
    $region45: #{tpu_custom_call.1} parent=1 // pred_fallthru
      _
    // Predicated region
    $region46: #{tpu_custom_call.1} parent=1 // pred_check
      _
    $region47: #{tpu_custom_call.1} parent=1 // pred_check_branch
      %101 = sbr.rel (0) target = $region49
    $region48: #{tpu_custom_call.1} parent=1 // pred_region
      %103 = vsyncadd [#allocation12], 0
      %s104 = sshll.u32 %s11, 4
      %s105 = int_to_ptr.hbm [resolvable:$true] %s104
      %s106 = sshll.u32 [#allocation11], 4
      %s107 = int_to_ptr.vmem [resolvable:$true] %s106
      %112 = dma.hbm_to_vmem [thread:$0]  %s105, 512, %s107, [#allocation12], 128, 128, 8
    $region49: #{tpu_custom_call.1} parent=1 // pred_fallthru
      _
    // Predicated region
    $region50: #{tpu_custom_call.1} parent=1 // pred_check
      _
    $region51: #{tpu_custom_call.1} parent=1 // pred_check_branch
      %114 = sbr.rel (0) target = $region53
    $region52: #{tpu_custom_call.1} parent=1 // pred_region
      %116 = vsyncadd [#allocation12], 0
      %s117 = sshll.u32 %s12, 4
      %s118 = int_to_ptr.hbm [resolvable:$true] %s117
      %s119 = sshll.u32 [#allocation13], 4
      %s120 = int_to_ptr.vmem [resolvable:$true] %s119
      %125 = dma.hbm_to_vmem [thread:$0]  %s118, 512, %s120, [#allocation12], 128, 128, 8
    $region53: #{tpu_custom_call.1} parent=1 // pred_fallthru
      _
    // Predicated region
    $region54: #{tpu_custom_call.1} parent=1 // pred_check
      _
    $region55: #{tpu_custom_call.1} parent=1 // pred_check_branch
      %127 = sbr.rel (0) target = $region57
    $region56: #{tpu_custom_call.1} parent=1 // pred_region
      _
    $region57: #{tpu_custom_call.1} parent=1 // pred_fallthru
      _
    // Predicated region
    $region58: #{tpu_custom_call.1} parent=1 // pred_check
      _
    $region59: #{tpu_custom_call.1} parent=1 // pred_check_branch
      %129 = sbr.rel (0) target = $region61
    $region60: #{tpu_custom_call.1} parent=1 // pred_region
      _
    $region61: #{tpu_custom_call.1} parent=1 // pred_fallthru
      _
    // Predicated region
    $region62: #{tpu_custom_call.1} parent=1 // pred_check
      _
    $region63: #{tpu_custom_call.1} parent=1 // pred_check_branch
      %131 = sbr.rel (0) target = $region65
    $region64: #{tpu_custom_call.1} parent=1 // pred_region
      _
    $region65: #{tpu_custom_call.1} parent=1 // pred_fallthru
      _
    // Predicated region
    $region66: #{tpu_custom_call.1} parent=1 // pred_check
      _
    $region67: #{tpu_custom_call.1} parent=1 // pred_check_branch
      %133 = sbr.rel (0) target = $region69
    $region68: #{tpu_custom_call.1} parent=1 // pred_region
      _
    $region69: #{tpu_custom_call.1} parent=1 // pred_fallthru
      _
    // Predicated region
    $region70: #{tpu_custom_call.1} parent=1 // pred_check
      _
    $region71: #{tpu_custom_call.1} parent=1 // pred_check_branch
      %135 = sbr.rel (0) target = $region73
    $region72: #{tpu_custom_call.1} parent=1 // pred_region
      _
    $region73: #{tpu_custom_call.1} parent=1 // pred_fallthru
      _
    // Predicated region
    $region74: #{tpu_custom_call.1} parent=1 // pred_check
      _
    $region75: #{tpu_custom_call.1} parent=1 // pred_check_branch
      %137 = sbr.rel (0) target = $region77
    $region76: #{tpu_custom_call.1} parent=1 // pred_region
      %139 = dma.done [#allocation3], 128
    $region77: #{tpu_custom_call.1} parent=1 // pred_fallthru
      _
    // Predicated region
    $region78: #{tpu_custom_call.1} parent=1 // pred_check
      _
    $region79: #{tpu_custom_call.1} parent=1 // pred_check_branch
      %141 = sbr.rel (0) target = $region81
    $region80: #{tpu_custom_call.1} parent=1 // pred_region
      %143 = dma.done [#allocation6], 128
    $region81: #{tpu_custom_call.1} parent=1 // pred_fallthru
      _
    // Predicated region
    $region82: #{tpu_custom_call.1} parent=1 // pred_check
      _
    $region83: #{tpu_custom_call.1} parent=1 // pred_check_branch
      %145 = sbr.rel (0) target = $region85
    $region84: #{tpu_custom_call.1} parent=1 // pred_region
      %147 = dma.done [#allocation6], 128
    $region85: #{tpu_custom_call.1} parent=1 // pred_fallthru
      _
    // Predicated region
    $region86: #{tpu_custom_call.1} parent=1 // pred_check
      _
    $region87: #{tpu_custom_call.1} parent=1 // pred_check_branch
      %149 = sbr.rel (0) target = $region89
    $region88: #{tpu_custom_call.1} parent=1 // pred_region
      %151 = dma.done [#allocation9], 128
    $region89: #{tpu_custom_call.1} parent=1 // pred_fallthru
      _
    // Predicated region
    $region90: #{tpu_custom_call.1} parent=1 // pred_check
      _
    $region91: #{tpu_custom_call.1} parent=1 // pred_check_branch
      %153 = sbr.rel (0) target = $region93
    $region92: #{tpu_custom_call.1} parent=1 // pred_region
      %155 = dma.done [#allocation9], 512
    $region93: #{tpu_custom_call.1} parent=1 // pred_fallthru
      _
    // Predicated region
    $region94: #{tpu_custom_call.1} parent=1 // pred_check
      _
    $region95: #{tpu_custom_call.1} parent=1 // pred_check_branch
      %157 = sbr.rel (0) target = $region97
    $region96: #{tpu_custom_call.1} parent=1 // pred_region
      %159 = dma.done [#allocation12], 512
    $region97: #{tpu_custom_call.1} parent=1 // pred_fallthru
      _
    // Predicated region
    $region98: #{tpu_custom_call.1} parent=1 // pred_check
      _
    $region99: #{tpu_custom_call.1} parent=1 // pred_check_branch
      %161 = sbr.rel (0) target = $region101
    $region100: #{tpu_custom_call.1} parent=1 // pred_region
      %163 = dma.done [#allocation12], 512
    $region101: #{tpu_custom_call.1} parent=1 // pred_fallthru
      _
    %v164 = vld [vmem:[#allocation2] sm:$0xff]
    %v165 = vld [vmem:[#allocation5] sm:$0xff]
    %v166 = vld [vmem:[%s4] sm:$0xff]
    %v167 = vld [vmem:[%s4 + $0x8] sm:$0xff]
    %v168 = vld [vmem:[%s4 + $0x10] sm:$0xff]
    %v169 = vld [vmem:[%s4 + $0x18] sm:$0xff]
    %v170 = vld [vmem:[#allocation10] sm:$0xff]
    %v171 = vld [vmem:[#allocation10 + $0x8] sm:$0xff]
    %v172 = vld [vmem:[#allocation10 + $0x10] sm:$0xff]
    %v173 = vld [vmem:[#allocation10 + $0x18] sm:$0xff]
    %vm174 = vcmask 261120
    %v176 = vsel %vm174, %v165, 0
    %178 = vmatpush.msra.mxu0 0.0
    %179 = vmatpush.msra.mxu0 0.0
    %180 = vmatpush.msra.mxu0 0.0
    %181 = vmatpush.msra.mxu0 0.0
    %182 = vmatpush.msra.mxu0 0.0
    %183 = vmatpush.msra.mxu0 0.0
    %184 = vmatpush.msra.mxu0 0.0
    %185 = vmatpush.msra.mxu0 0.0
    %186 = vmatpush.msra.mxu0 0.0
    %187 = vmatpush.msra.mxu0 0.0
    %188 = vmatpush.msra.mxu0 0.0
    %189 = vmatpush.msra.mxu0 0.0
    %v190 = vand.u32 %v173, 4294901760
    %191 = vmatpush.msra.mxu0 %v190
    %v192 = vand.u32 %v172, 4294901760
    %193 = vmatpush.msra.mxu0 %v192
    %v194 = vand.u32 %v171, 4294901760
    %195 = vmatpush.msra.mxu0 %v194
    %v196 = vand.u32 %v170, 4294901760
    %197 = vmatpush.msra.mxu0 %v196
    %v198 = vand.u32 %v176, 4294901760
    %v199 = vsub.f32 %v176, %v198
    %v200 = vand.u32 %v199, 4294901760
    %v201 = vsub.f32 %v199, %v200
    %v202 = vand.u32 %v201, 4294901760
    %203 = vmatmul.f32.gmra.mxu0 %v202
    %v204 = vpop.f32.mrf.mxu0
    %v205 = vadd.f32 0.0, %v204
    %206 = vdwg.mxu0
    %207 = vmatpush.msra.mxu0 0.0
    %208 = vmatpush.msra.mxu0 0.0
    %209 = vmatpush.msra.mxu0 0.0
    %210 = vmatpush.msra.mxu0 0.0
    %211 = vmatpush.msra.mxu0 0.0
    %212 = vmatpush.msra.mxu0 0.0
    %213 = vmatpush.msra.mxu0 0.0
    %214 = vmatpush.msra.mxu0 0.0
    %215 = vmatpush.msra.mxu0 0.0
    %216 = vmatpush.msra.mxu0 0.0
    %217 = vmatpush.msra.mxu0 0.0
    %218 = vmatpush.msra.mxu0 0.0
    %v219 = vand.u32 %v173, 4294901760
    %v220 = vsub.f32 %v173, %v219
    %v221 = vand.u32 %v220, 4294901760
    %v222 = vsub.f32 %v220, %v221
    %v223 = vand.u32 %v222, 4294901760
    %224 = vmatpush.msra.mxu0 %v223
    %v225 = vand.u32 %v172, 4294901760
    %v226 = vsub.f32 %v172, %v225
    %v227 = vand.u32 %v226, 4294901760
    %v228 = vsub.f32 %v226, %v227
    %v229 = vand.u32 %v228, 4294901760
    %230 = vmatpush.msra.mxu0 %v229
    %v231 = vand.u32 %v171, 4294901760
    %v232 = vsub.f32 %v171, %v231
    %v233 = vand.u32 %v232, 4294901760
    %v234 = vsub.f32 %v232, %v233
    %v235 = vand.u32 %v234, 4294901760
    %236 = vmatpush.msra.mxu0 %v235
    %v237 = vand.u32 %v170, 4294901760
    %v238 = vsub.f32 %v170, %v237
    %v239 = vand.u32 %v238, 4294901760
    %v240 = vsub.f32 %v238, %v239
    %v241 = vand.u32 %v240, 4294901760
    %242 = vmatpush.msra.mxu0 %v241
    %v243 = vand.u32 %v176, 4294901760
    %244 = vmatmul.f32.gmra.mxu0 %v243
    %v245 = vpop.f32.mrf.mxu0
    %v246 = vadd.f32 %v205, %v245
    %247 = vdwg.mxu0
    %248 = vmatpush.msra.mxu0 0.0
    %249 = vmatpush.msra.mxu0 0.0
    %250 = vmatpush.msra.mxu0 0.0
    %251 = vmatpush.msra.mxu0 0.0
    %252 = vmatpush.msra.mxu0 0.0
    %253 = vmatpush.msra.mxu0 0.0
    %254 = vmatpush.msra.mxu0 0.0
    %255 = vmatpush.msra.mxu0 0.0
    %256 = vmatpush.msra.mxu0 0.0
    %257 = vmatpush.msra.mxu0 0.0
    %258 = vmatpush.msra.mxu0 0.0
    %259 = vmatpush.msra.mxu0 0.0
    %v260 = vand.u32 %v173, 4294901760
    %v261 = vsub.f32 %v173, %v260
    %262 = vmatpush.msra.mxu0 %v261
    %v263 = vand.u32 %v172, 4294901760
    %v264 = vsub.f32 %v172, %v263
    %265 = vmatpush.msra.mxu0 %v264
    %v266 = vand.u32 %v171, 4294901760
    %v267 = vsub.f32 %v171, %v266
    %268 = vmatpush.msra.mxu0 %v267
    %v269 = vand.u32 %v170, 4294901760
    %v270 = vsub.f32 %v170, %v269
    %271 = vmatpush.msra.mxu0 %v270
    %v272 = vand.u32 %v176, 4294901760
    %v273 = vsub.f32 %v176, %v272
    %274 = vmatmul.f32.gmra.mxu0 %v273
    %v275 = vpop.f32.mrf.mxu0
    %v276 = vadd.f32 %v246, %v275
    %277 = vdwg.mxu0
    %278 = vmatpush.msra.mxu0 0.0
    %279 = vmatpush.msra.mxu0 0.0
    %280 = vmatpush.msra.mxu0 0.0
    %281 = vmatpush.msra.mxu0 0.0
    %282 = vmatpush.msra.mxu0 0.0
    %283 = vmatpush.msra.mxu0 0.0
    %284 = vmatpush.msra.mxu0 0.0
    %285 = vmatpush.msra.mxu0 0.0
    %286 = vmatpush.msra.mxu0 0.0
    %287 = vmatpush.msra.mxu0 0.0
    %288 = vmatpush.msra.mxu0 0.0
    %289 = vmatpush.msra.mxu0 0.0
    %v290 = vand.u32 %v173, 4294901760
    %291 = vmatpush.msra.mxu0 %v290
    %v292 = vand.u32 %v172, 4294901760
    %293 = vmatpush.msra.mxu0 %v292
    %v294 = vand.u32 %v171, 4294901760
    %295 = vmatpush.msra.mxu0 %v294
    %v296 = vand.u32 %v170, 4294901760
    %297 = vmatpush.msra.mxu0 %v296
    %v298 = vand.u32 %v176, 4294901760
    %v299 = vsub.f32 %v176, %v298
    %v300 = vand.u32 %v299, 4294901760
    %301 = vmatmul.f32.gmra.mxu0 %v300
    %v302 = vpop.f32.mrf.mxu0
    %v303 = vadd.f32 %v276, %v302
    %304 = vdwg.mxu0
    %305 = vmatpush.msra.mxu0 0.0
    %306 = vmatpush.msra.mxu0 0.0
    %307 = vmatpush.msra.mxu0 0.0
    %308 = vmatpush.msra.mxu0 0.0
    %309 = vmatpush.msra.mxu0 0.0
    %310 = vmatpush.msra.mxu0 0.0
    %311 = vmatpush.msra.mxu0 0.0
    %312 = vmatpush.msra.mxu0 0.0
    %313 = vmatpush.msra.mxu0 0.0
    %314 = vmatpush.msra.mxu0 0.0
    %315 = vmatpush.msra.mxu0 0.0
    %316 = vmatpush.msra.mxu0 0.0
    %v317 = vand.u32 %v173, 4294901760
    %v318 = vsub.f32 %v173, %v317
    %v319 = vand.u32 %v318, 4294901760
    %320 = vmatpush.msra.mxu0 %v319
    %v321 = vand.u32 %v172, 4294901760
    %v322 = vsub.f32 %v172, %v321
    %v323 = vand.u32 %v322, 4294901760
    %324 = vmatpush.msra.mxu0 %v323
    %v325 = vand.u32 %v171, 4294901760
    %v326 = vsub.f32 %v171, %v325
    %v327 = vand.u32 %v326, 4294901760
    %328 = vmatpush.msra.mxu0 %v327
    %v329 = vand.u32 %v170, 4294901760
    %v330 = vsub.f32 %v170, %v329
    %v331 = vand.u32 %v330, 4294901760
    %332 = vmatpush.msra.mxu0 %v331
    %v333 = vand.u32 %v176, 4294901760
    %334 = vmatmul.f32.gmra.mxu0 %v333
    %v335 = vpop.f32.mrf.mxu0
    %v336 = vadd.f32 %v303, %v335
    %337 = vdwg.mxu0
    %338 = vmatpush.msra.mxu0 0.0
    %339 = vmatpush.msra.mxu0 0.0
    %340 = vmatpush.msra.mxu0 0.0
    %341 = vmatpush.msra.mxu0 0.0
    %342 = vmatpush.msra.mxu0 0.0
    %343 = vmatpush.msra.mxu0 0.0
    %344 = vmatpush.msra.mxu0 0.0
    %345 = vmatpush.msra.mxu0 0.0
    %346 = vmatpush.msra.mxu0 0.0
    %347 = vmatpush.msra.mxu0 0.0
    %348 = vmatpush.msra.mxu0 0.0
    %349 = vmatpush.msra.mxu0 0.0
    %v350 = vand.u32 %v173, 4294901760
    %351 = vmatpush.msra.mxu0 %v350
    %v352 = vand.u32 %v172, 4294901760
    %353 = vmatpush.msra.mxu0 %v352
    %v354 = vand.u32 %v171, 4294901760
    %355 = vmatpush.msra.mxu0 %v354
    %v356 = vand.u32 %v170, 4294901760
    %357 = vmatpush.msra.mxu0 %v356
    %v358 = vand.u32 %v176, 4294901760
    %359 = vmatmul.f32.gmra.mxu0 %v358
    %v360 = vpop.f32.mrf.mxu0
    %v361 = vadd.f32 %v336, %v360
    %362 = vdwg.mxu0
    %v364 = vsel %vm174, %v164, 0
    %366 = vmatpush.msra.mxu0 0.0
    %367 = vmatpush.msra.mxu0 0.0
    %368 = vmatpush.msra.mxu0 0.0
    %369 = vmatpush.msra.mxu0 0.0
    %370 = vmatpush.msra.mxu0 0.0
    %371 = vmatpush.msra.mxu0 0.0
    %372 = vmatpush.msra.mxu0 0.0
    %373 = vmatpush.msra.mxu0 0.0
    %374 = vmatpush.msra.mxu0 0.0
    %375 = vmatpush.msra.mxu0 0.0
    %376 = vmatpush.msra.mxu0 0.0
    %377 = vmatpush.msra.mxu0 0.0
    %v378 = vand.u32 %v169, 4294901760
    %379 = vmatpush.msra.mxu0 %v378
    %v380 = vand.u32 %v168, 4294901760
    %381 = vmatpush.msra.mxu0 %v380
    %v382 = vand.u32 %v167, 4294901760
    %383 = vmatpush.msra.mxu0 %v382
    %v384 = vand.u32 %v166, 4294901760
    %385 = vmatpush.msra.mxu0 %v384
    %v386 = vand.u32 %v364, 4294901760
    %v387 = vsub.f32 %v364, %v386
    %v388 = vand.u32 %v387, 4294901760
    %v389 = vsub.f32 %v387, %v388
    %v390 = vand.u32 %v389, 4294901760
    %391 = vmatmul.f32.gmra.mxu0 %v390
    %v392 = vpop.f32.mrf.mxu0
    %v393 = vadd.f32 %v361, %v392
    %394 = vdwg.mxu0
    %395 = vmatpush.msra.mxu0 0.0
    %396 = vmatpush.msra.mxu0 0.0
    %397 = vmatpush.msra.mxu0 0.0
    %398 = vmatpush.msra.mxu0 0.0
    %399 = vmatpush.msra.mxu0 0.0
    %400 = vmatpush.msra.mxu0 0.0
    %401 = vmatpush.msra.mxu0 0.0
    %402 = vmatpush.msra.mxu0 0.0
    %403 = vmatpush.msra.mxu0 0.0
    %404 = vmatpush.msra.mxu0 0.0
    %405 = vmatpush.msra.mxu0 0.0
    %406 = vmatpush.msra.mxu0 0.0
    %v407 = vand.u32 %v169, 4294901760
    %v408 = vsub.f32 %v169, %v407
    %v409 = vand.u32 %v408, 4294901760
    %v410 = vsub.f32 %v408, %v409
    %v411 = vand.u32 %v410, 4294901760
    %412 = vmatpush.msra.mxu0 %v411
    %v413 = vand.u32 %v168, 4294901760
    %v414 = vsub.f32 %v168, %v413
    %v415 = vand.u32 %v414, 4294901760
    %v416 = vsub.f32 %v414, %v415
    %v417 = vand.u32 %v416, 4294901760
    %418 = vmatpush.msra.mxu0 %v417
    %v419 = vand.u32 %v167, 4294901760
    %v420 = vsub.f32 %v167, %v419
    %v421 = vand.u32 %v420, 4294901760
    %v422 = vsub.f32 %v420, %v421
    %v423 = vand.u32 %v422, 4294901760
    %424 = vmatpush.msra.mxu0 %v423
    %v425 = vand.u32 %v166, 4294901760
    %v426 = vsub.f32 %v166, %v425
    %v427 = vand.u32 %v426, 4294901760
    %v428 = vsub.f32 %v426, %v427
    %v429 = vand.u32 %v428, 4294901760
    %430 = vmatpush.msra.mxu0 %v429
    %v431 = vand.u32 %v364, 4294901760
    %432 = vmatmul.f32.gmra.mxu0 %v431
    %v433 = vpop.f32.mrf.mxu0
    %v434 = vadd.f32 %v393, %v433
    %435 = vdwg.mxu0
    %436 = vmatpush.msra.mxu0 0.0
    %437 = vmatpush.msra.mxu0 0.0
    %438 = vmatpush.msra.mxu0 0.0
    %439 = vmatpush.msra.mxu0 0.0
    %440 = vmatpush.msra.mxu0 0.0
    %441 = vmatpush.msra.mxu0 0.0
    %442 = vmatpush.msra.mxu0 0.0
    %443 = vmatpush.msra.mxu0 0.0
    %444 = vmatpush.msra.mxu0 0.0
    %445 = vmatpush.msra.mxu0 0.0
    %446 = vmatpush.msra.mxu0 0.0
    %447 = vmatpush.msra.mxu0 0.0
    %v448 = vand.u32 %v169, 4294901760
    %v449 = vsub.f32 %v169, %v448
    %450 = vmatpush.msra.mxu0 %v449
    %v451 = vand.u32 %v168, 4294901760
    %v452 = vsub.f32 %v168, %v451
    %453 = vmatpush.msra.mxu0 %v452
    %v454 = vand.u32 %v167, 4294901760
    %v455 = vsub.f32 %v167, %v454
    %456 = vmatpush.msra.mxu0 %v455
    %v457 = vand.u32 %v166, 4294901760
    %v458 = vsub.f32 %v166, %v457
    %459 = vmatpush.msra.mxu0 %v458
    %v460 = vand.u32 %v364, 4294901760
    %v461 = vsub.f32 %v364, %v460
    %462 = vmatmul.f32.gmra.mxu0 %v461
    %v463 = vpop.f32.mrf.mxu0
    %v464 = vadd.f32 %v434, %v463
    %465 = vdwg.mxu0
    %466 = vmatpush.msra.mxu0 0.0
    %467 = vmatpush.msra.mxu0 0.0
    %468 = vmatpush.msra.mxu0 0.0
    %469 = vmatpush.msra.mxu0 0.0
    %470 = vmatpush.msra.mxu0 0.0
    %471 = vmatpush.msra.mxu0 0.0
    %472 = vmatpush.msra.mxu0 0.0
    %473 = vmatpush.msra.mxu0 0.0
    %474 = vmatpush.msra.mxu0 0.0
    %475 = vmatpush.msra.mxu0 0.0
    %476 = vmatpush.msra.mxu0 0.0
    %477 = vmatpush.msra.mxu0 0.0
    %v478 = vand.u32 %v169, 4294901760
    %479 = vmatpush.msra.mxu0 %v478
    %v480 = vand.u32 %v168, 4294901760
    %481 = vmatpush.msra.mxu0 %v480
    %v482 = vand.u32 %v167, 4294901760
    %483 = vmatpush.msra.mxu0 %v482
    %v484 = vand.u32 %v166, 4294901760
    %485 = vmatpush.msra.mxu0 %v484
    %v486 = vand.u32 %v364, 4294901760
    %v487 = vsub.f32 %v364, %v486
    %v488 = vand.u32 %v487, 4294901760
    %489 = vmatmul.f32.gmra.mxu0 %v488
    %v490 = vpop.f32.mrf.mxu0
    %v491 = vadd.f32 %v464, %v490
    %492 = vdwg.mxu0
    %493 = vmatpush.msra.mxu0 0.0
    %494 = vmatpush.msra.mxu0 0.0
    %495 = vmatpush.msra.mxu0 0.0
    %496 = vmatpush.msra.mxu0 0.0
    %497 = vmatpush.msra.mxu0 0.0
    %498 = vmatpush.msra.mxu0 0.0
    %499 = vmatpush.msra.mxu0 0.0
    %500 = vmatpush.msra.mxu0 0.0
    %501 = vmatpush.msra.mxu0 0.0
    %502 = vmatpush.msra.mxu0 0.0
    %503 = vmatpush.msra.mxu0 0.0
    %504 = vmatpush.msra.mxu0 0.0
    %v505 = vand.u32 %v169, 4294901760
    %v506 = vsub.f32 %v169, %v505
    %v507 = vand.u32 %v506, 4294901760
    %508 = vmatpush.msra.mxu0 %v507
    %v509 = vand.u32 %v168, 4294901760
    %v510 = vsub.f32 %v168, %v509
    %v511 = vand.u32 %v510, 4294901760
    %512 = vmatpush.msra.mxu0 %v511
    %v513 = vand.u32 %v167, 4294901760
    %v514 = vsub.f32 %v167, %v513
    %v515 = vand.u32 %v514, 4294901760
    %516 = vmatpush.msra.mxu0 %v515
    %v517 = vand.u32 %v166, 4294901760
    %v518 = vsub.f32 %v166, %v517
    %v519 = vand.u32 %v518, 4294901760
    %520 = vmatpush.msra.mxu0 %v519
    %v521 = vand.u32 %v364, 4294901760
    %522 = vmatmul.f32.gmra.mxu0 %v521
    %v523 = vpop.f32.mrf.mxu0
    %v524 = vadd.f32 %v491, %v523
    %525 = vdwg.mxu0
    %526 = vmatpush.msra.mxu0 0.0
    %527 = vmatpush.msra.mxu0 0.0
    %528 = vmatpush.msra.mxu0 0.0
    %529 = vmatpush.msra.mxu0 0.0
    %530 = vmatpush.msra.mxu0 0.0
    %531 = vmatpush.msra.mxu0 0.0
    %532 = vmatpush.msra.mxu0 0.0
    %533 = vmatpush.msra.mxu0 0.0
    %534 = vmatpush.msra.mxu0 0.0
    %535 = vmatpush.msra.mxu0 0.0
    %536 = vmatpush.msra.mxu0 0.0
    %537 = vmatpush.msra.mxu0 0.0
    %v538 = vand.u32 %v169, 4294901760
    %539 = vmatpush.msra.mxu0 %v538
    %v540 = vand.u32 %v168, 4294901760
    %541 = vmatpush.msra.mxu0 %v540
    %v542 = vand.u32 %v167, 4294901760
    %543 = vmatpush.msra.mxu0 %v542
    %v544 = vand.u32 %v166, 4294901760
    %545 = vmatpush.msra.mxu0 %v544
    %v546 = vand.u32 %v364, 4294901760
    %547 = vmatmul.f32.gmra.mxu0 %v546
    %v548 = vpop.f32.mrf.mxu0
    %v549 = vadd.f32 %v524, %v548
    %550 = vdwg.mxu0
    %v551 = vld [vmem:[%s6] sm:$0x1]
    %v553 = vperm.slane %v551, 0
    %v555 = vadd.f32 %v549, %v553
    %v556 = vmax.f32 %v555, 0.0
    %v557 = vld [vmem:[%s7] sm:$0xff]
    %v558 = vld [vmem:[%s7 + $0x8] sm:$0xff]
    %v559 = vld [vmem:[%s7 + $0x10] sm:$0xff]
    %v560 = vld [vmem:[%s7 + $0x18] sm:$0xff]
    %v561 = vld [vmem:[%s7 + $0x20] sm:$0xff]
    %v562 = vld [vmem:[%s7 + $0x28] sm:$0xff]
    %v563 = vld [vmem:[%s7 + $0x30] sm:$0xff]
    %v564 = vld [vmem:[%s7 + $0x38] sm:$0xff]
    %v565 = vld [vmem:[%s7 + $0x40] sm:$0xff]
    %v566 = vld [vmem:[%s7 + $0x48] sm:$0xff]
    %v567 = vld [vmem:[%s7 + $0x50] sm:$0xff]
    %v568 = vld [vmem:[%s7 + $0x58] sm:$0xff]
    %v569 = vld [vmem:[%s7 + $0x60] sm:$0xff]
    %v570 = vld [vmem:[%s7 + $0x68] sm:$0xff]
    %v571 = vld [vmem:[%s7 + $0x70] sm:$0xff]
    %v572 = vld [vmem:[%s7 + $0x78] sm:$0xff]
    %v573 = vld [vmem:[%s8] sm:$0x1]
    %v575 = vperm.slane %v573, 0
    %v577 = vand.u32 %v572, 4294901760
    %578 = vmatpush.msra.mxu0 %v577
    %v579 = vand.u32 %v571, 4294901760
    %580 = vmatpush.msra.mxu0 %v579
    %v581 = vand.u32 %v570, 4294901760
    %582 = vmatpush.msra.mxu0 %v581
    %v583 = vand.u32 %v569, 4294901760
    %584 = vmatpush.msra.mxu0 %v583
    %v585 = vand.u32 %v568, 4294901760
    %586 = vmatpush.msra.mxu0 %v585
    %v587 = vand.u32 %v567, 4294901760
    %588 = vmatpush.msra.mxu0 %v587
    %v589 = vand.u32 %v566, 4294901760
    %590 = vmatpush.msra.mxu0 %v589
    %v591 = vand.u32 %v565, 4294901760
    %592 = vmatpush.msra.mxu0 %v591
    %v593 = vand.u32 %v564, 4294901760
    %594 = vmatpush.msra.mxu0 %v593
    %v595 = vand.u32 %v563, 4294901760
    %596 = vmatpush.msra.mxu0 %v595
    %v597 = vand.u32 %v562, 4294901760
    %598 = vmatpush.msra.mxu0 %v597
    %v599 = vand.u32 %v561, 4294901760
    %600 = vmatpush.msra.mxu0 %v599
    %v601 = vand.u32 %v560, 4294901760
    %602 = vmatpush.msra.mxu0 %v601
    %v603 = vand.u32 %v559, 4294901760
    %604 = vmatpush.msra.mxu0 %v603
    %v605 = vand.u32 %v558, 4294901760
    %606 = vmatpush.msra.mxu0 %v605
    %v607 = vand.u32 %v557, 4294901760
    %608 = vmatpush.msra.mxu0 %v607
    %v609 = vand.u32 %v556, 4294901760
    %v610 = vsub.f32 %v556, %v609
    %v611 = vand.u32 %v610, 4294901760
    %v612 = vsub.f32 %v610, %v611
    %v613 = vand.u32 %v612, 4294901760
    %614 = vmatmul.f32.gmra.mxu0 %v613
    %v615 = vpop.f32.mrf.mxu0
    %v616 = vadd.f32 %v575, %v615
    %617 = vdwg.mxu0
    %v618 = vand.u32 %v572, 4294901760
    %v619 = vsub.f32 %v572, %v618
    %v620 = vand.u32 %v619, 4294901760
    %v621 = vsub.f32 %v619, %v620
    %v622 = vand.u32 %v621, 4294901760
    %623 = vmatpush.msra.mxu0 %v622
    %v624 = vand.u32 %v571, 4294901760
    %v625 = vsub.f32 %v571, %v624
    %v626 = vand.u32 %v625, 4294901760
    %v627 = vsub.f32 %v625, %v626
    %v628 = vand.u32 %v627, 4294901760
    %629 = vmatpush.msra.mxu0 %v628
    %v630 = vand.u32 %v570, 4294901760
    %v631 = vsub.f32 %v570, %v630
    %v632 = vand.u32 %v631, 4294901760
    %v633 = vsub.f32 %v631, %v632
    %v634 = vand.u32 %v633, 4294901760
    %635 = vmatpush.msra.mxu0 %v634
    %v636 = vand.u32 %v569, 4294901760
    %v637 = vsub.f32 %v569, %v636
    %v638 = vand.u32 %v637, 4294901760
    %v639 = vsub.f32 %v637, %v638
    %v640 = vand.u32 %v639, 4294901760
    %641 = vmatpush.msra.mxu0 %v640
    %v642 = vand.u32 %v568, 4294901760
    %v643 = vsub.f32 %v568, %v642
    %v644 = vand.u32 %v643, 4294901760
    %v645 = vsub.f32 %v643, %v644
    %v646 = vand.u32 %v645, 4294901760
    %647 = vmatpush.msra.mxu0 %v646
    %v648 = vand.u32 %v567, 4294901760
    %v649 = vsub.f32 %v567, %v648
    %v650 = vand.u32 %v649, 4294901760
    %v651 = vsub.f32 %v649, %v650
    %v652 = vand.u32 %v651, 4294901760
    %653 = vmatpush.msra.mxu0 %v652
    %v654 = vand.u32 %v566, 4294901760
    %v655 = vsub.f32 %v566, %v654
    %v656 = vand.u32 %v655, 4294901760
    %v657 = vsub.f32 %v655, %v656
    %v658 = vand.u32 %v657, 4294901760
    %659 = vmatpush.msra.mxu0 %v658
    %v660 = vand.u32 %v565, 4294901760
    %v661 = vsub.f32 %v565, %v660
    %v662 = vand.u32 %v661, 4294901760
    %v663 = vsub.f32 %v661, %v662
    %v664 = vand.u32 %v663, 4294901760
    %665 = vmatpush.msra.mxu0 %v664
    %v666 = vand.u32 %v564, 4294901760
    %v667 = vsub.f32 %v564, %v666
    %v668 = vand.u32 %v667, 4294901760
    %v669 = vsub.f32 %v667, %v668
    %v670 = vand.u32 %v669, 4294901760
    %671 = vmatpush.msra.mxu0 %v670
    %v672 = vand.u32 %v563, 4294901760
    %v673 = vsub.f32 %v563, %v672
    %v674 = vand.u32 %v673, 4294901760
    %v675 = vsub.f32 %v673, %v674
    %v676 = vand.u32 %v675, 4294901760
    %677 = vmatpush.msra.mxu0 %v676
    %v678 = vand.u32 %v562, 4294901760
    %v679 = vsub.f32 %v562, %v678
    %v680 = vand.u32 %v679, 4294901760
    %v681 = vsub.f32 %v679, %v680
    %v682 = vand.u32 %v681, 4294901760
    %683 = vmatpush.msra.mxu0 %v682
    %v684 = vand.u32 %v561, 4294901760
    %v685 = vsub.f32 %v561, %v684
    %v686 = vand.u32 %v685, 4294901760
    %v687 = vsub.f32 %v685, %v686
    %v688 = vand.u32 %v687, 4294901760
    %689 = vmatpush.msra.mxu0 %v688
    %v690 = vand.u32 %v560, 4294901760
    %v691 = vsub.f32 %v560, %v690
    %v692 = vand.u32 %v691, 4294901760
    %v693 = vsub.f32 %v691, %v692
    %v694 = vand.u32 %v693, 4294901760
    %695 = vmatpush.msra.mxu0 %v694
    %v696 = vand.u32 %v559, 4294901760
    %v697 = vsub.f32 %v559, %v696
    %v698 = vand.u32 %v697, 4294901760
    %v699 = vsub.f32 %v697, %v698
    %v700 = vand.u32 %v699, 4294901760
    %701 = vmatpush.msra.mxu0 %v700
    %v702 = vand.u32 %v558, 4294901760
    %v703 = vsub.f32 %v558, %v702
    %v704 = vand.u32 %v703, 4294901760
    %v705 = vsub.f32 %v703, %v704
    %v706 = vand.u32 %v705, 4294901760
    %707 = vmatpush.msra.mxu0 %v706
    %v708 = vand.u32 %v557, 4294901760
    %v709 = vsub.f32 %v557, %v708
    %v710 = vand.u32 %v709, 4294901760
    %v711 = vsub.f32 %v709, %v710
    %v712 = vand.u32 %v711, 4294901760
    %713 = vmatpush.msra.mxu0 %v712
    %v714 = vand.u32 %v556, 4294901760
    %715 = vmatmul.f32.gmra.mxu0 %v714
    %v716 = vpop.f32.mrf.mxu0
    %v717 = vadd.f32 %v616, %v716
    %718 = vdwg.mxu0
    %v719 = vand.u32 %v572, 4294901760
    %v720 = vsub.f32 %v572, %v719
    %721 = vmatpush.msra.mxu0 %v720
    %v722 = vand.u32 %v571, 4294901760
    %v723 = vsub.f32 %v571, %v722
    %724 = vmatpush.msra.mxu0 %v723
    %v725 = vand.u32 %v570, 4294901760
    %v726 = vsub.f32 %v570, %v725
    %727 = vmatpush.msra.mxu0 %v726
    %v728 = vand.u32 %v569, 4294901760
    %v729 = vsub.f32 %v569, %v728
    %730 = vmatpush.msra.mxu0 %v729
    %v731 = vand.u32 %v568, 4294901760
    %v732 = vsub.f32 %v568, %v731
    %733 = vmatpush.msra.mxu0 %v732
    %v734 = vand.u32 %v567, 4294901760
    %v735 = vsub.f32 %v567, %v734
    %736 = vmatpush.msra.mxu0 %v735
    %v737 = vand.u32 %v566, 4294901760
    %v738 = vsub.f32 %v566, %v737
    %739 = vmatpush.msra.mxu0 %v738
    %v740 = vand.u32 %v565, 4294901760
    %v741 = vsub.f32 %v565, %v740
    %742 = vmatpush.msra.mxu0 %v741
    %v743 = vand.u32 %v564, 4294901760
    %v744 = vsub.f32 %v564, %v743
    %745 = vmatpush.msra.mxu0 %v744
    %v746 = vand.u32 %v563, 4294901760
    %v747 = vsub.f32 %v563, %v746
    %748 = vmatpush.msra.mxu0 %v747
    %v749 = vand.u32 %v562, 4294901760
    %v750 = vsub.f32 %v562, %v749
    %751 = vmatpush.msra.mxu0 %v750
    %v752 = vand.u32 %v561, 4294901760
    %v753 = vsub.f32 %v561, %v752
    %754 = vmatpush.msra.mxu0 %v753
    %v755 = vand.u32 %v560, 4294901760
    %v756 = vsub.f32 %v560, %v755
    %757 = vmatpush.msra.mxu0 %v756
    %v758 = vand.u32 %v559, 4294901760
    %v759 = vsub.f32 %v559, %v758
    %760 = vmatpush.msra.mxu0 %v759
    %v761 = vand.u32 %v558, 4294901760
    %v762 = vsub.f32 %v558, %v761
    %763 = vmatpush.msra.mxu0 %v762
    %v764 = vand.u32 %v557, 4294901760
    %v765 = vsub.f32 %v557, %v764
    %766 = vmatpush.msra.mxu0 %v765
    %v767 = vand.u32 %v556, 4294901760
    %v768 = vsub.f32 %v556, %v767
    %769 = vmatmul.f32.gmra.mxu0 %v768
    %v770 = vpop.f32.mrf.mxu0
    %v771 = vadd.f32 %v717, %v770
    %772 = vdwg.mxu0
    %v773 = vand.u32 %v572, 4294901760
    %774 = vmatpush.msra.mxu0 %v773
    %v775 = vand.u32 %v571, 4294901760
    %776 = vmatpush.msra.mxu0 %v775
    %v777 = vand.u32 %v570, 4294901760
    %778 = vmatpush.msra.mxu0 %v777
    %v779 = vand.u32 %v569, 4294901760
    %780 = vmatpush.msra.mxu0 %v779
    %v781 = vand.u32 %v568, 4294901760
    %782 = vmatpush.msra.mxu0 %v781
    %v783 = vand.u32 %v567, 4294901760
    %784 = vmatpush.msra.mxu0 %v783
    %v785 = vand.u32 %v566, 4294901760
    %786 = vmatpush.msra.mxu0 %v785
    %v787 = vand.u32 %v565, 4294901760
    %788 = vmatpush.msra.mxu0 %v787
    %v789 = vand.u32 %v564, 4294901760
    %790 = vmatpush.msra.mxu0 %v789
    %v791 = vand.u32 %v563, 4294901760
    %792 = vmatpush.msra.mxu0 %v791
    %v793 = vand.u32 %v562, 4294901760
    %794 = vmatpush.msra.mxu0 %v793
    %v795 = vand.u32 %v561, 4294901760
    %796 = vmatpush.msra.mxu0 %v795
    %v797 = vand.u32 %v560, 4294901760
    %798 = vmatpush.msra.mxu0 %v797
    %v799 = vand.u32 %v559, 4294901760
    %800 = vmatpush.msra.mxu0 %v799
    %v801 = vand.u32 %v558, 4294901760
    %802 = vmatpush.msra.mxu0 %v801
    %v803 = vand.u32 %v557, 4294901760
    %804 = vmatpush.msra.mxu0 %v803
    %v805 = vand.u32 %v556, 4294901760
    %v806 = vsub.f32 %v556, %v805
    %v807 = vand.u32 %v806, 4294901760
    %808 = vmatmul.f32.gmra.mxu0 %v807
    %v809 = vpop.f32.mrf.mxu0
    %v810 = vadd.f32 %v771, %v809
    %811 = vdwg.mxu0
    %v812 = vand.u32 %v572, 4294901760
    %v813 = vsub.f32 %v572, %v812
    %v814 = vand.u32 %v813, 4294901760
    %815 = vmatpush.msra.mxu0 %v814
    %v816 = vand.u32 %v571, 4294901760
    %v817 = vsub.f32 %v571, %v816
    %v818 = vand.u32 %v817, 4294901760
    %819 = vmatpush.msra.mxu0 %v818
    %v820 = vand.u32 %v570, 4294901760
    %v821 = vsub.f32 %v570, %v820
    %v822 = vand.u32 %v821, 4294901760
    %823 = vmatpush.msra.mxu0 %v822
    %v824 = vand.u32 %v569, 4294901760
    %v825 = vsub.f32 %v569, %v824
    %v826 = vand.u32 %v825, 4294901760
    %827 = vmatpush.msra.mxu0 %v826
    %v828 = vand.u32 %v568, 4294901760
    %v829 = vsub.f32 %v568, %v828
    %v830 = vand.u32 %v829, 4294901760
    %831 = vmatpush.msra.mxu0 %v830
    %v832 = vand.u32 %v567, 4294901760
    %v833 = vsub.f32 %v567, %v832
    %v834 = vand.u32 %v833, 4294901760
    %835 = vmatpush.msra.mxu0 %v834
    %v836 = vand.u32 %v566, 4294901760
    %v837 = vsub.f32 %v566, %v836
    %v838 = vand.u32 %v837, 4294901760
    %839 = vmatpush.msra.mxu0 %v838
    %v840 = vand.u32 %v565, 4294901760
    %v841 = vsub.f32 %v565, %v840
    %v842 = vand.u32 %v841, 4294901760
    %843 = vmatpush.msra.mxu0 %v842
    %v844 = vand.u32 %v564, 4294901760
    %v845 = vsub.f32 %v564, %v844
    %v846 = vand.u32 %v845, 4294901760
    %847 = vmatpush.msra.mxu0 %v846
    %v848 = vand.u32 %v563, 4294901760
    %v849 = vsub.f32 %v563, %v848
    %v850 = vand.u32 %v849, 4294901760
    %851 = vmatpush.msra.mxu0 %v850
    %v852 = vand.u32 %v562, 4294901760
    %v853 = vsub.f32 %v562, %v852
    %v854 = vand.u32 %v853, 4294901760
    %855 = vmatpush.msra.mxu0 %v854
    %v856 = vand.u32 %v561, 4294901760
    %v857 = vsub.f32 %v561, %v856
    %v858 = vand.u32 %v857, 4294901760
    %859 = vmatpush.msra.mxu0 %v858
    %v860 = vand.u32 %v560, 4294901760
    %v861 = vsub.f32 %v560, %v860
    %v862 = vand.u32 %v861, 4294901760
    %863 = vmatpush.msra.mxu0 %v862
    %v864 = vand.u32 %v559, 4294901760
    %v865 = vsub.f32 %v559, %v864
    %v866 = vand.u32 %v865, 4294901760
    %867 = vmatpush.msra.mxu0 %v866
    %v868 = vand.u32 %v558, 4294901760
    %v869 = vsub.f32 %v558, %v868
    %v870 = vand.u32 %v869, 4294901760
    %871 = vmatpush.msra.mxu0 %v870
    %v872 = vand.u32 %v557, 4294901760
    %v873 = vsub.f32 %v557, %v872
    %v874 = vand.u32 %v873, 4294901760
    %875 = vmatpush.msra.mxu0 %v874
    %v876 = vand.u32 %v556, 4294901760
    %877 = vmatmul.f32.gmra.mxu0 %v876
    %v878 = vpop.f32.mrf.mxu0
    %v879 = vadd.f32 %v810, %v878
    %880 = vdwg.mxu0
    %v881 = vand.u32 %v572, 4294901760
    %882 = vmatpush.msra.mxu0 %v881
    %v883 = vand.u32 %v571, 4294901760
    %884 = vmatpush.msra.mxu0 %v883
    %v885 = vand.u32 %v570, 4294901760
    %886 = vmatpush.msra.mxu0 %v885
    %v887 = vand.u32 %v569, 4294901760
    %888 = vmatpush.msra.mxu0 %v887
    %v889 = vand.u32 %v568, 4294901760
    %890 = vmatpush.msra.mxu0 %v889
    %v891 = vand.u32 %v567, 4294901760
    %892 = vmatpush.msra.mxu0 %v891
    %v893 = vand.u32 %v566, 4294901760
    %894 = vmatpush.msra.mxu0 %v893
    %v895 = vand.u32 %v565, 4294901760
    %896 = vmatpush.msra.mxu0 %v895
    %v897 = vand.u32 %v564, 4294901760
    %898 = vmatpush.msra.mxu0 %v897
    %v899 = vand.u32 %v563, 4294901760
    %900 = vmatpush.msra.mxu0 %v899
    %v901 = vand.u32 %v562, 4294901760
    %902 = vmatpush.msra.mxu0 %v901
    %v903 = vand.u32 %v561, 4294901760
    %904 = vmatpush.msra.mxu0 %v903
    %v905 = vand.u32 %v560, 4294901760
    %906 = vmatpush.msra.mxu0 %v905
    %v907 = vand.u32 %v559, 4294901760
    %908 = vmatpush.msra.mxu0 %v907
    %v909 = vand.u32 %v558, 4294901760
    %910 = vmatpush.msra.mxu0 %v909
    %v911 = vand.u32 %v557, 4294901760
    %912 = vmatpush.msra.mxu0 %v911
    %v913 = vand.u32 %v556, 4294901760
    %914 = vmatmul.f32.gmra.mxu0 %v913
    %v915 = vpop.f32.mrf.mxu0
    %v916 = vadd.f32 %v879, %v915
    %917 = vdwg.mxu0
    %v918 = vmax.f32 %v916, 0.0
    %v919 = vld [vmem:[%s9] sm:$0xff]
    %v920 = vld [vmem:[%s9 + $0x8] sm:$0xff]
    %v921 = vld [vmem:[%s9 + $0x10] sm:$0xff]
    %v922 = vld [vmem:[%s9 + $0x18] sm:$0xff]
    %v923 = vld [vmem:[%s9 + $0x20] sm:$0xff]
    %v924 = vld [vmem:[%s9 + $0x28] sm:$0xff]
    %v925 = vld [vmem:[%s9 + $0x30] sm:$0xff]
    %v926 = vld [vmem:[%s9 + $0x38] sm:$0xff]
    %v927 = vld [vmem:[%s9 + $0x40] sm:$0xff]
    %v928 = vld [vmem:[%s9 + $0x48] sm:$0xff]
    %v929 = vld [vmem:[%s9 + $0x50] sm:$0xff]
    %v930 = vld [vmem:[%s9 + $0x58] sm:$0xff]
    %v931 = vld [vmem:[%s9 + $0x60] sm:$0xff]
    %v932 = vld [vmem:[%s9 + $0x68] sm:$0xff]
    %v933 = vld [vmem:[%s9 + $0x70] sm:$0xff]
    %v934 = vld [vmem:[%s9 + $0x78] sm:$0xff]
    %v935 = vld [vmem:[%s10] sm:$0x1]
    %v937 = vperm.slane %v935, 0
    %v939 = vand.u32 %v934, 4294901760
    %940 = vmatpush.msra.mxu0 %v939
    %v941 = vand.u32 %v933, 4294901760
    %942 = vmatpush.msra.mxu0 %v941
    %v943 = vand.u32 %v932, 4294901760
    %944 = vmatpush.msra.mxu0 %v943
    %v945 = vand.u32 %v931, 4294901760
    %946 = vmatpush.msra.mxu0 %v945
    %v947 = vand.u32 %v930, 4294901760
    %948 = vmatpush.msra.mxu0 %v947
    %v949 = vand.u32 %v929, 4294901760
    %950 = vmatpush.msra.mxu0 %v949
    %v951 = vand.u32 %v928, 4294901760
    %952 = vmatpush.msra.mxu0 %v951
    %v953 = vand.u32 %v927, 4294901760
    %954 = vmatpush.msra.mxu0 %v953
    %v955 = vand.u32 %v926, 4294901760
    %956 = vmatpush.msra.mxu0 %v955
    %v957 = vand.u32 %v925, 4294901760
    %958 = vmatpush.msra.mxu0 %v957
    %v959 = vand.u32 %v924, 4294901760
    %960 = vmatpush.msra.mxu0 %v959
    %v961 = vand.u32 %v923, 4294901760
    %962 = vmatpush.msra.mxu0 %v961
    %v963 = vand.u32 %v922, 4294901760
    %964 = vmatpush.msra.mxu0 %v963
    %v965 = vand.u32 %v921, 4294901760
    %966 = vmatpush.msra.mxu0 %v965
    %v967 = vand.u32 %v920, 4294901760
    %968 = vmatpush.msra.mxu0 %v967
    %v969 = vand.u32 %v919, 4294901760
    %970 = vmatpush.msra.mxu0 %v969
    %v971 = vand.u32 %v918, 4294901760
    %v972 = vsub.f32 %v918, %v971
    %v973 = vand.u32 %v972, 4294901760
    %v974 = vsub.f32 %v972, %v973
    %v975 = vand.u32 %v974, 4294901760
    %976 = vmatmul.f32.gmra.mxu0 %v975
    %v977 = vpop.f32.mrf.mxu0
    %v978 = vadd.f32 %v937, %v977
    %979 = vdwg.mxu0
    %v980 = vand.u32 %v934, 4294901760
    %v981 = vsub.f32 %v934, %v980
    %v982 = vand.u32 %v981, 4294901760
    %v983 = vsub.f32 %v981, %v982
    %v984 = vand.u32 %v983, 4294901760
    %985 = vmatpush.msra.mxu0 %v984
    %v986 = vand.u32 %v933, 4294901760
    %v987 = vsub.f32 %v933, %v986
    %v988 = vand.u32 %v987, 4294901760
    %v989 = vsub.f32 %v987, %v988
    %v990 = vand.u32 %v989, 4294901760
    %991 = vmatpush.msra.mxu0 %v990
    %v992 = vand.u32 %v932, 4294901760
    %v993 = vsub.f32 %v932, %v992
    %v994 = vand.u32 %v993, 4294901760
    %v995 = vsub.f32 %v993, %v994
    %v996 = vand.u32 %v995, 4294901760
    %997 = vmatpush.msra.mxu0 %v996
    %v998 = vand.u32 %v931, 4294901760
    %v999 = vsub.f32 %v931, %v998
    %v1000 = vand.u32 %v999, 4294901760
    %v1001 = vsub.f32 %v999, %v1000
    %v1002 = vand.u32 %v1001, 4294901760
    %1003 = vmatpush.msra.mxu0 %v1002
    %v1004 = vand.u32 %v930, 4294901760
    %v1005 = vsub.f32 %v930, %v1004
    %v1006 = vand.u32 %v1005, 4294901760
    %v1007 = vsub.f32 %v1005, %v1006
    %v1008 = vand.u32 %v1007, 4294901760
    %1009 = vmatpush.msra.mxu0 %v1008
    %v1010 = vand.u32 %v929, 4294901760
    %v1011 = vsub.f32 %v929, %v1010
    %v1012 = vand.u32 %v1011, 4294901760
    %v1013 = vsub.f32 %v1011, %v1012
    %v1014 = vand.u32 %v1013, 4294901760
    %1015 = vmatpush.msra.mxu0 %v1014
    %v1016 = vand.u32 %v928, 4294901760
    %v1017 = vsub.f32 %v928, %v1016
    %v1018 = vand.u32 %v1017, 4294901760
    %v1019 = vsub.f32 %v1017, %v1018
    %v1020 = vand.u32 %v1019, 4294901760
    %1021 = vmatpush.msra.mxu0 %v1020
    %v1022 = vand.u32 %v927, 4294901760
    %v1023 = vsub.f32 %v927, %v1022
    %v1024 = vand.u32 %v1023, 4294901760
    %v1025 = vsub.f32 %v1023, %v1024
    %v1026 = vand.u32 %v1025, 4294901760
    %1027 = vmatpush.msra.mxu0 %v1026
    %v1028 = vand.u32 %v926, 4294901760
    %v1029 = vsub.f32 %v926, %v1028
    %v1030 = vand.u32 %v1029, 4294901760
    %v1031 = vsub.f32 %v1029, %v1030
    %v1032 = vand.u32 %v1031, 4294901760
    %1033 = vmatpush.msra.mxu0 %v1032
    %v1034 = vand.u32 %v925, 4294901760
    %v1035 = vsub.f32 %v925, %v1034
    %v1036 = vand.u32 %v1035, 4294901760
    %v1037 = vsub.f32 %v1035, %v1036
    %v1038 = vand.u32 %v1037, 4294901760
    %1039 = vmatpush.msra.mxu0 %v1038
    %v1040 = vand.u32 %v924, 4294901760
    %v1041 = vsub.f32 %v924, %v1040
    %v1042 = vand.u32 %v1041, 4294901760
    %v1043 = vsub.f32 %v1041, %v1042
    %v1044 = vand.u32 %v1043, 4294901760
    %1045 = vmatpush.msra.mxu0 %v1044
    %v1046 = vand.u32 %v923, 4294901760
    %v1047 = vsub.f32 %v923, %v1046
    %v1048 = vand.u32 %v1047, 4294901760
    %v1049 = vsub.f32 %v1047, %v1048
    %v1050 = vand.u32 %v1049, 4294901760
    %1051 = vmatpush.msra.mxu0 %v1050
    %v1052 = vand.u32 %v922, 4294901760
    %v1053 = vsub.f32 %v922, %v1052
    %v1054 = vand.u32 %v1053, 4294901760
    %v1055 = vsub.f32 %v1053, %v1054
    %v1056 = vand.u32 %v1055, 4294901760
    %1057 = vmatpush.msra.mxu0 %v1056
    %v1058 = vand.u32 %v921, 4294901760
    %v1059 = vsub.f32 %v921, %v1058
    %v1060 = vand.u32 %v1059, 4294901760
    %v1061 = vsub.f32 %v1059, %v1060
    %v1062 = vand.u32 %v1061, 4294901760
    %1063 = vmatpush.msra.mxu0 %v1062
    %v1064 = vand.u32 %v920, 4294901760
    %v1065 = vsub.f32 %v920, %v1064
    %v1066 = vand.u32 %v1065, 4294901760
    %v1067 = vsub.f32 %v1065, %v1066
    %v1068 = vand.u32 %v1067, 4294901760
    %1069 = vmatpush.msra.mxu0 %v1068
    %v1070 = vand.u32 %v919, 4294901760
    %v1071 = vsub.f32 %v919, %v1070
    %v1072 = vand.u32 %v1071, 4294901760
    %v1073 = vsub.f32 %v1071, %v1072
    %v1074 = vand.u32 %v1073, 4294901760
    %1075 = vmatpush.msra.mxu0 %v1074
    %v1076 = vand.u32 %v918, 4294901760
    %1077 = vmatmul.f32.gmra.mxu0 %v1076
    %v1078 = vpop.f32.mrf.mxu0
    %v1079 = vadd.f32 %v978, %v1078
    %1080 = vdwg.mxu0
    %v1081 = vand.u32 %v934, 4294901760
    %v1082 = vsub.f32 %v934, %v1081
    %1083 = vmatpush.msra.mxu0 %v1082
    %v1084 = vand.u32 %v933, 4294901760
    %v1085 = vsub.f32 %v933, %v1084
    %1086 = vmatpush.msra.mxu0 %v1085
    %v1087 = vand.u32 %v932, 4294901760
    %v1088 = vsub.f32 %v932, %v1087
    %1089 = vmatpush.msra.mxu0 %v1088
    %v1090 = vand.u32 %v931, 4294901760
    %v1091 = vsub.f32 %v931, %v1090
    %1092 = vmatpush.msra.mxu0 %v1091
    %v1093 = vand.u32 %v930, 4294901760
    %v1094 = vsub.f32 %v930, %v1093
    %1095 = vmatpush.msra.mxu0 %v1094
    %v1096 = vand.u32 %v929, 4294901760
    %v1097 = vsub.f32 %v929, %v1096
    %1098 = vmatpush.msra.mxu0 %v1097
    %v1099 = vand.u32 %v928, 4294901760
    %v1100 = vsub.f32 %v928, %v1099
    %1101 = vmatpush.msra.mxu0 %v1100
    %v1102 = vand.u32 %v927, 4294901760
    %v1103 = vsub.f32 %v927, %v1102
    %1104 = vmatpush.msra.mxu0 %v1103
    %v1105 = vand.u32 %v926, 4294901760
    %v1106 = vsub.f32 %v926, %v1105
    %1107 = vmatpush.msra.mxu0 %v1106
    %v1108 = vand.u32 %v925, 4294901760
    %v1109 = vsub.f32 %v925, %v1108
    %1110 = vmatpush.msra.mxu0 %v1109
    %v1111 = vand.u32 %v924, 4294901760
    %v1112 = vsub.f32 %v924, %v1111
    %1113 = vmatpush.msra.mxu0 %v1112
    %v1114 = vand.u32 %v923, 4294901760
    %v1115 = vsub.f32 %v923, %v1114
    %1116 = vmatpush.msra.mxu0 %v1115
    %v1117 = vand.u32 %v922, 4294901760
    %v1118 = vsub.f32 %v922, %v1117
    %1119 = vmatpush.msra.mxu0 %v1118
    %v1120 = vand.u32 %v921, 4294901760
    %v1121 = vsub.f32 %v921, %v1120
    %1122 = vmatpush.msra.mxu0 %v1121
    %v1123 = vand.u32 %v920, 4294901760
    %v1124 = vsub.f32 %v920, %v1123
    %1125 = vmatpush.msra.mxu0 %v1124
    %v1126 = vand.u32 %v919, 4294901760
    %v1127 = vsub.f32 %v919, %v1126
    %1128 = vmatpush.msra.mxu0 %v1127
    %v1129 = vand.u32 %v918, 4294901760
    %v1130 = vsub.f32 %v918, %v1129
    %1131 = vmatmul.f32.gmra.mxu0 %v1130
    %v1132 = vpop.f32.mrf.mxu0
    %v1133 = vadd.f32 %v1079, %v1132
    %1134 = vdwg.mxu0
    %v1135 = vand.u32 %v934, 4294901760
    %1136 = vmatpush.msra.mxu0 %v1135
    %v1137 = vand.u32 %v933, 4294901760
    %1138 = vmatpush.msra.mxu0 %v1137
    %v1139 = vand.u32 %v932, 4294901760
    %1140 = vmatpush.msra.mxu0 %v1139
    %v1141 = vand.u32 %v931, 4294901760
    %1142 = vmatpush.msra.mxu0 %v1141
    %v1143 = vand.u32 %v930, 4294901760
    %1144 = vmatpush.msra.mxu0 %v1143
    %v1145 = vand.u32 %v929, 4294901760
    %1146 = vmatpush.msra.mxu0 %v1145
    %v1147 = vand.u32 %v928, 4294901760
    %1148 = vmatpush.msra.mxu0 %v1147
    %v1149 = vand.u32 %v927, 4294901760
    %1150 = vmatpush.msra.mxu0 %v1149
    %v1151 = vand.u32 %v926, 4294901760
    %1152 = vmatpush.msra.mxu0 %v1151
    %v1153 = vand.u32 %v925, 4294901760
    %1154 = vmatpush.msra.mxu0 %v1153
    %v1155 = vand.u32 %v924, 4294901760
    %1156 = vmatpush.msra.mxu0 %v1155
    %v1157 = vand.u32 %v923, 4294901760
    %1158 = vmatpush.msra.mxu0 %v1157
    %v1159 = vand.u32 %v922, 4294901760
    %1160 = vmatpush.msra.mxu0 %v1159
    %v1161 = vand.u32 %v921, 4294901760
    %1162 = vmatpush.msra.mxu0 %v1161
    %v1163 = vand.u32 %v920, 4294901760
    %1164 = vmatpush.msra.mxu0 %v1163
    %v1165 = vand.u32 %v919, 4294901760
    %1166 = vmatpush.msra.mxu0 %v1165
    %v1167 = vand.u32 %v918, 4294901760
    %v1168 = vsub.f32 %v918, %v1167
    %v1169 = vand.u32 %v1168, 4294901760
    %1170 = vmatmul.f32.gmra.mxu0 %v1169
    %v1171 = vpop.f32.mrf.mxu0
    %v1172 = vadd.f32 %v1133, %v1171
    %1173 = vdwg.mxu0
    %v1174 = vand.u32 %v934, 4294901760
    %v1175 = vsub.f32 %v934, %v1174
    %v1176 = vand.u32 %v1175, 4294901760
    %1177 = vmatpush.msra.mxu0 %v1176
    %v1178 = vand.u32 %v933, 4294901760
    %v1179 = vsub.f32 %v933, %v1178
    %v1180 = vand.u32 %v1179, 4294901760
    %1181 = vmatpush.msra.mxu0 %v1180
    %v1182 = vand.u32 %v932, 4294901760
    %v1183 = vsub.f32 %v932, %v1182
    %v1184 = vand.u32 %v1183, 4294901760
    %1185 = vmatpush.msra.mxu0 %v1184
    %v1186 = vand.u32 %v931, 4294901760
    %v1187 = vsub.f32 %v931, %v1186
    %v1188 = vand.u32 %v1187, 4294901760
    %1189 = vmatpush.msra.mxu0 %v1188
    %v1190 = vand.u32 %v930, 4294901760
    %v1191 = vsub.f32 %v930, %v1190
    %v1192 = vand.u32 %v1191, 4294901760
    %1193 = vmatpush.msra.mxu0 %v1192
    %v1194 = vand.u32 %v929, 4294901760
    %v1195 = vsub.f32 %v929, %v1194
    %v1196 = vand.u32 %v1195, 4294901760
    %1197 = vmatpush.msra.mxu0 %v1196
    %v1198 = vand.u32 %v928, 4294901760
    %v1199 = vsub.f32 %v928, %v1198
    %v1200 = vand.u32 %v1199, 4294901760
    %1201 = vmatpush.msra.mxu0 %v1200
    %v1202 = vand.u32 %v927, 4294901760
    %v1203 = vsub.f32 %v927, %v1202
    %v1204 = vand.u32 %v1203, 4294901760
    %1205 = vmatpush.msra.mxu0 %v1204
    %v1206 = vand.u32 %v926, 4294901760
    %v1207 = vsub.f32 %v926, %v1206
    %v1208 = vand.u32 %v1207, 4294901760
    %1209 = vmatpush.msra.mxu0 %v1208
    %v1210 = vand.u32 %v925, 4294901760
    %v1211 = vsub.f32 %v925, %v1210
    %v1212 = vand.u32 %v1211, 4294901760
    %1213 = vmatpush.msra.mxu0 %v1212
    %v1214 = vand.u32 %v924, 4294901760
    %v1215 = vsub.f32 %v924, %v1214
    %v1216 = vand.u32 %v1215, 4294901760
    %1217 = vmatpush.msra.mxu0 %v1216
    %v1218 = vand.u32 %v923, 4294901760
    %v1219 = vsub.f32 %v923, %v1218
    %v1220 = vand.u32 %v1219, 4294901760
    %1221 = vmatpush.msra.mxu0 %v1220
    %v1222 = vand.u32 %v922, 4294901760
    %v1223 = vsub.f32 %v922, %v1222
    %v1224 = vand.u32 %v1223, 4294901760
    %1225 = vmatpush.msra.mxu0 %v1224
    %v1226 = vand.u32 %v921, 4294901760
    %v1227 = vsub.f32 %v921, %v1226
    %v1228 = vand.u32 %v1227, 4294901760
    %1229 = vmatpush.msra.mxu0 %v1228
    %v1230 = vand.u32 %v920, 4294901760
    %v1231 = vsub.f32 %v920, %v1230
    %v1232 = vand.u32 %v1231, 4294901760
    %1233 = vmatpush.msra.mxu0 %v1232
    %v1234 = vand.u32 %v919, 4294901760
    %v1235 = vsub.f32 %v919, %v1234
    %v1236 = vand.u32 %v1235, 4294901760
    %1237 = vmatpush.msra.mxu0 %v1236
    %v1238 = vand.u32 %v918, 4294901760
    %1239 = vmatmul.f32.gmra.mxu0 %v1238
    %v1240 = vpop.f32.mrf.mxu0
    %v1241 = vadd.f32 %v1172, %v1240
    %1242 = vdwg.mxu0
    %v1243 = vand.u32 %v934, 4294901760
    %1244 = vmatpush.msra.mxu0 %v1243
    %v1245 = vand.u32 %v933, 4294901760
    %1246 = vmatpush.msra.mxu0 %v1245
    %v1247 = vand.u32 %v932, 4294901760
    %1248 = vmatpush.msra.mxu0 %v1247
    %v1249 = vand.u32 %v931, 4294901760
    %1250 = vmatpush.msra.mxu0 %v1249
    %v1251 = vand.u32 %v930, 4294901760
    %1252 = vmatpush.msra.mxu0 %v1251
    %v1253 = vand.u32 %v929, 4294901760
    %1254 = vmatpush.msra.mxu0 %v1253
    %v1255 = vand.u32 %v928, 4294901760
    %1256 = vmatpush.msra.mxu0 %v1255
    %v1257 = vand.u32 %v927, 4294901760
    %1258 = vmatpush.msra.mxu0 %v1257
    %v1259 = vand.u32 %v926, 4294901760
    %1260 = vmatpush.msra.mxu0 %v1259
    %v1261 = vand.u32 %v925, 4294901760
    %1262 = vmatpush.msra.mxu0 %v1261
    %v1263 = vand.u32 %v924, 4294901760
    %1264 = vmatpush.msra.mxu0 %v1263
    %v1265 = vand.u32 %v923, 4294901760
    %1266 = vmatpush.msra.mxu0 %v1265
    %v1267 = vand.u32 %v922, 4294901760
    %1268 = vmatpush.msra.mxu0 %v1267
    %v1269 = vand.u32 %v921, 4294901760
    %1270 = vmatpush.msra.mxu0 %v1269
    %v1271 = vand.u32 %v920, 4294901760
    %1272 = vmatpush.msra.mxu0 %v1271
    %v1273 = vand.u32 %v919, 4294901760
    %1274 = vmatpush.msra.mxu0 %v1273
    %v1275 = vand.u32 %v918, 4294901760
    %1276 = vmatmul.f32.gmra.mxu0 %v1275
    %v1277 = vpop.f32.mrf.mxu0
    %v1278 = vadd.f32 %v1241, %v1277
    %1279 = vdwg.mxu0
    %v1280 = vadd.f32 %v1278, 1.0
    %v1281 = vmax.f32 %v1280, 0.05
    %v1282 = vmin.f32 %v1281, 1e+09
    %v1283 = vld [vmem:[#allocation7] sm:$0xff]
    %v1284 = vld [vmem:[#allocation8] sm:$0xff]
    %v1285 = vld [vmem:[#allocation11] sm:$0xff]
    %v1286 = vld [vmem:[#allocation11 + $0x8] sm:$0xff]
    %v1287 = vld [vmem:[#allocation11 + $0x10] sm:$0xff]
    %v1288 = vld [vmem:[#allocation11 + $0x18] sm:$0xff]
    %v1289 = vld [vmem:[#allocation13] sm:$0xff]
    %v1290 = vld [vmem:[#allocation13 + $0x8] sm:$0xff]
    %v1291 = vld [vmem:[#allocation13 + $0x10] sm:$0xff]
    %v1292 = vld [vmem:[#allocation13 + $0x18] sm:$0xff]
    %v1294 = vsel %vm174, %v1284, 0
    %1296 = vmatpush.msra.mxu0 0.0
    %1297 = vmatpush.msra.mxu0 0.0
    %1298 = vmatpush.msra.mxu0 0.0
    %1299 = vmatpush.msra.mxu0 0.0
    %1300 = vmatpush.msra.mxu0 0.0
    %1301 = vmatpush.msra.mxu0 0.0
    %1302 = vmatpush.msra.mxu0 0.0
    %1303 = vmatpush.msra.mxu0 0.0
    %1304 = vmatpush.msra.mxu0 0.0
    %1305 = vmatpush.msra.mxu0 0.0
    %1306 = vmatpush.msra.mxu0 0.0
    %1307 = vmatpush.msra.mxu0 0.0
    %v1308 = vand.u32 %v1292, 4294901760
    %1309 = vmatpush.msra.mxu0 %v1308
    %v1310 = vand.u32 %v1291, 4294901760
    %1311 = vmatpush.msra.mxu0 %v1310
    %v1312 = vand.u32 %v1290, 4294901760
    %1313 = vmatpush.msra.mxu0 %v1312
    %v1314 = vand.u32 %v1289, 4294901760
    %1315 = vmatpush.msra.mxu0 %v1314
    %v1316 = vand.u32 %v1294, 4294901760
    %v1317 = vsub.f32 %v1294, %v1316
    %v1318 = vand.u32 %v1317, 4294901760
    %v1319 = vsub.f32 %v1317, %v1318
    %v1320 = vand.u32 %v1319, 4294901760
    %1321 = vmatmul.f32.gmra.mxu0 %v1320
    %v1322 = vpop.f32.mrf.mxu0
    %v1323 = vadd.f32 0.0, %v1322
    %1324 = vdwg.mxu0
    %1325 = vmatpush.msra.mxu0 0.0
    %1326 = vmatpush.msra.mxu0 0.0
    %1327 = vmatpush.msra.mxu0 0.0
    %1328 = vmatpush.msra.mxu0 0.0
    %1329 = vmatpush.msra.mxu0 0.0
    %1330 = vmatpush.msra.mxu0 0.0
    %1331 = vmatpush.msra.mxu0 0.0
    %1332 = vmatpush.msra.mxu0 0.0
    %1333 = vmatpush.msra.mxu0 0.0
    %1334 = vmatpush.msra.mxu0 0.0
    %1335 = vmatpush.msra.mxu0 0.0
    %1336 = vmatpush.msra.mxu0 0.0
    %v1337 = vand.u32 %v1292, 4294901760
    %v1338 = vsub.f32 %v1292, %v1337
    %v1339 = vand.u32 %v1338, 4294901760
    %v1340 = vsub.f32 %v1338, %v1339
    %v1341 = vand.u32 %v1340, 4294901760
    %1342 = vmatpush.msra.mxu0 %v1341
    %v1343 = vand.u32 %v1291, 4294901760
    %v1344 = vsub.f32 %v1291, %v1343
    %v1345 = vand.u32 %v1344, 4294901760
    %v1346 = vsub.f32 %v1344, %v1345
    %v1347 = vand.u32 %v1346, 4294901760
    %1348 = vmatpush.msra.mxu0 %v1347
    %v1349 = vand.u32 %v1290, 4294901760
    %v1350 = vsub.f32 %v1290, %v1349
    %v1351 = vand.u32 %v1350, 4294901760
    %v1352 = vsub.f32 %v1350, %v1351
    %v1353 = vand.u32 %v1352, 4294901760
    %1354 = vmatpush.msra.mxu0 %v1353
    %v1355 = vand.u32 %v1289, 4294901760
    %v1356 = vsub.f32 %v1289, %v1355
    %v1357 = vand.u32 %v1356, 4294901760
    %v1358 = vsub.f32 %v1356, %v1357
    %v1359 = vand.u32 %v1358, 4294901760
    %1360 = vmatpush.msra.mxu0 %v1359
    %v1361 = vand.u32 %v1294, 4294901760
    %1362 = vmatmul.f32.gmra.mxu0 %v1361
    %v1363 = vpop.f32.mrf.mxu0
    %v1364 = vadd.f32 %v1323, %v1363
    %1365 = vdwg.mxu0
    %1366 = vmatpush.msra.mxu0 0.0
    %1367 = vmatpush.msra.mxu0 0.0
    %1368 = vmatpush.msra.mxu0 0.0
    %1369 = vmatpush.msra.mxu0 0.0
    %1370 = vmatpush.msra.mxu0 0.0
    %1371 = vmatpush.msra.mxu0 0.0
    %1372 = vmatpush.msra.mxu0 0.0
    %1373 = vmatpush.msra.mxu0 0.0
    %1374 = vmatpush.msra.mxu0 0.0
    %1375 = vmatpush.msra.mxu0 0.0
    %1376 = vmatpush.msra.mxu0 0.0
    %1377 = vmatpush.msra.mxu0 0.0
    %v1378 = vand.u32 %v1292, 4294901760
    %v1379 = vsub.f32 %v1292, %v1378
    %1380 = vmatpush.msra.mxu0 %v1379
    %v1381 = vand.u32 %v1291, 4294901760
    %v1382 = vsub.f32 %v1291, %v1381
    %1383 = vmatpush.msra.mxu0 %v1382
    %v1384 = vand.u32 %v1290, 4294901760
    %v1385 = vsub.f32 %v1290, %v1384
    %1386 = vmatpush.msra.mxu0 %v1385
    %v1387 = vand.u32 %v1289, 4294901760
    %v1388 = vsub.f32 %v1289, %v1387
    %1389 = vmatpush.msra.mxu0 %v1388
    %v1390 = vand.u32 %v1294, 4294901760
    %v1391 = vsub.f32 %v1294, %v1390
    %1392 = vmatmul.f32.gmra.mxu0 %v1391
    %v1393 = vpop.f32.mrf.mxu0
    %v1394 = vadd.f32 %v1364, %v1393
    %1395 = vdwg.mxu0
    %1396 = vmatpush.msra.mxu0 0.0
    %1397 = vmatpush.msra.mxu0 0.0
    %1398 = vmatpush.msra.mxu0 0.0
    %1399 = vmatpush.msra.mxu0 0.0
    %1400 = vmatpush.msra.mxu0 0.0
    %1401 = vmatpush.msra.mxu0 0.0
    %1402 = vmatpush.msra.mxu0 0.0
    %1403 = vmatpush.msra.mxu0 0.0
    %1404 = vmatpush.msra.mxu0 0.0
    %1405 = vmatpush.msra.mxu0 0.0
    %1406 = vmatpush.msra.mxu0 0.0
    %1407 = vmatpush.msra.mxu0 0.0
    %v1408 = vand.u32 %v1292, 4294901760
    %1409 = vmatpush.msra.mxu0 %v1408
    %v1410 = vand.u32 %v1291, 4294901760
    %1411 = vmatpush.msra.mxu0 %v1410
    %v1412 = vand.u32 %v1290, 4294901760
    %1413 = vmatpush.msra.mxu0 %v1412
    %v1414 = vand.u32 %v1289, 4294901760
    %1415 = vmatpush.msra.mxu0 %v1414
    %v1416 = vand.u32 %v1294, 4294901760
    %v1417 = vsub.f32 %v1294, %v1416
    %v1418 = vand.u32 %v1417, 4294901760
    %1419 = vmatmul.f32.gmra.mxu0 %v1418
    %v1420 = vpop.f32.mrf.mxu0
    %v1421 = vadd.f32 %v1394, %v1420
    %1422 = vdwg.mxu0
    %1423 = vmatpush.msra.mxu0 0.0
    %1424 = vmatpush.msra.mxu0 0.0
    %1425 = vmatpush.msra.mxu0 0.0
    %1426 = vmatpush.msra.mxu0 0.0
    %1427 = vmatpush.msra.mxu0 0.0
    %1428 = vmatpush.msra.mxu0 0.0
    %1429 = vmatpush.msra.mxu0 0.0
    %1430 = vmatpush.msra.mxu0 0.0
    %1431 = vmatpush.msra.mxu0 0.0
    %1432 = vmatpush.msra.mxu0 0.0
    %1433 = vmatpush.msra.mxu0 0.0
    %1434 = vmatpush.msra.mxu0 0.0
    %v1435 = vand.u32 %v1292, 4294901760
    %v1436 = vsub.f32 %v1292, %v1435
    %v1437 = vand.u32 %v1436, 4294901760
    %1438 = vmatpush.msra.mxu0 %v1437
    %v1439 = vand.u32 %v1291, 4294901760
    %v1440 = vsub.f32 %v1291, %v1439
    %v1441 = vand.u32 %v1440, 4294901760
    %1442 = vmatpush.msra.mxu0 %v1441
    %v1443 = vand.u32 %v1290, 4294901760
    %v1444 = vsub.f32 %v1290, %v1443
    %v1445 = vand.u32 %v1444, 4294901760
    %1446 = vmatpush.msra.mxu0 %v1445
    %v1447 = vand.u32 %v1289, 4294901760
    %v1448 = vsub.f32 %v1289, %v1447
    %v1449 = vand.u32 %v1448, 4294901760
    %1450 = vmatpush.msra.mxu0 %v1449
    %v1451 = vand.u32 %v1294, 4294901760
    %1452 = vmatmul.f32.gmra.mxu0 %v1451
    %v1453 = vpop.f32.mrf.mxu0
    %v1454 = vadd.f32 %v1421, %v1453
    %1455 = vdwg.mxu0
    %1456 = vmatpush.msra.mxu0 0.0
    %1457 = vmatpush.msra.mxu0 0.0
    %1458 = vmatpush.msra.mxu0 0.0
    %1459 = vmatpush.msra.mxu0 0.0
    %1460 = vmatpush.msra.mxu0 0.0
    %1461 = vmatpush.msra.mxu0 0.0
    %1462 = vmatpush.msra.mxu0 0.0
    %1463 = vmatpush.msra.mxu0 0.0
    %1464 = vmatpush.msra.mxu0 0.0
    %1465 = vmatpush.msra.mxu0 0.0
    %1466 = vmatpush.msra.mxu0 0.0
    %1467 = vmatpush.msra.mxu0 0.0
    %v1468 = vand.u32 %v1292, 4294901760
    %1469 = vmatpush.msra.mxu0 %v1468
    %v1470 = vand.u32 %v1291, 4294901760
    %1471 = vmatpush.msra.mxu0 %v1470
    %v1472 = vand.u32 %v1290, 4294901760
    %1473 = vmatpush.msra.mxu0 %v1472
    %v1474 = vand.u32 %v1289, 4294901760
    %1475 = vmatpush.msra.mxu0 %v1474
    %v1476 = vand.u32 %v1294, 4294901760
    %1477 = vmatmul.f32.gmra.mxu0 %v1476
    %v1478 = vpop.f32.mrf.mxu0
    %v1479 = vadd.f32 %v1454, %v1478
    %1480 = vdwg.mxu0
    %v1482 = vsel %vm174, %v1283, 0
    %1484 = vmatpush.msra.mxu0 0.0
    %1485 = vmatpush.msra.mxu0 0.0
    %1486 = vmatpush.msra.mxu0 0.0
    %1487 = vmatpush.msra.mxu0 0.0
    %1488 = vmatpush.msra.mxu0 0.0
    %1489 = vmatpush.msra.mxu0 0.0
    %1490 = vmatpush.msra.mxu0 0.0
    %1491 = vmatpush.msra.mxu0 0.0
    %1492 = vmatpush.msra.mxu0 0.0
    %1493 = vmatpush.msra.mxu0 0.0
    %1494 = vmatpush.msra.mxu0 0.0
    %1495 = vmatpush.msra.mxu0 0.0
    %v1496 = vand.u32 %v1288, 4294901760
    %1497 = vmatpush.msra.mxu0 %v1496
    %v1498 = vand.u32 %v1287, 4294901760
    %1499 = vmatpush.msra.mxu0 %v1498
    %v1500 = vand.u32 %v1286, 4294901760
    %1501 = vmatpush.msra.mxu0 %v1500
    %v1502 = vand.u32 %v1285, 4294901760
    %1503 = vmatpush.msra.mxu0 %v1502
    %v1504 = vand.u32 %v1482, 4294901760
    %v1505 = vsub.f32 %v1482, %v1504
    %v1506 = vand.u32 %v1505, 4294901760
    %v1507 = vsub.f32 %v1505, %v1506
    %v1508 = vand.u32 %v1507, 4294901760
    %1509 = vmatmul.f32.gmra.mxu0 %v1508
    %v1510 = vpop.f32.mrf.mxu0
    %v1511 = vadd.f32 %v1479, %v1510
    %1512 = vdwg.mxu0
    %1513 = vmatpush.msra.mxu0 0.0
    %1514 = vmatpush.msra.mxu0 0.0
    %1515 = vmatpush.msra.mxu0 0.0
    %1516 = vmatpush.msra.mxu0 0.0
    %1517 = vmatpush.msra.mxu0 0.0
    %1518 = vmatpush.msra.mxu0 0.0
    %1519 = vmatpush.msra.mxu0 0.0
    %1520 = vmatpush.msra.mxu0 0.0
    %1521 = vmatpush.msra.mxu0 0.0
    %1522 = vmatpush.msra.mxu0 0.0
    %1523 = vmatpush.msra.mxu0 0.0
    %1524 = vmatpush.msra.mxu0 0.0
    %v1525 = vand.u32 %v1288, 4294901760
    %v1526 = vsub.f32 %v1288, %v1525
    %v1527 = vand.u32 %v1526, 4294901760
    %v1528 = vsub.f32 %v1526, %v1527
    %v1529 = vand.u32 %v1528, 4294901760
    %1530 = vmatpush.msra.mxu0 %v1529
    %v1531 = vand.u32 %v1287, 4294901760
    %v1532 = vsub.f32 %v1287, %v1531
    %v1533 = vand.u32 %v1532, 4294901760
    %v1534 = vsub.f32 %v1532, %v1533
    %v1535 = vand.u32 %v1534, 4294901760
    %1536 = vmatpush.msra.mxu0 %v1535
    %v1537 = vand.u32 %v1286, 4294901760
    %v1538 = vsub.f32 %v1286, %v1537
    %v1539 = vand.u32 %v1538, 4294901760
    %v1540 = vsub.f32 %v1538, %v1539
    %v1541 = vand.u32 %v1540, 4294901760
    %1542 = vmatpush.msra.mxu0 %v1541
    %v1543 = vand.u32 %v1285, 4294901760
    %v1544 = vsub.f32 %v1285, %v1543
    %v1545 = vand.u32 %v1544, 4294901760
    %v1546 = vsub.f32 %v1544, %v1545
    %v1547 = vand.u32 %v1546, 4294901760
    %1548 = vmatpush.msra.mxu0 %v1547
    %v1549 = vand.u32 %v1482, 4294901760
    %1550 = vmatmul.f32.gmra.mxu0 %v1549
    %v1551 = vpop.f32.mrf.mxu0
    %v1552 = vadd.f32 %v1511, %v1551
    %1553 = vdwg.mxu0
    %1554 = vmatpush.msra.mxu0 0.0
    %1555 = vmatpush.msra.mxu0 0.0
    %1556 = vmatpush.msra.mxu0 0.0
    %1557 = vmatpush.msra.mxu0 0.0
    %1558 = vmatpush.msra.mxu0 0.0
    %1559 = vmatpush.msra.mxu0 0.0
    %1560 = vmatpush.msra.mxu0 0.0
    %1561 = vmatpush.msra.mxu0 0.0
    %1562 = vmatpush.msra.mxu0 0.0
    %1563 = vmatpush.msra.mxu0 0.0
    %1564 = vmatpush.msra.mxu0 0.0
    %1565 = vmatpush.msra.mxu0 0.0
    %v1566 = vand.u32 %v1288, 4294901760
    %v1567 = vsub.f32 %v1288, %v1566
    %1568 = vmatpush.msra.mxu0 %v1567
    %v1569 = vand.u32 %v1287, 4294901760
    %v1570 = vsub.f32 %v1287, %v1569
    %1571 = vmatpush.msra.mxu0 %v1570
    %v1572 = vand.u32 %v1286, 4294901760
    %v1573 = vsub.f32 %v1286, %v1572
    %1574 = vmatpush.msra.mxu0 %v1573
    %v1575 = vand.u32 %v1285, 4294901760
    %v1576 = vsub.f32 %v1285, %v1575
    %1577 = vmatpush.msra.mxu0 %v1576
    %v1578 = vand.u32 %v1482, 4294901760
    %v1579 = vsub.f32 %v1482, %v1578
    %1580 = vmatmul.f32.gmra.mxu0 %v1579
    %v1581 = vpop.f32.mrf.mxu0
    %v1582 = vadd.f32 %v1552, %v1581
    %1583 = vdwg.mxu0
    %1584 = vmatpush.msra.mxu0 0.0
    %1585 = vmatpush.msra.mxu0 0.0
    %1586 = vmatpush.msra.mxu0 0.0
    %1587 = vmatpush.msra.mxu0 0.0
    %1588 = vmatpush.msra.mxu0 0.0
    %1589 = vmatpush.msra.mxu0 0.0
    %1590 = vmatpush.msra.mxu0 0.0
    %1591 = vmatpush.msra.mxu0 0.0
    %1592 = vmatpush.msra.mxu0 0.0
    %1593 = vmatpush.msra.mxu0 0.0
    %1594 = vmatpush.msra.mxu0 0.0
    %1595 = vmatpush.msra.mxu0 0.0
    %v1596 = vand.u32 %v1288, 4294901760
    %1597 = vmatpush.msra.mxu0 %v1596
    %v1598 = vand.u32 %v1287, 4294901760
    %1599 = vmatpush.msra.mxu0 %v1598
    %v1600 = vand.u32 %v1286, 4294901760
    %1601 = vmatpush.msra.mxu0 %v1600
    %v1602 = vand.u32 %v1285, 4294901760
    %1603 = vmatpush.msra.mxu0 %v1602
    %v1604 = vand.u32 %v1482, 4294901760
    %v1605 = vsub.f32 %v1482, %v1604
    %v1606 = vand.u32 %v1605, 4294901760
    %1607 = vmatmul.f32.gmra.mxu0 %v1606
    %v1608 = vpop.f32.mrf.mxu0
    %v1609 = vadd.f32 %v1582, %v1608
    %1610 = vdwg.mxu0
    %1611 = vmatpush.msra.mxu0 0.0
    %1612 = vmatpush.msra.mxu0 0.0
    %1613 = vmatpush.msra.mxu0 0.0
    %1614 = vmatpush.msra.mxu0 0.0
    %1615 = vmatpush.msra.mxu0 0.0
    %1616 = vmatpush.msra.mxu0 0.0
    %1617 = vmatpush.msra.mxu0 0.0
    %1618 = vmatpush.msra.mxu0 0.0
    %1619 = vmatpush.msra.mxu0 0.0
    %1620 = vmatpush.msra.mxu0 0.0
    %1621 = vmatpush.msra.mxu0 0.0
    %1622 = vmatpush.msra.mxu0 0.0
    %v1623 = vand.u32 %v1288, 4294901760
    %v1624 = vsub.f32 %v1288, %v1623
    %v1625 = vand.u32 %v1624, 4294901760
    %1626 = vmatpush.msra.mxu0 %v1625
    %v1627 = vand.u32 %v1287, 4294901760
    %v1628 = vsub.f32 %v1287, %v1627
    %v1629 = vand.u32 %v1628, 4294901760
    %1630 = vmatpush.msra.mxu0 %v1629
    %v1631 = vand.u32 %v1286, 4294901760
    %v1632 = vsub.f32 %v1286, %v1631
    %v1633 = vand.u32 %v1632, 4294901760
    %1634 = vmatpush.msra.mxu0 %v1633
    %v1635 = vand.u32 %v1285, 4294901760
    %v1636 = vsub.f32 %v1285, %v1635
    %v1637 = vand.u32 %v1636, 4294901760
    %1638 = vmatpush.msra.mxu0 %v1637
    %v1639 = vand.u32 %v1482, 4294901760
    %1640 = vmatmul.f32.gmra.mxu0 %v1639
    %v1641 = vpop.f32.mrf.mxu0
    %v1642 = vadd.f32 %v1609, %v1641
    %1643 = vdwg.mxu0
    %1644 = vmatpush.msra.mxu0 0.0
    %1645 = vmatpush.msra.mxu0 0.0
    %1646 = vmatpush.msra.mxu0 0.0
    %1647 = vmatpush.msra.mxu0 0.0
    %1648 = vmatpush.msra.mxu0 0.0
    %1649 = vmatpush.msra.mxu0 0.0
    %1650 = vmatpush.msra.mxu0 0.0
    %1651 = vmatpush.msra.mxu0 0.0
    %1652 = vmatpush.msra.mxu0 0.0
    %1653 = vmatpush.msra.mxu0 0.0
    %1654 = vmatpush.msra.mxu0 0.0
    %1655 = vmatpush.msra.mxu0 0.0
    %v1656 = vand.u32 %v1288, 4294901760
    %1657 = vmatpush.msra.mxu0 %v1656
    %v1658 = vand.u32 %v1287, 4294901760
    %1659 = vmatpush.msra.mxu0 %v1658
    %v1660 = vand.u32 %v1286, 4294901760
    %1661 = vmatpush.msra.mxu0 %v1660
    %v1662 = vand.u32 %v1285, 4294901760
    %1663 = vmatpush.msra.mxu0 %v1662
    %v1664 = vand.u32 %v1482, 4294901760
    %1665 = vmatmul.f32.gmra.mxu0 %v1664
    %v1666 = vpop.f32.mrf.mxu0
    %v1667 = vadd.f32 %v1642, %v1666
    %1668 = vdwg.mxu0
    %v1669 = vld [vmem:[%s13] sm:$0x1]
    %v1671 = vperm.slane %v1669, 0
    %v1673 = vadd.f32 %v1667, %v1671
    %v1674 = vmax.f32 %v1673, 0.0
    %v1675 = vld [vmem:[%s14] sm:$0xff]
    %v1676 = vld [vmem:[%s14 + $0x8] sm:$0xff]
    %v1677 = vld [vmem:[%s14 + $0x10] sm:$0xff]
    %v1678 = vld [vmem:[%s14 + $0x18] sm:$0xff]
    %v1679 = vld [vmem:[%s14 + $0x20] sm:$0xff]
    %v1680 = vld [vmem:[%s14 + $0x28] sm:$0xff]
    %v1681 = vld [vmem:[%s14 + $0x30] sm:$0xff]
    %v1682 = vld [vmem:[%s14 + $0x38] sm:$0xff]
    %v1683 = vld [vmem:[%s14 + $0x40] sm:$0xff]
    %v1684 = vld [vmem:[%s14 + $0x48] sm:$0xff]
    %v1685 = vld [vmem:[%s14 + $0x50] sm:$0xff]
    %v1686 = vld [vmem:[%s14 + $0x58] sm:$0xff]
    %v1687 = vld [vmem:[%s14 + $0x60] sm:$0xff]
    %v1688 = vld [vmem:[%s14 + $0x68] sm:$0xff]
    %v1689 = vld [vmem:[%s14 + $0x70] sm:$0xff]
    %v1690 = vld [vmem:[%s14 + $0x78] sm:$0xff]
    %v1691 = vld [vmem:[%s15] sm:$0x1]
    %v1693 = vperm.slane %v1691, 0
    %v1695 = vand.u32 %v1690, 4294901760
    %1696 = vmatpush.msra.mxu0 %v1695
    %v1697 = vand.u32 %v1689, 4294901760
    %1698 = vmatpush.msra.mxu0 %v1697
    %v1699 = vand.u32 %v1688, 4294901760
    %1700 = vmatpush.msra.mxu0 %v1699
    %v1701 = vand.u32 %v1687, 4294901760
    %1702 = vmatpush.msra.mxu0 %v1701
    %v1703 = vand.u32 %v1686, 4294901760
    %1704 = vmatpush.msra.mxu0 %v1703
    %v1705 = vand.u32 %v1685, 4294901760
    %1706 = vmatpush.msra.mxu0 %v1705
    %v1707 = vand.u32 %v1684, 4294901760
    %1708 = vmatpush.msra.mxu0 %v1707
    %v1709 = vand.u32 %v1683, 4294901760
    %1710 = vmatpush.msra.mxu0 %v1709
    %v1711 = vand.u32 %v1682, 4294901760
    %1712 = vmatpush.msra.mxu0 %v1711
    %v1713 = vand.u32 %v1681, 4294901760
    %1714 = vmatpush.msra.mxu0 %v1713
    %v1715 = vand.u32 %v1680, 4294901760
    %1716 = vmatpush.msra.mxu0 %v1715
    %v1717 = vand.u32 %v1679, 4294901760
    %1718 = vmatpush.msra.mxu0 %v1717
    %v1719 = vand.u32 %v1678, 4294901760
    %1720 = vmatpush.msra.mxu0 %v1719
    %v1721 = vand.u32 %v1677, 4294901760
    %1722 = vmatpush.msra.mxu0 %v1721
    %v1723 = vand.u32 %v1676, 4294901760
    %1724 = vmatpush.msra.mxu0 %v1723
    %v1725 = vand.u32 %v1675, 4294901760
    %1726 = vmatpush.msra.mxu0 %v1725
    %v1727 = vand.u32 %v1674, 4294901760
    %v1728 = vsub.f32 %v1674, %v1727
    %v1729 = vand.u32 %v1728, 4294901760
    %v1730 = vsub.f32 %v1728, %v1729
    %v1731 = vand.u32 %v1730, 4294901760
    %1732 = vmatmul.f32.gmra.mxu0 %v1731
    %v1733 = vpop.f32.mrf.mxu0
    %v1734 = vadd.f32 %v1693, %v1733
    %1735 = vdwg.mxu0
    %v1736 = vand.u32 %v1690, 4294901760
    %v1737 = vsub.f32 %v1690, %v1736
    %v1738 = vand.u32 %v1737, 4294901760
    %v1739 = vsub.f32 %v1737, %v1738
    %v1740 = vand.u32 %v1739, 4294901760
    %1741 = vmatpush.msra.mxu0 %v1740
    %v1742 = vand.u32 %v1689, 4294901760
    %v1743 = vsub.f32 %v1689, %v1742
    %v1744 = vand.u32 %v1743, 4294901760
    %v1745 = vsub.f32 %v1743, %v1744
    %v1746 = vand.u32 %v1745, 4294901760
    %1747 = vmatpush.msra.mxu0 %v1746
    %v1748 = vand.u32 %v1688, 4294901760
    %v1749 = vsub.f32 %v1688, %v1748
    %v1750 = vand.u32 %v1749, 4294901760
    %v1751 = vsub.f32 %v1749, %v1750
    %v1752 = vand.u32 %v1751, 4294901760
    %1753 = vmatpush.msra.mxu0 %v1752
    %v1754 = vand.u32 %v1687, 4294901760
    %v1755 = vsub.f32 %v1687, %v1754
    %v1756 = vand.u32 %v1755, 4294901760
    %v1757 = vsub.f32 %v1755, %v1756
    %v1758 = vand.u32 %v1757, 4294901760
    %1759 = vmatpush.msra.mxu0 %v1758
    %v1760 = vand.u32 %v1686, 4294901760
    %v1761 = vsub.f32 %v1686, %v1760
    %v1762 = vand.u32 %v1761, 4294901760
    %v1763 = vsub.f32 %v1761, %v1762
    %v1764 = vand.u32 %v1763, 4294901760
    %1765 = vmatpush.msra.mxu0 %v1764
    %v1766 = vand.u32 %v1685, 4294901760
    %v1767 = vsub.f32 %v1685, %v1766
    %v1768 = vand.u32 %v1767, 4294901760
    %v1769 = vsub.f32 %v1767, %v1768
    %v1770 = vand.u32 %v1769, 4294901760
    %1771 = vmatpush.msra.mxu0 %v1770
    %v1772 = vand.u32 %v1684, 4294901760
    %v1773 = vsub.f32 %v1684, %v1772
    %v1774 = vand.u32 %v1773, 4294901760
    %v1775 = vsub.f32 %v1773, %v1774
    %v1776 = vand.u32 %v1775, 4294901760
    %1777 = vmatpush.msra.mxu0 %v1776
    %v1778 = vand.u32 %v1683, 4294901760
    %v1779 = vsub.f32 %v1683, %v1778
    %v1780 = vand.u32 %v1779, 4294901760
    %v1781 = vsub.f32 %v1779, %v1780
    %v1782 = vand.u32 %v1781, 4294901760
    %1783 = vmatpush.msra.mxu0 %v1782
    %v1784 = vand.u32 %v1682, 4294901760
    %v1785 = vsub.f32 %v1682, %v1784
    %v1786 = vand.u32 %v1785, 4294901760
    %v1787 = vsub.f32 %v1785, %v1786
    %v1788 = vand.u32 %v1787, 4294901760
    %1789 = vmatpush.msra.mxu0 %v1788
    %v1790 = vand.u32 %v1681, 4294901760
    %v1791 = vsub.f32 %v1681, %v1790
    %v1792 = vand.u32 %v1791, 4294901760
    %v1793 = vsub.f32 %v1791, %v1792
    %v1794 = vand.u32 %v1793, 4294901760
    %1795 = vmatpush.msra.mxu0 %v1794
    %v1796 = vand.u32 %v1680, 4294901760
    %v1797 = vsub.f32 %v1680, %v1796
    %v1798 = vand.u32 %v1797, 4294901760
    %v1799 = vsub.f32 %v1797, %v1798
    %v1800 = vand.u32 %v1799, 4294901760
    %1801 = vmatpush.msra.mxu0 %v1800
    %v1802 = vand.u32 %v1679, 4294901760
    %v1803 = vsub.f32 %v1679, %v1802
    %v1804 = vand.u32 %v1803, 4294901760
    %v1805 = vsub.f32 %v1803, %v1804
    %v1806 = vand.u32 %v1805, 4294901760
    %1807 = vmatpush.msra.mxu0 %v1806
    %v1808 = vand.u32 %v1678, 4294901760
    %v1809 = vsub.f32 %v1678, %v1808
    %v1810 = vand.u32 %v1809, 4294901760
    %v1811 = vsub.f32 %v1809, %v1810
    %v1812 = vand.u32 %v1811, 4294901760
    %1813 = vmatpush.msra.mxu0 %v1812
    %v1814 = vand.u32 %v1677, 4294901760
    %v1815 = vsub.f32 %v1677, %v1814
    %v1816 = vand.u32 %v1815, 4294901760
    %v1817 = vsub.f32 %v1815, %v1816
    %v1818 = vand.u32 %v1817, 4294901760
    %1819 = vmatpush.msra.mxu0 %v1818
    %v1820 = vand.u32 %v1676, 4294901760
    %v1821 = vsub.f32 %v1676, %v1820
    %v1822 = vand.u32 %v1821, 4294901760
    %v1823 = vsub.f32 %v1821, %v1822
    %v1824 = vand.u32 %v1823, 4294901760
    %1825 = vmatpush.msra.mxu0 %v1824
    %v1826 = vand.u32 %v1675, 4294901760
    %v1827 = vsub.f32 %v1675, %v1826
    %v1828 = vand.u32 %v1827, 4294901760
    %v1829 = vsub.f32 %v1827, %v1828
    %v1830 = vand.u32 %v1829, 4294901760
    %1831 = vmatpush.msra.mxu0 %v1830
    %v1832 = vand.u32 %v1674, 4294901760
    %1833 = vmatmul.f32.gmra.mxu0 %v1832
    %v1834 = vpop.f32.mrf.mxu0
    %v1835 = vadd.f32 %v1734, %v1834
    %1836 = vdwg.mxu0
    %v1837 = vand.u32 %v1690, 4294901760
    %v1838 = vsub.f32 %v1690, %v1837
    %1839 = vmatpush.msra.mxu0 %v1838
    %v1840 = vand.u32 %v1689, 4294901760
    %v1841 = vsub.f32 %v1689, %v1840
    %1842 = vmatpush.msra.mxu0 %v1841
    %v1843 = vand.u32 %v1688, 4294901760
    %v1844 = vsub.f32 %v1688, %v1843
    %1845 = vmatpush.msra.mxu0 %v1844
    %v1846 = vand.u32 %v1687, 4294901760
    %v1847 = vsub.f32 %v1687, %v1846
    %1848 = vmatpush.msra.mxu0 %v1847
    %v1849 = vand.u32 %v1686, 4294901760
    %v1850 = vsub.f32 %v1686, %v1849
    %1851 = vmatpush.msra.mxu0 %v1850
    %v1852 = vand.u32 %v1685, 4294901760
    %v1853 = vsub.f32 %v1685, %v1852
    %1854 = vmatpush.msra.mxu0 %v1853
    %v1855 = vand.u32 %v1684, 4294901760
    %v1856 = vsub.f32 %v1684, %v1855
    %1857 = vmatpush.msra.mxu0 %v1856
    %v1858 = vand.u32 %v1683, 4294901760
    %v1859 = vsub.f32 %v1683, %v1858
    %1860 = vmatpush.msra.mxu0 %v1859
    %v1861 = vand.u32 %v1682, 4294901760
    %v1862 = vsub.f32 %v1682, %v1861
    %1863 = vmatpush.msra.mxu0 %v1862
    %v1864 = vand.u32 %v1681, 4294901760
    %v1865 = vsub.f32 %v1681, %v1864
    %1866 = vmatpush.msra.mxu0 %v1865
    %v1867 = vand.u32 %v1680, 4294901760
    %v1868 = vsub.f32 %v1680, %v1867
    %1869 = vmatpush.msra.mxu0 %v1868
    %v1870 = vand.u32 %v1679, 4294901760
    %v1871 = vsub.f32 %v1679, %v1870
    %1872 = vmatpush.msra.mxu0 %v1871
    %v1873 = vand.u32 %v1678, 4294901760
    %v1874 = vsub.f32 %v1678, %v1873
    %1875 = vmatpush.msra.mxu0 %v1874
    %v1876 = vand.u32 %v1677, 4294901760
    %v1877 = vsub.f32 %v1677, %v1876
    %1878 = vmatpush.msra.mxu0 %v1877
    %v1879 = vand.u32 %v1676, 4294901760
    %v1880 = vsub.f32 %v1676, %v1879
    %1881 = vmatpush.msra.mxu0 %v1880
    %v1882 = vand.u32 %v1675, 4294901760
    %v1883 = vsub.f32 %v1675, %v1882
    %1884 = vmatpush.msra.mxu0 %v1883
    %v1885 = vand.u32 %v1674, 4294901760
    %v1886 = vsub.f32 %v1674, %v1885
    %1887 = vmatmul.f32.gmra.mxu0 %v1886
    %v1888 = vpop.f32.mrf.mxu0
    %v1889 = vadd.f32 %v1835, %v1888
    %1890 = vdwg.mxu0
    %v1891 = vand.u32 %v1690, 4294901760
    %1892 = vmatpush.msra.mxu0 %v1891
    %v1893 = vand.u32 %v1689, 4294901760
    %1894 = vmatpush.msra.mxu0 %v1893
    %v1895 = vand.u32 %v1688, 4294901760
    %1896 = vmatpush.msra.mxu0 %v1895
    %v1897 = vand.u32 %v1687, 4294901760
    %1898 = vmatpush.msra.mxu0 %v1897
    %v1899 = vand.u32 %v1686, 4294901760
    %1900 = vmatpush.msra.mxu0 %v1899
    %v1901 = vand.u32 %v1685, 4294901760
    %1902 = vmatpush.msra.mxu0 %v1901
    %v1903 = vand.u32 %v1684, 4294901760
    %1904 = vmatpush.msra.mxu0 %v1903
    %v1905 = vand.u32 %v1683, 4294901760
    %1906 = vmatpush.msra.mxu0 %v1905
    %v1907 = vand.u32 %v1682, 4294901760
    %1908 = vmatpush.msra.mxu0 %v1907
    %v1909 = vand.u32 %v1681, 4294901760
    %1910 = vmatpush.msra.mxu0 %v1909
    %v1911 = vand.u32 %v1680, 4294901760
    %1912 = vmatpush.msra.mxu0 %v1911
    %v1913 = vand.u32 %v1679, 4294901760
    %1914 = vmatpush.msra.mxu0 %v1913
    %v1915 = vand.u32 %v1678, 4294901760
    %1916 = vmatpush.msra.mxu0 %v1915
    %v1917 = vand.u32 %v1677, 4294901760
    %1918 = vmatpush.msra.mxu0 %v1917
    %v1919 = vand.u32 %v1676, 4294901760
    %1920 = vmatpush.msra.mxu0 %v1919
    %v1921 = vand.u32 %v1675, 4294901760
    %1922 = vmatpush.msra.mxu0 %v1921
    %v1923 = vand.u32 %v1674, 4294901760
    %v1924 = vsub.f32 %v1674, %v1923
    %v1925 = vand.u32 %v1924, 4294901760
    %1926 = vmatmul.f32.gmra.mxu0 %v1925
    %v1927 = vpop.f32.mrf.mxu0
    %v1928 = vadd.f32 %v1889, %v1927
    %1929 = vdwg.mxu0
    %v1930 = vand.u32 %v1690, 4294901760
    %v1931 = vsub.f32 %v1690, %v1930
    %v1932 = vand.u32 %v1931, 4294901760
    %1933 = vmatpush.msra.mxu0 %v1932
    %v1934 = vand.u32 %v1689, 4294901760
    %v1935 = vsub.f32 %v1689, %v1934
    %v1936 = vand.u32 %v1935, 4294901760
    %1937 = vmatpush.msra.mxu0 %v1936
    %v1938 = vand.u32 %v1688, 4294901760
    %v1939 = vsub.f32 %v1688, %v1938
    %v1940 = vand.u32 %v1939, 4294901760
    %1941 = vmatpush.msra.mxu0 %v1940
    %v1942 = vand.u32 %v1687, 4294901760
    %v1943 = vsub.f32 %v1687, %v1942
    %v1944 = vand.u32 %v1943, 4294901760
    %1945 = vmatpush.msra.mxu0 %v1944
    %v1946 = vand.u32 %v1686, 4294901760
    %v1947 = vsub.f32 %v1686, %v1946
    %v1948 = vand.u32 %v1947, 4294901760
    %1949 = vmatpush.msra.mxu0 %v1948
    %v1950 = vand.u32 %v1685, 4294901760
    %v1951 = vsub.f32 %v1685, %v1950
    %v1952 = vand.u32 %v1951, 4294901760
    %1953 = vmatpush.msra.mxu0 %v1952
    %v1954 = vand.u32 %v1684, 4294901760
    %v1955 = vsub.f32 %v1684, %v1954
    %v1956 = vand.u32 %v1955, 4294901760
    %1957 = vmatpush.msra.mxu0 %v1956
    %v1958 = vand.u32 %v1683, 4294901760
    %v1959 = vsub.f32 %v1683, %v1958
    %v1960 = vand.u32 %v1959, 4294901760
    %1961 = vmatpush.msra.mxu0 %v1960
    %v1962 = vand.u32 %v1682, 4294901760
    %v1963 = vsub.f32 %v1682, %v1962
    %v1964 = vand.u32 %v1963, 4294901760
    %1965 = vmatpush.msra.mxu0 %v1964
    %v1966 = vand.u32 %v1681, 4294901760
    %v1967 = vsub.f32 %v1681, %v1966
    %v1968 = vand.u32 %v1967, 4294901760
    %1969 = vmatpush.msra.mxu0 %v1968
    %v1970 = vand.u32 %v1680, 4294901760
    %v1971 = vsub.f32 %v1680, %v1970
    %v1972 = vand.u32 %v1971, 4294901760
    %1973 = vmatpush.msra.mxu0 %v1972
    %v1974 = vand.u32 %v1679, 4294901760
    %v1975 = vsub.f32 %v1679, %v1974
    %v1976 = vand.u32 %v1975, 4294901760
    %1977 = vmatpush.msra.mxu0 %v1976
    %v1978 = vand.u32 %v1678, 4294901760
    %v1979 = vsub.f32 %v1678, %v1978
    %v1980 = vand.u32 %v1979, 4294901760
    %1981 = vmatpush.msra.mxu0 %v1980
    %v1982 = vand.u32 %v1677, 4294901760
    %v1983 = vsub.f32 %v1677, %v1982
    %v1984 = vand.u32 %v1983, 4294901760
    %1985 = vmatpush.msra.mxu0 %v1984
    %v1986 = vand.u32 %v1676, 4294901760
    %v1987 = vsub.f32 %v1676, %v1986
    %v1988 = vand.u32 %v1987, 4294901760
    %1989 = vmatpush.msra.mxu0 %v1988
    %v1990 = vand.u32 %v1675, 4294901760
    %v1991 = vsub.f32 %v1675, %v1990
    %v1992 = vand.u32 %v1991, 4294901760
    %1993 = vmatpush.msra.mxu0 %v1992
    %v1994 = vand.u32 %v1674, 4294901760
    %1995 = vmatmul.f32.gmra.mxu0 %v1994
    %v1996 = vpop.f32.mrf.mxu0
    %v1997 = vadd.f32 %v1928, %v1996
    %1998 = vdwg.mxu0
    %v1999 = vand.u32 %v1690, 4294901760
    %2000 = vmatpush.msra.mxu0 %v1999
    %v2001 = vand.u32 %v1689, 4294901760
    %2002 = vmatpush.msra.mxu0 %v2001
    %v2003 = vand.u32 %v1688, 4294901760
    %2004 = vmatpush.msra.mxu0 %v2003
    %v2005 = vand.u32 %v1687, 4294901760
    %2006 = vmatpush.msra.mxu0 %v2005
    %v2007 = vand.u32 %v1686, 4294901760
    %2008 = vmatpush.msra.mxu0 %v2007
    %v2009 = vand.u32 %v1685, 4294901760
    %2010 = vmatpush.msra.mxu0 %v2009
    %v2011 = vand.u32 %v1684, 4294901760
    %2012 = vmatpush.msra.mxu0 %v2011
    %v2013 = vand.u32 %v1683, 4294901760
    %2014 = vmatpush.msra.mxu0 %v2013
    %v2015 = vand.u32 %v1682, 4294901760
    %2016 = vmatpush.msra.mxu0 %v2015
    %v2017 = vand.u32 %v1681, 4294901760
    %2018 = vmatpush.msra.mxu0 %v2017
    %v2019 = vand.u32 %v1680, 4294901760
    %2020 = vmatpush.msra.mxu0 %v2019
    %v2021 = vand.u32 %v1679, 4294901760
    %2022 = vmatpush.msra.mxu0 %v2021
    %v2023 = vand.u32 %v1678, 4294901760
    %2024 = vmatpush.msra.mxu0 %v2023
    %v2025 = vand.u32 %v1677, 4294901760
    %2026 = vmatpush.msra.mxu0 %v2025
    %v2027 = vand.u32 %v1676, 4294901760
    %2028 = vmatpush.msra.mxu0 %v2027
    %v2029 = vand.u32 %v1675, 4294901760
    %2030 = vmatpush.msra.mxu0 %v2029
    %v2031 = vand.u32 %v1674, 4294901760
    %2032 = vmatmul.f32.gmra.mxu0 %v2031
    %v2033 = vpop.f32.mrf.mxu0
    %v2034 = vadd.f32 %v1997, %v2033
    %2035 = vdwg.mxu0
    %v2036 = vmax.f32 %v2034, 0.0
    %v2037 = vld [vmem:[%s16] sm:$0xff]
    %v2038 = vld [vmem:[%s16 + $0x8] sm:$0xff]
    %v2039 = vld [vmem:[%s16 + $0x10] sm:$0xff]
    %v2040 = vld [vmem:[%s16 + $0x18] sm:$0xff]
    %v2041 = vld [vmem:[%s16 + $0x20] sm:$0xff]
    %v2042 = vld [vmem:[%s16 + $0x28] sm:$0xff]
    %v2043 = vld [vmem:[%s16 + $0x30] sm:$0xff]
    %v2044 = vld [vmem:[%s16 + $0x38] sm:$0xff]
    %v2045 = vld [vmem:[%s16 + $0x40] sm:$0xff]
    %v2046 = vld [vmem:[%s16 + $0x48] sm:$0xff]
    %v2047 = vld [vmem:[%s16 + $0x50] sm:$0xff]
    %v2048 = vld [vmem:[%s16 + $0x58] sm:$0xff]
    %v2049 = vld [vmem:[%s16 + $0x60] sm:$0xff]
    %v2050 = vld [vmem:[%s16 + $0x68] sm:$0xff]
    %v2051 = vld [vmem:[%s16 + $0x70] sm:$0xff]
    %v2052 = vld [vmem:[%s16 + $0x78] sm:$0xff]
    %v2053 = vld [vmem:[%s17] sm:$0x1]
    %v2055 = vperm.slane %v2053, 0
    %v2057 = vand.u32 %v2052, 4294901760
    %2058 = vmatpush.msra.mxu0 %v2057
    %v2059 = vand.u32 %v2051, 4294901760
    %2060 = vmatpush.msra.mxu0 %v2059
    %v2061 = vand.u32 %v2050, 4294901760
    %2062 = vmatpush.msra.mxu0 %v2061
    %v2063 = vand.u32 %v2049, 4294901760
    %2064 = vmatpush.msra.mxu0 %v2063
    %v2065 = vand.u32 %v2048, 4294901760
    %2066 = vmatpush.msra.mxu0 %v2065
    %v2067 = vand.u32 %v2047, 4294901760
    %2068 = vmatpush.msra.mxu0 %v2067
    %v2069 = vand.u32 %v2046, 4294901760
    %2070 = vmatpush.msra.mxu0 %v2069
    %v2071 = vand.u32 %v2045, 4294901760
    %2072 = vmatpush.msra.mxu0 %v2071
    %v2073 = vand.u32 %v2044, 4294901760
    %2074 = vmatpush.msra.mxu0 %v2073
    %v2075 = vand.u32 %v2043, 4294901760
    %2076 = vmatpush.msra.mxu0 %v2075
    %v2077 = vand.u32 %v2042, 4294901760
    %2078 = vmatpush.msra.mxu0 %v2077
    %v2079 = vand.u32 %v2041, 4294901760
    %2080 = vmatpush.msra.mxu0 %v2079
    %v2081 = vand.u32 %v2040, 4294901760
    %2082 = vmatpush.msra.mxu0 %v2081
    %v2083 = vand.u32 %v2039, 4294901760
    %2084 = vmatpush.msra.mxu0 %v2083
    %v2085 = vand.u32 %v2038, 4294901760
    %2086 = vmatpush.msra.mxu0 %v2085
    %v2087 = vand.u32 %v2037, 4294901760
    %2088 = vmatpush.msra.mxu0 %v2087
    %v2089 = vand.u32 %v2036, 4294901760
    %v2090 = vsub.f32 %v2036, %v2089
    %v2091 = vand.u32 %v2090, 4294901760
    %v2092 = vsub.f32 %v2090, %v2091
    %v2093 = vand.u32 %v2092, 4294901760
    %2094 = vmatmul.f32.gmra.mxu0 %v2093
    %v2095 = vpop.f32.mrf.mxu0
    %v2096 = vadd.f32 %v2055, %v2095
    %2097 = vdwg.mxu0
    %v2098 = vand.u32 %v2052, 4294901760
    %v2099 = vsub.f32 %v2052, %v2098
    %v2100 = vand.u32 %v2099, 4294901760
    %v2101 = vsub.f32 %v2099, %v2100
    %v2102 = vand.u32 %v2101, 4294901760
    %2103 = vmatpush.msra.mxu0 %v2102
    %v2104 = vand.u32 %v2051, 4294901760
    %v2105 = vsub.f32 %v2051, %v2104
    %v2106 = vand.u32 %v2105, 4294901760
    %v2107 = vsub.f32 %v2105, %v2106
    %v2108 = vand.u32 %v2107, 4294901760
    %2109 = vmatpush.msra.mxu0 %v2108
    %v2110 = vand.u32 %v2050, 4294901760
    %v2111 = vsub.f32 %v2050, %v2110
    %v2112 = vand.u32 %v2111, 4294901760
    %v2113 = vsub.f32 %v2111, %v2112
    %v2114 = vand.u32 %v2113, 4294901760
    %2115 = vmatpush.msra.mxu0 %v2114
    %v2116 = vand.u32 %v2049, 4294901760
    %v2117 = vsub.f32 %v2049, %v2116
    %v2118 = vand.u32 %v2117, 4294901760
    %v2119 = vsub.f32 %v2117, %v2118
    %v2120 = vand.u32 %v2119, 4294901760
    %2121 = vmatpush.msra.mxu0 %v2120
    %v2122 = vand.u32 %v2048, 4294901760
    %v2123 = vsub.f32 %v2048, %v2122
    %v2124 = vand.u32 %v2123, 4294901760
    %v2125 = vsub.f32 %v2123, %v2124
    %v2126 = vand.u32 %v2125, 4294901760
    %2127 = vmatpush.msra.mxu0 %v2126
    %v2128 = vand.u32 %v2047, 4294901760
    %v2129 = vsub.f32 %v2047, %v2128
    %v2130 = vand.u32 %v2129, 4294901760
    %v2131 = vsub.f32 %v2129, %v2130
    %v2132 = vand.u32 %v2131, 4294901760
    %2133 = vmatpush.msra.mxu0 %v2132
    %v2134 = vand.u32 %v2046, 4294901760
    %v2135 = vsub.f32 %v2046, %v2134
    %v2136 = vand.u32 %v2135, 4294901760
    %v2137 = vsub.f32 %v2135, %v2136
    %v2138 = vand.u32 %v2137, 4294901760
    %2139 = vmatpush.msra.mxu0 %v2138
    %v2140 = vand.u32 %v2045, 4294901760
    %v2141 = vsub.f32 %v2045, %v2140
    %v2142 = vand.u32 %v2141, 4294901760
    %v2143 = vsub.f32 %v2141, %v2142
    %v2144 = vand.u32 %v2143, 4294901760
    %2145 = vmatpush.msra.mxu0 %v2144
    %v2146 = vand.u32 %v2044, 4294901760
    %v2147 = vsub.f32 %v2044, %v2146
    %v2148 = vand.u32 %v2147, 4294901760
    %v2149 = vsub.f32 %v2147, %v2148
    %v2150 = vand.u32 %v2149, 4294901760
    %2151 = vmatpush.msra.mxu0 %v2150
    %v2152 = vand.u32 %v2043, 4294901760
    %v2153 = vsub.f32 %v2043, %v2152
    %v2154 = vand.u32 %v2153, 4294901760
    %v2155 = vsub.f32 %v2153, %v2154
    %v2156 = vand.u32 %v2155, 4294901760
    %2157 = vmatpush.msra.mxu0 %v2156
    %v2158 = vand.u32 %v2042, 4294901760
    %v2159 = vsub.f32 %v2042, %v2158
    %v2160 = vand.u32 %v2159, 4294901760
    %v2161 = vsub.f32 %v2159, %v2160
    %v2162 = vand.u32 %v2161, 4294901760
    %2163 = vmatpush.msra.mxu0 %v2162
    %v2164 = vand.u32 %v2041, 4294901760
    %v2165 = vsub.f32 %v2041, %v2164
    %v2166 = vand.u32 %v2165, 4294901760
    %v2167 = vsub.f32 %v2165, %v2166
    %v2168 = vand.u32 %v2167, 4294901760
    %2169 = vmatpush.msra.mxu0 %v2168
    %v2170 = vand.u32 %v2040, 4294901760
    %v2171 = vsub.f32 %v2040, %v2170
    %v2172 = vand.u32 %v2171, 4294901760
    %v2173 = vsub.f32 %v2171, %v2172
    %v2174 = vand.u32 %v2173, 4294901760
    %2175 = vmatpush.msra.mxu0 %v2174
    %v2176 = vand.u32 %v2039, 4294901760
    %v2177 = vsub.f32 %v2039, %v2176
    %v2178 = vand.u32 %v2177, 4294901760
    %v2179 = vsub.f32 %v2177, %v2178
    %v2180 = vand.u32 %v2179, 4294901760
    %2181 = vmatpush.msra.mxu0 %v2180
    %v2182 = vand.u32 %v2038, 4294901760
    %v2183 = vsub.f32 %v2038, %v2182
    %v2184 = vand.u32 %v2183, 4294901760
    %v2185 = vsub.f32 %v2183, %v2184
    %v2186 = vand.u32 %v2185, 4294901760
    %2187 = vmatpush.msra.mxu0 %v2186
    %v2188 = vand.u32 %v2037, 4294901760
    %v2189 = vsub.f32 %v2037, %v2188
    %v2190 = vand.u32 %v2189, 4294901760
    %v2191 = vsub.f32 %v2189, %v2190
    %v2192 = vand.u32 %v2191, 4294901760
    %2193 = vmatpush.msra.mxu0 %v2192
    %v2194 = vand.u32 %v2036, 4294901760
    %2195 = vmatmul.f32.gmra.mxu0 %v2194
    %v2196 = vpop.f32.mrf.mxu0
    %v2197 = vadd.f32 %v2096, %v2196
    %2198 = vdwg.mxu0
    %v2199 = vand.u32 %v2052, 4294901760
    %v2200 = vsub.f32 %v2052, %v2199
    %2201 = vmatpush.msra.mxu0 %v2200
    %v2202 = vand.u32 %v2051, 4294901760
    %v2203 = vsub.f32 %v2051, %v2202
    %2204 = vmatpush.msra.mxu0 %v2203
    %v2205 = vand.u32 %v2050, 4294901760
    %v2206 = vsub.f32 %v2050, %v2205
    %2207 = vmatpush.msra.mxu0 %v2206
    %v2208 = vand.u32 %v2049, 4294901760
    %v2209 = vsub.f32 %v2049, %v2208
    %2210 = vmatpush.msra.mxu0 %v2209
    %v2211 = vand.u32 %v2048, 4294901760
    %v2212 = vsub.f32 %v2048, %v2211
    %2213 = vmatpush.msra.mxu0 %v2212
    %v2214 = vand.u32 %v2047, 4294901760
    %v2215 = vsub.f32 %v2047, %v2214
    %2216 = vmatpush.msra.mxu0 %v2215
    %v2217 = vand.u32 %v2046, 4294901760
    %v2218 = vsub.f32 %v2046, %v2217
    %2219 = vmatpush.msra.mxu0 %v2218
    %v2220 = vand.u32 %v2045, 4294901760
    %v2221 = vsub.f32 %v2045, %v2220
    %2222 = vmatpush.msra.mxu0 %v2221
    %v2223 = vand.u32 %v2044, 4294901760
    %v2224 = vsub.f32 %v2044, %v2223
    %2225 = vmatpush.msra.mxu0 %v2224
    %v2226 = vand.u32 %v2043, 4294901760
    %v2227 = vsub.f32 %v2043, %v2226
    %2228 = vmatpush.msra.mxu0 %v2227
    %v2229 = vand.u32 %v2042, 4294901760
    %v2230 = vsub.f32 %v2042, %v2229
    %2231 = vmatpush.msra.mxu0 %v2230
    %v2232 = vand.u32 %v2041, 4294901760
    %v2233 = vsub.f32 %v2041, %v2232
    %2234 = vmatpush.msra.mxu0 %v2233
    %v2235 = vand.u32 %v2040, 4294901760
    %v2236 = vsub.f32 %v2040, %v2235
    %2237 = vmatpush.msra.mxu0 %v2236
    %v2238 = vand.u32 %v2039, 4294901760
    %v2239 = vsub.f32 %v2039, %v2238
    %2240 = vmatpush.msra.mxu0 %v2239
    %v2241 = vand.u32 %v2038, 4294901760
    %v2242 = vsub.f32 %v2038, %v2241
    %2243 = vmatpush.msra.mxu0 %v2242
    %v2244 = vand.u32 %v2037, 4294901760
    %v2245 = vsub.f32 %v2037, %v2244
    %2246 = vmatpush.msra.mxu0 %v2245
    %v2247 = vand.u32 %v2036, 4294901760
    %v2248 = vsub.f32 %v2036, %v2247
    %2249 = vmatmul.f32.gmra.mxu0 %v2248
    %v2250 = vpop.f32.mrf.mxu0
    %v2251 = vadd.f32 %v2197, %v2250
    %2252 = vdwg.mxu0
    %v2253 = vand.u32 %v2052, 4294901760
    %2254 = vmatpush.msra.mxu0 %v2253
    %v2255 = vand.u32 %v2051, 4294901760
    %2256 = vmatpush.msra.mxu0 %v2255
    %v2257 = vand.u32 %v2050, 4294901760
    %2258 = vmatpush.msra.mxu0 %v2257
    %v2259 = vand.u32 %v2049, 4294901760
    %2260 = vmatpush.msra.mxu0 %v2259
    %v2261 = vand.u32 %v2048, 4294901760
    %2262 = vmatpush.msra.mxu0 %v2261
    %v2263 = vand.u32 %v2047, 4294901760
    %2264 = vmatpush.msra.mxu0 %v2263
    %v2265 = vand.u32 %v2046, 4294901760
    %2266 = vmatpush.msra.mxu0 %v2265
    %v2267 = vand.u32 %v2045, 4294901760
    %2268 = vmatpush.msra.mxu0 %v2267
    %v2269 = vand.u32 %v2044, 4294901760
    %2270 = vmatpush.msra.mxu0 %v2269
    %v2271 = vand.u32 %v2043, 4294901760
    %2272 = vmatpush.msra.mxu0 %v2271
    %v2273 = vand.u32 %v2042, 4294901760
    %2274 = vmatpush.msra.mxu0 %v2273
    %v2275 = vand.u32 %v2041, 4294901760
    %2276 = vmatpush.msra.mxu0 %v2275
    %v2277 = vand.u32 %v2040, 4294901760
    %2278 = vmatpush.msra.mxu0 %v2277
    %v2279 = vand.u32 %v2039, 4294901760
    %2280 = vmatpush.msra.mxu0 %v2279
    %v2281 = vand.u32 %v2038, 4294901760
    %2282 = vmatpush.msra.mxu0 %v2281
    %v2283 = vand.u32 %v2037, 4294901760
    %2284 = vmatpush.msra.mxu0 %v2283
    %v2285 = vand.u32 %v2036, 4294901760
    %v2286 = vsub.f32 %v2036, %v2285
    %v2287 = vand.u32 %v2286, 4294901760
    %2288 = vmatmul.f32.gmra.mxu0 %v2287
    %v2289 = vpop.f32.mrf.mxu0
    %v2290 = vadd.f32 %v2251, %v2289
    %2291 = vdwg.mxu0
    %v2292 = vand.u32 %v2052, 4294901760
    %v2293 = vsub.f32 %v2052, %v2292
    %v2294 = vand.u32 %v2293, 4294901760
    %2295 = vmatpush.msra.mxu0 %v2294
    %v2296 = vand.u32 %v2051, 4294901760
    %v2297 = vsub.f32 %v2051, %v2296
    %v2298 = vand.u32 %v2297, 4294901760
    %2299 = vmatpush.msra.mxu0 %v2298
    %v2300 = vand.u32 %v2050, 4294901760
    %v2301 = vsub.f32 %v2050, %v2300
    %v2302 = vand.u32 %v2301, 4294901760
    %2303 = vmatpush.msra.mxu0 %v2302
    %v2304 = vand.u32 %v2049, 4294901760
    %v2305 = vsub.f32 %v2049, %v2304
    %v2306 = vand.u32 %v2305, 4294901760
    %2307 = vmatpush.msra.mxu0 %v2306
    %v2308 = vand.u32 %v2048, 4294901760
    %v2309 = vsub.f32 %v2048, %v2308
    %v2310 = vand.u32 %v2309, 4294901760
    %2311 = vmatpush.msra.mxu0 %v2310
    %v2312 = vand.u32 %v2047, 4294901760
    %v2313 = vsub.f32 %v2047, %v2312
    %v2314 = vand.u32 %v2313, 4294901760
    %2315 = vmatpush.msra.mxu0 %v2314
    %v2316 = vand.u32 %v2046, 4294901760
    %v2317 = vsub.f32 %v2046, %v2316
    %v2318 = vand.u32 %v2317, 4294901760
    %2319 = vmatpush.msra.mxu0 %v2318
    %v2320 = vand.u32 %v2045, 4294901760
    %v2321 = vsub.f32 %v2045, %v2320
    %v2322 = vand.u32 %v2321, 4294901760
    %2323 = vmatpush.msra.mxu0 %v2322
    %v2324 = vand.u32 %v2044, 4294901760
    %v2325 = vsub.f32 %v2044, %v2324
    %v2326 = vand.u32 %v2325, 4294901760
    %2327 = vmatpush.msra.mxu0 %v2326
    %v2328 = vand.u32 %v2043, 4294901760
    %v2329 = vsub.f32 %v2043, %v2328
    %v2330 = vand.u32 %v2329, 4294901760
    %2331 = vmatpush.msra.mxu0 %v2330
    %v2332 = vand.u32 %v2042, 4294901760
    %v2333 = vsub.f32 %v2042, %v2332
    %v2334 = vand.u32 %v2333, 4294901760
    %2335 = vmatpush.msra.mxu0 %v2334
    %v2336 = vand.u32 %v2041, 4294901760
    %v2337 = vsub.f32 %v2041, %v2336
    %v2338 = vand.u32 %v2337, 4294901760
    %2339 = vmatpush.msra.mxu0 %v2338
    %v2340 = vand.u32 %v2040, 4294901760
    %v2341 = vsub.f32 %v2040, %v2340
    %v2342 = vand.u32 %v2341, 4294901760
    %2343 = vmatpush.msra.mxu0 %v2342
    %v2344 = vand.u32 %v2039, 4294901760
    %v2345 = vsub.f32 %v2039, %v2344
    %v2346 = vand.u32 %v2345, 4294901760
    %2347 = vmatpush.msra.mxu0 %v2346
    %v2348 = vand.u32 %v2038, 4294901760
    %v2349 = vsub.f32 %v2038, %v2348
    %v2350 = vand.u32 %v2349, 4294901760
    %2351 = vmatpush.msra.mxu0 %v2350
    %v2352 = vand.u32 %v2037, 4294901760
    %v2353 = vsub.f32 %v2037, %v2352
    %v2354 = vand.u32 %v2353, 4294901760
    %2355 = vmatpush.msra.mxu0 %v2354
    %v2356 = vand.u32 %v2036, 4294901760
    %2357 = vmatmul.f32.gmra.mxu0 %v2356
    %v2358 = vpop.f32.mrf.mxu0
    %v2359 = vadd.f32 %v2290, %v2358
    %2360 = vdwg.mxu0
    %v2361 = vand.u32 %v2052, 4294901760
    %2362 = vmatpush.msra.mxu0 %v2361
    %v2363 = vand.u32 %v2051, 4294901760
    %2364 = vmatpush.msra.mxu0 %v2363
    %v2365 = vand.u32 %v2050, 4294901760
    %2366 = vmatpush.msra.mxu0 %v2365
    %v2367 = vand.u32 %v2049, 4294901760
    %2368 = vmatpush.msra.mxu0 %v2367
    %v2369 = vand.u32 %v2048, 4294901760
    %2370 = vmatpush.msra.mxu0 %v2369
    %v2371 = vand.u32 %v2047, 4294901760
    %2372 = vmatpush.msra.mxu0 %v2371
    %v2373 = vand.u32 %v2046, 4294901760
    %2374 = vmatpush.msra.mxu0 %v2373
    %v2375 = vand.u32 %v2045, 4294901760
    %2376 = vmatpush.msra.mxu0 %v2375
    %v2377 = vand.u32 %v2044, 4294901760
    %2378 = vmatpush.msra.mxu0 %v2377
    %v2379 = vand.u32 %v2043, 4294901760
    %2380 = vmatpush.msra.mxu0 %v2379
    %v2381 = vand.u32 %v2042, 4294901760
    %2382 = vmatpush.msra.mxu0 %v2381
    %v2383 = vand.u32 %v2041, 4294901760
    %2384 = vmatpush.msra.mxu0 %v2383
    %v2385 = vand.u32 %v2040, 4294901760
    %2386 = vmatpush.msra.mxu0 %v2385
    %v2387 = vand.u32 %v2039, 4294901760
    %2388 = vmatpush.msra.mxu0 %v2387
    %v2389 = vand.u32 %v2038, 4294901760
    %2390 = vmatpush.msra.mxu0 %v2389
    %v2391 = vand.u32 %v2037, 4294901760
    %2392 = vmatpush.msra.mxu0 %v2391
    %v2393 = vand.u32 %v2036, 4294901760
    %2394 = vmatmul.f32.gmra.mxu0 %v2393
    %v2395 = vpop.f32.mrf.mxu0
    %v2396 = vadd.f32 %v2359, %v2395
    %2397 = vdwg.mxu0
    %v2398 = vadd.f32 %v2396, 1.0
    %v2399 = vmax.f32 %v2398, 0.05
    %v2400 = vmin.f32 %v2399, 1e+09
    %2401 = vst.msk [vmem:[#allocation14] sm:$0xff] %vm174, %v1282
    %2402 = vst.msk [vmem:[#allocation15] sm:$0xff] %vm174, %v2400
    // Predicated region
    $region102: #{tpu_custom_call.1} parent=1 // pred_check
      _
    $region103: #{tpu_custom_call.1} parent=1 // pred_check_branch
      %2404 = sbr.rel (0) target = $region105
    $region104: #{tpu_custom_call.1} parent=1 // pred_region
      %2406 = vsyncadd [#allocation4], 0
      %s2408 = sshll.u32 [#allocation14], 4
      %s2409 = int_to_ptr.vmem [resolvable:$true] %s2408
      %s2410 = sshll.u32 %s18, 4
      %s2411 = int_to_ptr.hbm [resolvable:$true] %s2410
      %2413 = dma.vmem_to_hbm [thread:$0]  %s2409, 128, %s2411, [#allocation4]
    $region105: #{tpu_custom_call.1} parent=1 // pred_fallthru
      _
    // Predicated region
    $region106: #{tpu_custom_call.1} parent=1 // pred_check
      _
    $region107: #{tpu_custom_call.1} parent=1 // pred_check_branch
      %2415 = sbr.rel (0) target = $region109
    $region108: #{tpu_custom_call.1} parent=1 // pred_region
      %2417 = vsyncadd [#allocation16], 0
      %s2419 = sshll.u32 [#allocation15], 4
      %s2420 = int_to_ptr.vmem [resolvable:$true] %s2419
      %s2421 = sshll.u32 %s19, 4
      %s2422 = int_to_ptr.hbm [resolvable:$true] %s2421
      %2424 = dma.vmem_to_hbm [thread:$0]  %s2420, 128, %s2422, [#allocation16]
    $region109: #{tpu_custom_call.1} parent=1 // pred_fallthru
      _
    // Predicated region
    $region110: #{tpu_custom_call.1} parent=1 // pred_check
      _
    $region111: #{tpu_custom_call.1} parent=1 // pred_check_branch
      %2426 = sbr.rel (0) target = $region113
    $region112: #{tpu_custom_call.1} parent=1 // pred_region
      %2428 = dma.done [#allocation4], 128
    $region113: #{tpu_custom_call.1} parent=1 // pred_fallthru
      _
    // Predicated region
    $region114: #{tpu_custom_call.1} parent=1 // pred_check
      _
    $region115: #{tpu_custom_call.1} parent=1 // pred_check_branch
      %2430 = sbr.rel (0) target = $region117
    $region116: #{tpu_custom_call.1} parent=1 // pred_region
      %2432 = dma.done [#allocation16], 128
    $region117: #{tpu_custom_call.1} parent=1 // pred_fallthru
      _
    %2433 = vsyncpa [#allocation3], 1
    %2434 = vsyncpa [#allocation6], 1
    %2435 = vsyncpa [#allocation9], 1
    %2436 = vsyncpa [#allocation12], 1
    %2437 = vsyncpa [#allocation4], 1
    %2438 = vsyncpa [#allocation16], 1

</llo_original>
